<compile_context>
chip_gen: v5e
topology: v5e:2x2
jax: 0.10.0
libtpu: 0.0.40
codegen_flags: <defaults>
</compile_context>

<pallas_src>
import numpy as np

import jax
import jax.numpy as jnp
from jax.experimental import pallas as pl
from jax.experimental.pallas import tpu as pltpu

NUM_CLASSES = 10
BN_EPS = 1e-5

_VSPEC = pl.BlockSpec(memory_space=pltpu.MemorySpace.VMEM)


def _shift_up(a, k):
    """out[r] = a[(r + k) % R] — circular sublane rotate (XLU).

    NOTE: wraps rows of the last image onto the first image; this is safe only
    because wrapped rows land exclusively in masked/invalid output rows.
    """
    if k == 0:
        return a
    return pltpu.roll(a, (-k) % a.shape[0], 0)


# ---------------------------------------------------------------------------
# The fused kernel.
#
# Activations live in a "full-resolution row space": every image owns 28
# sublane rows; valid outputs sit at known row offsets (stride 1 / 2 / 4) and
# garbage rows are masked out of the BN statistics and never read back.
# ---------------------------------------------------------------------------
def _lenet5_kernel(x_ref, t1_ref, gb1_ref, g1_ref, be1_ref, s1_ref,
                   t2_ref, gb2_ref, g2_ref, be2_ref, s2_ref,
                   t3_ref, fb1_ref, fw2_ref, fb2_ref, fw3_ref, fb3_ref,
                   out_ref, p2_scr):
    f32 = jnp.float32
    bf16 = jnp.bfloat16

    x = x_ref[...]                                   # (rows, 28) f32
    rows = x.shape[0]
    n_img = rows // 28
    row_id = jax.lax.broadcasted_iota(jnp.int32, (rows, 1), 0) % 28

    # ---- conv1 (5x5, 1->6): ONE wide-K Toeplitz matmul, K = 5*28 = 140.
    #      columns = co*24 + ow ; valid rows: row_id < 24
    x_wide = jnp.concatenate([_shift_up(x, i) for i in range(5)], axis=1)
    y1 = jnp.dot(x_wide.astype(bf16), t1_ref[...],
                 preferred_element_type=f32)                        # (rows, 144)

    # ---- BN1 (training-mode batch stats, masked single pass in f32) + ReLU
    m1 = (row_id < 24).astype(f32)
    inv_cnt1 = 1.0 / float(n_img * 24 * 24)
    ym = y1 * m1                                                    # one masked temp
    mean1 = jnp.dot(jnp.sum(ym, axis=0, keepdims=True), gb1_ref[...],
                    preferred_element_type=f32) * inv_cnt1
    ex2_1 = jnp.dot(jnp.sum(ym * y1, axis=0, keepdims=True), gb1_ref[...],
                    preferred_element_type=f32) * inv_cnt1
    var1 = jnp.maximum(ex2_1 - mean1 * mean1, 0.0) + BN_EPS         # clamp: no NaN
    scale1 = g1_ref[...] * jax.lax.rsqrt(var1)
    shift1 = be1_ref[...] - mean1 * scale1
    a1 = jnp.maximum(y1 * scale1 + shift1, 0.0).astype(bf16)        # (rows, 144)

    # ---- maxpool1 2x2/s2: ONE fused selector matmul (both window columns),
    #      max between lane halves, then row max via sublane roll.
    cpw = jnp.dot(a1, s1_ref[...], preferred_element_type=f32)      # (rows, 144)
    cp = jnp.maximum(cpw[:, :72], cpw[:, 72:])                      # (rows, 72)
    p1 = jnp.maximum(cp, _shift_up(cp, 1))                          # valid: even rows

    # ---- conv2 (5x5, 6->16): ONE wide-K matmul, K = 5*72 = 360.
    #      columns = co*8 + q ; valid rows: row_id even and < 16
    p1_wide = jnp.concatenate([_shift_up(p1, 2 * i) for i in range(5)], axis=1)
    y2 = jnp.dot(p1_wide.astype(bf16), t2_ref[...],
                 preferred_element_type=f32)                        # (rows, 128)

    # ---- BN2 + ReLU
    m2 = ((row_id < 16) & (row_id % 2 == 0)).astype(f32)
    inv_cnt2 = 1.0 / float(n_img * 8 * 8)
    ym2 = y2 * m2
    mean2 = jnp.dot(jnp.sum(ym2, axis=0, keepdims=True), gb2_ref[...],
                    preferred_element_type=f32) * inv_cnt2
    ex2_2 = jnp.dot(jnp.sum(ym2 * y2, axis=0, keepdims=True), gb2_ref[...],
                    preferred_element_type=f32) * inv_cnt2
    var2 = jnp.maximum(ex2_2 - mean2 * mean2, 0.0) + BN_EPS
    scale2 = g2_ref[...] * jax.lax.rsqrt(var2)
    shift2 = be2_ref[...] - mean2 * scale2
    a2 = jnp.maximum(y2 * scale2 + shift2, 0.0).astype(bf16)        # (rows, 128)

    # ---- maxpool2 4x4/s2 (8x8 -> 3x3): ONE fused selector matmul (4 window
    #      columns), max of the four 48-lane chunks, then row max via rolls.
    cpw2 = jnp.dot(a2, s2_ref[...], preferred_element_type=f32)     # (rows, 192)
    cp2 = jnp.maximum(jnp.maximum(cpw2[:, :48], cpw2[:, 48:96]),
                      jnp.maximum(cpw2[:, 96:144], cpw2[:, 144:]))  # (rows, 48)
    p2 = cp2
    for a in range(1, 4):
        p2 = jnp.maximum(p2, _shift_up(cp2, 2 * a))                 # valid rows 0,4,8

    # ---- row compaction: keep only each image's 3 valid pooled rows (image
    #      rows 0/4/8), so the whole MLP + output are (n_img, 128) lane-dense.
    p2_scr[...] = p2
    hw = jnp.concatenate(
        [p2_scr[pl.ds(4 * pp, n_img, stride=28), :] for pp in range(3)],
        axis=1)                                                     # (n_img, 144)

    # ---- fc (NCHW flatten folded into t3) -> ReLU -> fc1 -> ReLU -> fc2
    h = jnp.dot(hw.astype(bf16), t3_ref[...], preferred_element_type=f32)
    h = jnp.maximum(h + fb1_ref[...], 0.0).astype(bf16)             # (n_img, 128)
    h = jnp.maximum(jnp.dot(h, fw2_ref[...], preferred_element_type=f32)
                    + fb2_ref[...], 0.0).astype(bf16)               # (n_img, 128)
    out_ref[...] = (jnp.dot(h, fw3_ref[...], preferred_element_type=f32)
                    + fb3_ref[...])                                 # padded logits


# ---------------------------------------------------------------------------
# Host-side (numpy) weight re-layout.  Called ONCE per parameter set, outside
# the jitted per-call path.
# ---------------------------------------------------------------------------
def prepare_params(p):
    f32 = np.float32
    bf16 = jnp.bfloat16
    nc = int(np.asarray(p["fc2_w"]).shape[1])

    # conv1 -> wide Toeplitz (140, 144): row i*28 + (ow+j), col co*24+ow = w1[co,i,j]
    w1 = np.asarray(p["conv1_w"], f32)[:, 0]                        # (6, 5, 5)
    co, ow, j = np.meshgrid(np.arange(6), np.arange(24), np.arange(5),
                            indexing="ij")
    co, ow, j = co.ravel(), ow.ravel(), j.ravel()
    t1 = np.zeros((5, 28, 144), f32)
    t1[:, ow + j, co * 24 + ow] = w1[co, :, j].T
    t1w = t1.reshape(140, 144)

    # conv2 -> wide Toeplitz (360, 128): row i*72 + ci*12+q+j, col co*8+q = w2[co,ci,i,j]
    w2 = np.asarray(p["conv2_w"], f32)                              # (16, 6, 5, 5)
    co, ci, q, j = np.meshgrid(np.arange(16), np.arange(6), np.arange(8),
                               np.arange(5), indexing="ij")
    co, ci, q, j = co.ravel(), ci.ravel(), q.ravel(), j.ravel()
    t2 = np.zeros((5, 72, 128), f32)
    t2[:, ci * 12 + q + j, co * 8 + q] = w2[co, ci, :, j].T
    t2w = t2.reshape(360, 128)

    # fc weight regrouped by pooled-row index (NCHW flatten folded in), wide-K
    # over the 3 pooled rows, hidden 120 -> 128 lanes.
    fc_w = np.asarray(p["fc_w"], f32)                               # (144, 120)
    idx = np.array([[cc * 9 + pp * 3 + qq for cc in range(16) for qq in range(3)]
                    for pp in range(3)], dtype=np.int64)            # (3, 48)
    t3 = np.zeros((3, 48, 128), f32)
    t3[:, :, :120] = fc_w[idx]
    t3w = t3.reshape(144, 128)

    # Fused max-pool column selectors (0/1 matrices, exact in bf16).
    def pool_sel(n_in, g_in, n_out, g_out, off):
        r = np.arange(n_in)[:, None]
        c = np.arange(n_out)[None, :]
        return (((r // g_in) == (c // g_out)) &
                ((r % g_in) == 2 * (c % g_out) + off)).astype(f32)

    s1 = np.concatenate([pool_sel(144, 24, 72, 12, o) for o in (0, 1)], axis=1)
    s2 = np.concatenate([pool_sel(128, 8, 48, 3, o) for o in range(4)], axis=1)

    # Group-broadcast matrices for per-channel BN statistics (kept f32).
    def group_bcast(n, g):
        r = np.arange(n)[:, None] // g
        c = np.arange(n)[None, :] // g
        return (r == c).astype(f32)

    gb1 = group_bcast(144, 24)
    gb2 = group_bcast(128, 8)

    # BN affine params pre-expanded to the kernel's column layout.
    g1c = np.repeat(np.asarray(p["bn1_g"], f32), 24).reshape(1, 144)
    be1c = np.repeat(np.asarray(p["bn1_b"], f32), 24).reshape(1, 144)
    g2c = np.repeat(np.asarray(p["bn2_g"], f32), 8).reshape(1, 128)
    be2c = np.repeat(np.asarray(p["bn2_b"], f32), 8).reshape(1, 128)

    # MLP weights zero-padded to 128-lane widths (output padded nc -> 128 too).
    fb1 = np.zeros((1, 128), f32); fb1[0, :120] = np.asarray(p["fc_b"], f32)
    fw2 = np.zeros((128, 128), f32); fw2[:120, :84] = np.asarray(p["fc1_w"], f32)
    fb2 = np.zeros((1, 128), f32); fb2[0, :84] = np.asarray(p["fc1_b"], f32)
    fw3 = np.zeros((128, 128), f32); fw3[:84, :nc] = np.asarray(p["fc2_w"], f32)
    fb3 = np.zeros((1, 128), f32); fb3[0, :nc] = np.asarray(p["fc2_b"], f32)

    # NOTE: conv1_b / conv2_b are intentionally unused — a per-channel bias
    # before training-mode BatchNorm is exactly cancelled by the batch mean.
    return (jnp.asarray(t1w, bf16), jnp.asarray(gb1), jnp.asarray(g1c),
            jnp.asarray(be1c), jnp.asarray(s1, bf16),
            jnp.asarray(t2w, bf16), jnp.asarray(gb2), jnp.asarray(g2c),
            jnp.asarray(be2c), jnp.asarray(s2, bf16),
            jnp.asarray(t3w, bf16), jnp.asarray(fb1), jnp.asarray(fw2, bf16),
            jnp.asarray(fb2), jnp.asarray(fw3, bf16), jnp.asarray(fb3))


@jax.jit
def _lenet5_padded(x_nchw, ops):
    """(N, 1, 28, 28) f32 -> (N, 128) padded logits (one fused pallas_call)."""
    n = x_nchw.shape[0]
    rows = n * 28
    x2d = x_nchw.astype(jnp.float32).reshape(rows, 28)
    return pl.pallas_call(
        _lenet5_kernel,
        out_shape=jax.ShapeDtypeStruct((n, 128), jnp.float32),
        in_specs=[_VSPEC] * 17,
        out_specs=_VSPEC,
        scratch_shapes=[pltpu.VMEM((rows, 48), jnp.float32)],
        compiler_params=pltpu.CompilerParams(
            # 48 MiB is v7x-safe (64 MiB physical); on v5e/v6e (128 MiB) this
            # could be raised to ~100 MiB for larger gridless batches.
            vmem_limit_bytes=48 * 1024 * 1024),
    )(x2d, *ops)


def lenet5_forward(x_nchw, prepped_ops, num_classes=NUM_CLASSES):
    assert x_nchw.ndim == 4 and x_nchw.shape[1:] == (1, 28, 28), x_nchw.shape
    return _lenet5_padded(x_nchw, prepped_ops)[:, :num_classes]


# ---------------------------------------------------------------------------
# Parameters (PyTorch-equivalent shapes; Linear weights stored as (in, out)).
# ---------------------------------------------------------------------------
def init_params(key, num_classes=NUM_CLASSES):
    ks = jax.random.split(key, 8)
    s = 0.05
    return {
        "conv1_w": jax.random.normal(ks[0], (6, 1, 5, 5), jnp.float32) * s,
        "conv1_b": jax.random.normal(ks[1], (6,), jnp.float32) * s,   # cancelled by BN
        "bn1_g": jnp.ones((6,), jnp.float32),
        "bn1_b": jnp.zeros((6,), jnp.float32),
        "conv2_w": jax.random.normal(ks[2], (16, 6, 5, 5), jnp.float32) * s,
        "conv2_b": jax.random.normal(ks[3], (16,), jnp.float32) * s,  # cancelled by BN
        "bn2_g": jnp.ones((16,), jnp.float32),
        "bn2_b": jnp.zeros((16,), jnp.float32),
        "fc_w": jax.random.normal(ks[4], (144, 120), jnp.float32) * s,
        "fc_b": jnp.zeros((120,), jnp.float32),
        "fc1_w": jax.random.normal(ks[5], (120, 84), jnp.float32) * s,
        "fc1_b": jnp.zeros((84,), jnp.float32),
        "fc2_w": jax.random.normal(ks[6], (84, num_classes), jnp.float32) * s,
        "fc2_b": jnp.zeros((num_classes,), jnp.float32),
    }


if __name__ == "__main__":
    key = jax.random.PRNGKey(0)
    kx, kp = jax.random.split(key)
    # MNIST-sized input is implied by fc in_features == 144: (N, 1, 28, 28)
    x = jax.random.normal(kx, (2, 1, 28, 28), jnp.float32)
    params = init_params(kp, NUM_CLASSES)

    ops = prepare_params(params)          # host-side re-layout, once per param set
    out = lenet5_forward(x, ops)          # jitted single fused pallas_call
    out = jax.block_until_ready(out)

    assert out.shape == (2, NUM_CLASSES), out.shape
    assert bool(jnp.all(jnp.isfinite(out)))
    print("KERNEL_OK")
</pallas_src>

<mosaic_0001>
module attributes {stable_mosaic.version = 11 : i64} {
  func.func @_lenet5_kernel(%arg0: memref<56x28xf32, #tpu.memory_space<vmem>>, %arg1: memref<140x144xbf16, #tpu.memory_space<vmem>>, %arg2: memref<144x144xf32, #tpu.memory_space<vmem>>, %arg3: memref<1x144xf32, #tpu.memory_space<vmem>>, %arg4: memref<1x144xf32, #tpu.memory_space<vmem>>, %arg5: memref<144x144xbf16, #tpu.memory_space<vmem>>, %arg6: memref<360x128xbf16, #tpu.memory_space<vmem>>, %arg7: memref<128x128xf32, #tpu.memory_space<vmem>>, %arg8: memref<1x128xf32, #tpu.memory_space<vmem>>, %arg9: memref<1x128xf32, #tpu.memory_space<vmem>>, %arg10: memref<128x192xbf16, #tpu.memory_space<vmem>>, %arg11: memref<144x128xbf16, #tpu.memory_space<vmem>>, %arg12: memref<1x128xf32, #tpu.memory_space<vmem>>, %arg13: memref<128x128xbf16, #tpu.memory_space<vmem>>, %arg14: memref<1x128xf32, #tpu.memory_space<vmem>>, %arg15: memref<128x128xbf16, #tpu.memory_space<vmem>>, %arg16: memref<1x128xf32, #tpu.memory_space<vmem>>, %arg17: memref<2x128xf32, #tpu.memory_space<vmem>>, %arg18: memref<56x48xf32, #tpu.memory_space<vmem>>) attributes {dimension_semantics = [], scalar_prefetch = 0 : i64, scratch_operands = 1 : i64, tpu.core_type = #tpu.core_type<tc>} {
    %c0 = arith.constant 0 : index
    %c0_0 = arith.constant 0 : index
    %0 = vector.load %arg0[%c0, %c0_0] : memref<56x28xf32, #tpu.memory_space<vmem>>, vector<56x28xf32>
    %1 = tpu.iota {dimensions = array<i32: 0>} : vector<56x1xi32>
    %c28_i32 = arith.constant 28 : i32
    %c0_i32 = arith.constant 0 : i32
    %2 = arith.cmpi eq, %c28_i32, %c0_i32 : i32
    %c1_i32 = arith.constant 1 : i32
    %3 = arith.select %2, %c1_i32, %c28_i32 : i32
    %4 = vector.broadcast %3 : i32 to vector<56x1xi32>
    %5 = arith.remsi %1, %4 : vector<56x1xi32>
    %c0_i32_1 = arith.constant 0 : i32
    %6 = vector.broadcast %c0_i32_1 : i32 to vector<56x1xi32>
    %7 = arith.cmpi ne, %5, %6 : vector<56x1xi32>
    %c0_i32_2 = arith.constant 0 : i32
    %8 = vector.broadcast %c0_i32_2 : i32 to vector<56x1xi32>
    %9 = arith.cmpi slt, %5, %8 : vector<56x1xi32>
    %c0_i32_3 = arith.constant 0 : i32
    %10 = arith.cmpi slt, %3, %c0_i32_3 : i32
    %11 = vector.broadcast %10 : i1 to vector<56x1xi1>
    %12 = vector.broadcast %11 : vector<56x1xi1> to vector<56x1xi1>
    %13 = arith.xori %9, %12 : vector<56x1xi1>
    %14 = arith.andi %13, %7 : vector<56x1xi1>
    %15 = vector.broadcast %3 : i32 to vector<56x1xi32>
    %16 = arith.addi %5, %15 : vector<56x1xi32>
    %17 = arith.select %14, %16, %5 : vector<56x1xi1>, vector<56x1xi32>
    %c55_i32 = arith.constant 55 : i32
    %18 = tpu.dynamic_rotate %0 by %c55_i32 dim 0 : vector<56x28xf32>, i32 -> vector<56x28xf32>
    %c54_i32 = arith.constant 54 : i32
    %19 = tpu.dynamic_rotate %0 by %c54_i32 dim 0 : vector<56x28xf32>, i32 -> vector<56x28xf32>
    %c53_i32 = arith.constant 53 : i32
    %20 = tpu.dynamic_rotate %0 by %c53_i32 dim 0 : vector<56x28xf32>, i32 -> vector<56x28xf32>
    %c52_i32 = arith.constant 52 : i32
    %21 = tpu.dynamic_rotate %0 by %c52_i32 dim 0 : vector<56x28xf32>, i32 -> vector<56x28xf32>
    %22 = tpu.concatenate %0, %18, %19, %20, %21 in 1 : vector<56x28xf32>, vector<56x28xf32>, vector<56x28xf32>, vector<56x28xf32>, vector<56x28xf32> -> vector<56x140xf32>
    %23 = arith.truncf %22 : vector<56x140xf32> to vector<56x140xbf16>
    %c0_4 = arith.constant 0 : index
    %c0_5 = arith.constant 0 : index
    %24 = vector.load %arg1[%c0_4, %c0_5] : memref<140x144xbf16, #tpu.memory_space<vmem>>, vector<140x144xbf16>
    %cst = arith.constant dense<0.000000e+00> : vector<56x144xf32>
    %25 = tpu.matmul %23, %24, %cst {dimension_numbers = #tpu.dot_dimension_numbers<[1], [0], [0], [1], [0, 0, 1, 1], [], []>} : vector<56x140xbf16>, vector<140x144xbf16>, vector<56x144xf32> -> vector<56x144xf32>
    %c24_i32 = arith.constant 24 : i32
    %26 = vector.broadcast %c24_i32 : i32 to vector<56x1xi32>
    %27 = arith.cmpi slt, %17, %26 : vector<56x1xi32>
    %28 = arith.extui %27 : vector<56x1xi1> to vector<56x1xi32>
    %29 = arith.sitofp %28 : vector<56x1xi32> to vector<56x1xf32>
    %30 = vector.broadcast %29 : vector<56x1xf32> to vector<56x144xf32>
    %31 = arith.mulf %25, %30 : vector<56x144xf32>
    %cst_6 = arith.constant dense<0.000000e+00> : vector<144xf32>
    %32 = vector.multi_reduction <add>, %31, %cst_6 [0] : vector<56x144xf32> to vector<144xf32>
    %33 = vector.shape_cast %32 : vector<144xf32> to vector<1x144xf32>
    %c0_7 = arith.constant 0 : index
    %c0_8 = arith.constant 0 : index
    %34 = vector.load %arg2[%c0_7, %c0_8] : memref<144x144xf32, #tpu.memory_space<vmem>>, vector<144x144xf32>
    %cst_9 = arith.constant dense<0.000000e+00> : vector<1x144xf32>
    %35 = tpu.matmul %33, %34, %cst_9 {dimension_numbers = #tpu.dot_dimension_numbers<[1], [0], [0], [1], [0, 0, 1, 1], [], []>} : vector<1x144xf32>, vector<144x144xf32>, vector<1x144xf32> -> vector<1x144xf32>
    %cst_10 = arith.constant 8.68055562E-4 : f32
    %36 = vector.broadcast %cst_10 : f32 to vector<1x144xf32>
    %37 = arith.mulf %35, %36 : vector<1x144xf32>
    %38 = arith.mulf %31, %25 : vector<56x144xf32>
    %cst_11 = arith.constant dense<0.000000e+00> : vector<144xf32>
    %39 = vector.multi_reduction <add>, %38, %cst_11 [0] : vector<56x144xf32> to vector<144xf32>
    %40 = vector.shape_cast %39 : vector<144xf32> to vector<1x144xf32>
    %c0_12 = arith.constant 0 : index
    %c0_13 = arith.constant 0 : index
    %41 = vector.load %arg2[%c0_12, %c0_13] : memref<144x144xf32, #tpu.memory_space<vmem>>, vector<144x144xf32>
    %cst_14 = arith.constant dense<0.000000e+00> : vector<1x144xf32>
    %42 = tpu.matmul %40, %41, %cst_14 {dimension_numbers = #tpu.dot_dimension_numbers<[1], [0], [0], [1], [0, 0, 1, 1], [], []>} : vector<1x144xf32>, vector<144x144xf32>, vector<1x144xf32> -> vector<1x144xf32>
    %cst_15 = arith.constant 8.68055562E-4 : f32
    %43 = vector.broadcast %cst_15 : f32 to vector<1x144xf32>
    %44 = arith.mulf %42, %43 : vector<1x144xf32>
    %45 = arith.mulf %37, %37 : vector<1x144xf32>
    %46 = arith.subf %44, %45 : vector<1x144xf32>
    %cst_16 = arith.constant 0.000000e+00 : f32
    %47 = vector.broadcast %cst_16 : f32 to vector<1x144xf32>
    %48 = arith.maximumf %46, %47 : vector<1x144xf32>
    %cst_17 = arith.constant 9.99999974E-6 : f32
    %49 = vector.broadcast %cst_17 : f32 to vector<1x144xf32>
    %50 = arith.addf %48, %49 : vector<1x144xf32>
    %c0_18 = arith.constant 0 : index
    %c0_19 = arith.constant 0 : index
    %51 = vector.load %arg3[%c0_18, %c0_19] : memref<1x144xf32, #tpu.memory_space<vmem>>, vector<1x144xf32>
    %52 = math.rsqrt %50 : vector<1x144xf32>
    %53 = arith.mulf %51, %52 : vector<1x144xf32>
    %c0_20 = arith.constant 0 : index
    %c0_21 = arith.constant 0 : index
    %54 = vector.load %arg4[%c0_20, %c0_21] : memref<1x144xf32, #tpu.memory_space<vmem>>, vector<1x144xf32>
    %55 = arith.mulf %37, %53 : vector<1x144xf32>
    %56 = arith.subf %54, %55 : vector<1x144xf32>
    %57 = vector.broadcast %53 : vector<1x144xf32> to vector<56x144xf32>
    %58 = arith.mulf %25, %57 : vector<56x144xf32>
    %59 = vector.broadcast %56 : vector<1x144xf32> to vector<56x144xf32>
    %60 = arith.addf %58, %59 : vector<56x144xf32>
    %cst_22 = arith.constant 0.000000e+00 : f32
    %61 = vector.broadcast %cst_22 : f32 to vector<56x144xf32>
    %62 = arith.maximumf %60, %61 : vector<56x144xf32>
    %63 = arith.truncf %62 : vector<56x144xf32> to vector<56x144xbf16>
    %c0_23 = arith.constant 0 : index
    %c0_24 = arith.constant 0 : index
    %64 = vector.load %arg5[%c0_23, %c0_24] : memref<144x144xbf16, #tpu.memory_space<vmem>>, vector<144x144xbf16>
    %cst_25 = arith.constant dense<0.000000e+00> : vector<56x144xf32>
    %65 = tpu.matmul %63, %64, %cst_25 {dimension_numbers = #tpu.dot_dimension_numbers<[1], [0], [0], [1], [0, 0, 1, 1], [], []>} : vector<56x144xbf16>, vector<144x144xbf16>, vector<56x144xf32> -> vector<56x144xf32>
    %66 = vector.extract_strided_slice %65 {offsets = [0, 0], sizes = [56, 72], strides = [1, 1]} : vector<56x144xf32> to vector<56x72xf32>
    %67 = vector.extract_strided_slice %65 {offsets = [0, 72], sizes = [56, 72], strides = [1, 1]} : vector<56x144xf32> to vector<56x72xf32>
    %68 = arith.maximumf %66, %67 : vector<56x72xf32>
    %c55_i32_26 = arith.constant 55 : i32
    %69 = tpu.dynamic_rotate %68 by %c55_i32_26 dim 0 : vector<56x72xf32>, i32 -> vector<56x72xf32>
    %70 = arith.maximumf %68, %69 : vector<56x72xf32>
    %c54_i32_27 = arith.constant 54 : i32
    %71 = tpu.dynamic_rotate %70 by %c54_i32_27 dim 0 : vector<56x72xf32>, i32 -> vector<56x72xf32>
    %c52_i32_28 = arith.constant 52 : i32
    %72 = tpu.dynamic_rotate %70 by %c52_i32_28 dim 0 : vector<56x72xf32>, i32 -> vector<56x72xf32>
    %c50_i32 = arith.constant 50 : i32
    %73 = tpu.dynamic_rotate %70 by %c50_i32 dim 0 : vector<56x72xf32>, i32 -> vector<56x72xf32>
    %c48_i32 = arith.constant 48 : i32
    %74 = tpu.dynamic_rotate %70 by %c48_i32 dim 0 : vector<56x72xf32>, i32 -> vector<56x72xf32>
    %75 = tpu.concatenate %70, %71, %72, %73, %74 in 1 : vector<56x72xf32>, vector<56x72xf32>, vector<56x72xf32>, vector<56x72xf32>, vector<56x72xf32> -> vector<56x360xf32>
    %76 = arith.truncf %75 : vector<56x360xf32> to vector<56x360xbf16>
    %c0_29 = arith.constant 0 : index
    %c0_30 = arith.constant 0 : index
    %77 = vector.load %arg6[%c0_29, %c0_30] : memref<360x128xbf16, #tpu.memory_space<vmem>>, vector<360x128xbf16>
    %cst_31 = arith.constant dense<0.000000e+00> : vector<56x128xf32>
    %78 = tpu.matmul %76, %77, %cst_31 {dimension_numbers = #tpu.dot_dimension_numbers<[1], [0], [0], [1], [0, 0, 1, 1], [], []>} : vector<56x360xbf16>, vector<360x128xbf16>, vector<56x128xf32> -> vector<56x128xf32>
    %c16_i32 = arith.constant 16 : i32
    %79 = vector.broadcast %c16_i32 : i32 to vector<56x1xi32>
    %80 = arith.cmpi slt, %17, %79 : vector<56x1xi32>
    %c2_i32 = arith.constant 2 : i32
    %c0_i32_32 = arith.constant 0 : i32
    %81 = arith.cmpi eq, %c2_i32, %c0_i32_32 : i32
    %c1_i32_33 = arith.constant 1 : i32
    %82 = arith.select %81, %c1_i32_33, %c2_i32 : i32
    %83 = vector.broadcast %82 : i32 to vector<56x1xi32>
    %84 = arith.remsi %17, %83 : vector<56x1xi32>
    %c0_i32_34 = arith.constant 0 : i32
    %85 = vector.broadcast %c0_i32_34 : i32 to vector<56x1xi32>
    %86 = arith.cmpi ne, %84, %85 : vector<56x1xi32>
    %c0_i32_35 = arith.constant 0 : i32
    %87 = vector.broadcast %c0_i32_35 : i32 to vector<56x1xi32>
    %88 = arith.cmpi slt, %84, %87 : vector<56x1xi32>
    %c0_i32_36 = arith.constant 0 : i32
    %89 = arith.cmpi slt, %82, %c0_i32_36 : i32
    %90 = vector.broadcast %89 : i1 to vector<56x1xi1>
    %91 = vector.broadcast %90 : vector<56x1xi1> to vector<56x1xi1>
    %92 = arith.xori %88, %91 : vector<56x1xi1>
    %93 = arith.andi %92, %86 : vector<56x1xi1>
    %94 = vector.broadcast %82 : i32 to vector<56x1xi32>
    %95 = arith.addi %84, %94 : vector<56x1xi32>
    %96 = arith.select %93, %95, %84 : vector<56x1xi1>, vector<56x1xi32>
    %c0_i32_37 = arith.constant 0 : i32
    %97 = vector.broadcast %c0_i32_37 : i32 to vector<56x1xi32>
    %98 = arith.cmpi eq, %96, %97 : vector<56x1xi32>
    %99 = arith.andi %80, %98 : vector<56x1xi1>
    %100 = arith.extui %99 : vector<56x1xi1> to vector<56x1xi32>
    %101 = arith.sitofp %100 : vector<56x1xi32> to vector<56x1xf32>
    %102 = vector.broadcast %101 : vector<56x1xf32> to vector<56x128xf32>
    %103 = arith.mulf %78, %102 : vector<56x128xf32>
    %cst_38 = arith.constant dense<0.000000e+00> : vector<128xf32>
    %104 = vector.multi_reduction <add>, %103, %cst_38 [0] : vector<56x128xf32> to vector<128xf32>
    %105 = vector.shape_cast %104 : vector<128xf32> to vector<1x128xf32>
    %c0_39 = arith.constant 0 : index
    %c0_40 = arith.constant 0 : index
    %106 = vector.load %arg7[%c0_39, %c0_40] : memref<128x128xf32, #tpu.memory_space<vmem>>, vector<128x128xf32>
    %cst_41 = arith.constant dense<0.000000e+00> : vector<1x128xf32>
    %107 = tpu.matmul %105, %106, %cst_41 {dimension_numbers = #tpu.dot_dimension_numbers<[1], [0], [0], [1], [0, 0, 1, 1], [], []>} : vector<1x128xf32>, vector<128x128xf32>, vector<1x128xf32> -> vector<1x128xf32>
    %cst_42 = arith.constant 7.812500e-03 : f32
    %108 = vector.broadcast %cst_42 : f32 to vector<1x128xf32>
    %109 = arith.mulf %107, %108 : vector<1x128xf32>
    %110 = arith.mulf %103, %78 : vector<56x128xf32>
    %cst_43 = arith.constant dense<0.000000e+00> : vector<128xf32>
    %111 = vector.multi_reduction <add>, %110, %cst_43 [0] : vector<56x128xf32> to vector<128xf32>
    %112 = vector.shape_cast %111 : vector<128xf32> to vector<1x128xf32>
    %c0_44 = arith.constant 0 : index
    %c0_45 = arith.constant 0 : index
    %113 = vector.load %arg7[%c0_44, %c0_45] : memref<128x128xf32, #tpu.memory_space<vmem>>, vector<128x128xf32>
    %cst_46 = arith.constant dense<0.000000e+00> : vector<1x128xf32>
    %114 = tpu.matmul %112, %113, %cst_46 {dimension_numbers = #tpu.dot_dimension_numbers<[1], [0], [0], [1], [0, 0, 1, 1], [], []>} : vector<1x128xf32>, vector<128x128xf32>, vector<1x128xf32> -> vector<1x128xf32>
    %cst_47 = arith.constant 7.812500e-03 : f32
    %115 = vector.broadcast %cst_47 : f32 to vector<1x128xf32>
    %116 = arith.mulf %114, %115 : vector<1x128xf32>
    %117 = arith.mulf %109, %109 : vector<1x128xf32>
    %118 = arith.subf %116, %117 : vector<1x128xf32>
    %cst_48 = arith.constant 0.000000e+00 : f32
    %119 = vector.broadcast %cst_48 : f32 to vector<1x128xf32>
    %120 = arith.maximumf %118, %119 : vector<1x128xf32>
    %cst_49 = arith.constant 9.99999974E-6 : f32
    %121 = vector.broadcast %cst_49 : f32 to vector<1x128xf32>
    %122 = arith.addf %120, %121 : vector<1x128xf32>
    %c0_50 = arith.constant 0 : index
    %c0_51 = arith.constant 0 : index
    %123 = vector.load %arg8[%c0_50, %c0_51] : memref<1x128xf32, #tpu.memory_space<vmem>>, vector<1x128xf32>
    %124 = math.rsqrt %122 : vector<1x128xf32>
    %125 = arith.mulf %123, %124 : vector<1x128xf32>
    %c0_52 = arith.constant 0 : index
    %c0_53 = arith.constant 0 : index
    %126 = vector.load %arg9[%c0_52, %c0_53] : memref<1x128xf32, #tpu.memory_space<vmem>>, vector<1x128xf32>
    %127 = arith.mulf %109, %125 : vector<1x128xf32>
    %128 = arith.subf %126, %127 : vector<1x128xf32>
    %129 = vector.broadcast %125 : vector<1x128xf32> to vector<56x128xf32>
    %130 = arith.mulf %78, %129 : vector<56x128xf32>
    %131 = vector.broadcast %128 : vector<1x128xf32> to vector<56x128xf32>
    %132 = arith.addf %130, %131 : vector<56x128xf32>
    %cst_54 = arith.constant 0.000000e+00 : f32
    %133 = vector.broadcast %cst_54 : f32 to vector<56x128xf32>
    %134 = arith.maximumf %132, %133 : vector<56x128xf32>
    %135 = arith.truncf %134 : vector<56x128xf32> to vector<56x128xbf16>
    %c0_55 = arith.constant 0 : index
    %c0_56 = arith.constant 0 : index
    %136 = vector.load %arg10[%c0_55, %c0_56] : memref<128x192xbf16, #tpu.memory_space<vmem>>, vector<128x192xbf16>
    %cst_57 = arith.constant dense<0.000000e+00> : vector<56x192xf32>
    %137 = tpu.matmul %135, %136, %cst_57 {dimension_numbers = #tpu.dot_dimension_numbers<[1], [0], [0], [1], [0, 0, 1, 1], [], []>} : vector<56x128xbf16>, vector<128x192xbf16>, vector<56x192xf32> -> vector<56x192xf32>
    %138 = vector.extract_strided_slice %137 {offsets = [0, 0], sizes = [56, 48], strides = [1, 1]} : vector<56x192xf32> to vector<56x48xf32>
    %139 = vector.extract_strided_slice %137 {offsets = [0, 48], sizes = [56, 48], strides = [1, 1]} : vector<56x192xf32> to vector<56x48xf32>
    %140 = arith.maximumf %138, %139 : vector<56x48xf32>
    %141 = vector.extract_strided_slice %137 {offsets = [0, 96], sizes = [56, 48], strides = [1, 1]} : vector<56x192xf32> to vector<56x48xf32>
    %142 = vector.extract_strided_slice %137 {offsets = [0, 144], sizes = [56, 48], strides = [1, 1]} : vector<56x192xf32> to vector<56x48xf32>
    %143 = arith.maximumf %141, %142 : vector<56x48xf32>
    %144 = arith.maximumf %140, %143 : vector<56x48xf32>
    %c54_i32_58 = arith.constant 54 : i32
    %145 = tpu.dynamic_rotate %144 by %c54_i32_58 dim 0 : vector<56x48xf32>, i32 -> vector<56x48xf32>
    %146 = arith.maximumf %144, %145 : vector<56x48xf32>
    %c52_i32_59 = arith.constant 52 : i32
    %147 = tpu.dynamic_rotate %144 by %c52_i32_59 dim 0 : vector<56x48xf32>, i32 -> vector<56x48xf32>
    %148 = arith.maximumf %146, %147 : vector<56x48xf32>
    %c50_i32_60 = arith.constant 50 : i32
    %149 = tpu.dynamic_rotate %144 by %c50_i32_60 dim 0 : vector<56x48xf32>, i32 -> vector<56x48xf32>
    %150 = arith.maximumf %148, %149 : vector<56x48xf32>
    %c0_61 = arith.constant 0 : index
    %c0_62 = arith.constant 0 : index
    %151 = vector.load %arg18[%c0_61, %c0_62] : memref<56x48xf32, #tpu.memory_space<vmem>>, vector<56x48xf32>
    tpu.vector_store %arg18[%c0_61, %c0_62], %150 {strides = array<i32>} : memref<56x48xf32, #tpu.memory_space<vmem>>, vector<56x48xf32>,
    %c0_63 = arith.constant 0 : index
    %c0_64 = arith.constant 0 : index
    %152 = tpu.strided_load %arg18[%c0_63, %c0_64] {strides = array<i32: 28, 1>} : memref<56x48xf32, #tpu.memory_space<vmem>>, vector<2x48xf32>
    %c4 = arith.constant 4 : index
    %c0_65 = arith.constant 0 : index
    %153 = tpu.strided_load %arg18[%c4, %c0_65] {strides = array<i32: 28, 1>} : memref<56x48xf32, #tpu.memory_space<vmem>>, vector<2x48xf32>
    %c8 = arith.constant 8 : index
    %c0_66 = arith.constant 0 : index
    %154 = tpu.strided_load %arg18[%c8, %c0_66] {strides = array<i32: 28, 1>} : memref<56x48xf32, #tpu.memory_space<vmem>>, vector<2x48xf32>
    %155 = tpu.concatenate %152, %153, %154 in 1 : vector<2x48xf32>, vector<2x48xf32>, vector<2x48xf32> -> vector<2x144xf32>
    %156 = arith.truncf %155 : vector<2x144xf32> to vector<2x144xbf16>
    %c0_67 = arith.constant 0 : index
    %c0_68 = arith.constant 0 : index
    %157 = vector.load %arg11[%c0_67, %c0_68] : memref<144x128xbf16, #tpu.memory_space<vmem>>, vector<144x128xbf16>
    %cst_69 = arith.constant dense<0.000000e+00> : vector<2x128xf32>
    %158 = tpu.matmul %156, %157, %cst_69 {dimension_numbers = #tpu.dot_dimension_numbers<[1], [0], [0], [1], [0, 0, 1, 1], [], []>} : vector<2x144xbf16>, vector<144x128xbf16>, vector<2x128xf32> -> vector<2x128xf32>
    %c0_70 = arith.constant 0 : index
    %c0_71 = arith.constant 0 : index
    %159 = vector.load %arg12[%c0_70, %c0_71] : memref<1x128xf32, #tpu.memory_space<vmem>>, vector<1x128xf32>
    %160 = vector.broadcast %159 : vector<1x128xf32> to vector<2x128xf32>
    %161 = arith.addf %158, %160 : vector<2x128xf32>
    %cst_72 = arith.constant 0.000000e+00 : f32
    %162 = vector.broadcast %cst_72 : f32 to vector<2x128xf32>
    %163 = arith.maximumf %161, %162 : vector<2x128xf32>
    %164 = arith.truncf %163 : vector<2x128xf32> to vector<2x128xbf16>
    %c0_73 = arith.constant 0 : index
    %c0_74 = arith.constant 0 : index
    %165 = vector.load %arg13[%c0_73, %c0_74] : memref<128x128xbf16, #tpu.memory_space<vmem>>, vector<128x128xbf16>
    %cst_75 = arith.constant dense<0.000000e+00> : vector<2x128xf32>
    %166 = tpu.matmul %164, %165, %cst_75 {dimension_numbers = #tpu.dot_dimension_numbers<[1], [0], [0], [1], [0, 0, 1, 1], [], []>} : vector<2x128xbf16>, vector<128x128xbf16>, vector<2x128xf32> -> vector<2x128xf32>
    %c0_76 = arith.constant 0 : index
    %c0_77 = arith.constant 0 : index
    %167 = vector.load %arg14[%c0_76, %c0_77] : memref<1x128xf32, #tpu.memory_space<vmem>>, vector<1x128xf32>
    %168 = vector.broadcast %167 : vector<1x128xf32> to vector<2x128xf32>
    %169 = arith.addf %166, %168 : vector<2x128xf32>
    %cst_78 = arith.constant 0.000000e+00 : f32
    %170 = vector.broadcast %cst_78 : f32 to vector<2x128xf32>
    %171 = arith.maximumf %169, %170 : vector<2x128xf32>
    %172 = arith.truncf %171 : vector<2x128xf32> to vector<2x128xbf16>
    %c0_79 = arith.constant 0 : index
    %c0_80 = arith.constant 0 : index
    %173 = vector.load %arg15[%c0_79, %c0_80] : memref<128x128xbf16, #tpu.memory_space<vmem>>, vector<128x128xbf16>
    %cst_81 = arith.constant dense<0.000000e+00> : vector<2x128xf32>
    %174 = tpu.matmul %172, %173, %cst_81 {dimension_numbers = #tpu.dot_dimension_numbers<[1], [0], [0], [1], [0, 0, 1, 1], [], []>} : vector<2x128xbf16>, vector<128x128xbf16>, vector<2x128xf32> -> vector<2x128xf32>
    %c0_82 = arith.constant 0 : index
    %c0_83 = arith.constant 0 : index
    %175 = vector.load %arg16[%c0_82, %c0_83] : memref<1x128xf32, #tpu.memory_space<vmem>>, vector<1x128xf32>
    %176 = vector.broadcast %175 : vector<1x128xf32> to vector<2x128xf32>
    %177 = arith.addf %174, %176 : vector<2x128xf32>
    %c0_84 = arith.constant 0 : index
    %c0_85 = arith.constant 0 : index
    %178 = vector.load %arg17[%c0_84, %c0_85] : memref<2x128xf32, #tpu.memory_space<vmem>>, vector<2x128xf32>
    tpu.vector_store %arg17[%c0_84, %c0_85], %177 {strides = array<i32>} : memref<2x128xf32, #tpu.memory_space<vmem>>, vector<2x128xf32>,
    return
  }
}

</mosaic_0001>

<llo_original>
// kernel: _lenet5_padded.1
$region0: #{_lenet5_padded.1}
  #allocation0 [shape = 'u32[]', space=smem, size = 0x4, offset = 0x4, fixed_abs, tag = 'smem constant byte address 0x4 - core index']
  #allocation1 [shape = 'u32[72,128]{1,0:T(1,128)}', space=vmem, size = 0x9000, scoped, tag = 'internal scratch']
  #allocation2 [shape = 'f32[56,48]{1,0:T(8,128)}', space=vmem, size = 0x7000, scoped, tag = 'scratch operand']
  %s0 = inlined_call_operand.hbm [shape: f32[56,28], index: 0, kind: input, shape index: {}]
  %s1 = inlined_call_operand.hbm [shape: bf16[140,144], index: 1, kind: input, shape index: {}]
  %s2 = inlined_call_operand.hbm [shape: f32[144,144], index: 2, kind: input, shape index: {}]
  %s3 = inlined_call_operand.vmem [shape: f32[1,144], index: 3, kind: input, shape index: {}]
  %s4 = inlined_call_operand.vmem [shape: f32[1,144], index: 4, kind: input, shape index: {}]
  %s5 = inlined_call_operand.hbm [shape: bf16[144,144], index: 5, kind: input, shape index: {}]
  %s6 = inlined_call_operand.vmem [shape: bf16[360,128], index: 6, kind: input, shape index: {}]
  %s7 = inlined_call_operand.hbm [shape: f32[128,128], index: 7, kind: input, shape index: {}]
  %s8 = inlined_call_operand.vmem [shape: f32[1,128], index: 8, kind: input, shape index: {}]
  %s9 = inlined_call_operand.vmem [shape: f32[1,128], index: 9, kind: input, shape index: {}]
  %s10 = inlined_call_operand.vmem [shape: bf16[128,192], index: 10, kind: input, shape index: {}]
  %s11 = inlined_call_operand.hbm [shape: bf16[144,128], index: 11, kind: input, shape index: {}]
  %s12 = inlined_call_operand.vmem [shape: f32[1,128], index: 12, kind: input, shape index: {}]
  %s13 = inlined_call_operand.hbm [shape: bf16[128,128], index: 13, kind: input, shape index: {}]
  %s14 = inlined_call_operand.vmem [shape: f32[1,128], index: 14, kind: input, shape index: {}]
  %s15 = inlined_call_operand.hbm [shape: bf16[128,128], index: 15, kind: input, shape index: {}]
  %s16 = inlined_call_operand.vmem [shape: f32[1,128], index: 16, kind: input, shape index: {}]
  %s17 = inlined_call_operand.hbm [shape: f32[2,128], index: 17, kind: output, shape index: {}]
  %s18 = sld [smem:[#allocation0]]
  $region110: #{_lenet5_padded.1} parent=0
    _
  %s20 = ssub.s32 1, %s18
  %s21 = scalar_select 0, %s20, %s18
  $region1: #{_lenet5_padded.1} parent=0
    #allocation3 [shape = 'u8[28672]{0}', space=vmem, size = 0x7000, scoped, tag = 'input window, operand 0, single buffered']
    #allocation4 [shape = 's32[1]{0}', space=sflag, size = 0x4, scoped, tag = 'scoped memory for _lenet5_padded.1']
    #allocation5 [shape = 's32[1]{0}', space=sflag, size = 0x4, scoped, tag = 'scoped memory for _lenet5_padded.1']
    #allocation6 [shape = 'u8[73728]{0}', space=vmem, size = 0x12000, scoped, tag = 'input window, operand 1, single buffered']
    #allocation7 [shape = 's32[1]{0}', space=sflag, size = 0x4, scoped, tag = 'scoped memory for _lenet5_padded.1']
    #allocation8 [shape = 'u8[147456]{0}', space=vmem, size = 0x24000, scoped, tag = 'input window, operand 2, single buffered']
    #allocation9 [shape = 'u8[73728]{0}', space=vmem, size = 0x12000, scoped, tag = 'input window, operand 5, single buffered']
    #allocation10 [shape = 's32[1]{0}', space=sflag, size = 0x4, scoped, tag = 'scoped memory for _lenet5_padded.1']
    #allocation11 [shape = 'u8[65536]{0}', space=vmem, size = 0x10000, scoped, tag = 'input window, operand 7, single buffered']
    #allocation12 [shape = 'u8[36864]{0}', space=vmem, size = 0x9000, scoped, tag = 'input window, operand 11, single buffered']
    #allocation13 [shape = 's32[1]{0}', space=sflag, size = 0x4, scoped, tag = 'scoped memory for _lenet5_padded.1']
    #allocation14 [shape = 'u8[32768]{0}', space=vmem, size = 0x8000, scoped, tag = 'input window, operand 13, single buffered']
    #allocation15 [shape = 'u8[32768]{0}', space=vmem, size = 0x8000, scoped, tag = 'input window, operand 15, single buffered']
    #allocation16 [shape = 's32[1]{0}', space=sflag, size = 0x4, scoped, tag = 'scoped memory for _lenet5_padded.1']
    #allocation17 [shape = 'u8[1024]{0}', space=vmem, size = 0x400, scoped, tag = 'output window, operand 0, single buffered']
    %22 = vsyncpa [#allocation4], 0
    %23 = vsyncpa [#allocation7], 0
    %24 = vsyncpa [#allocation10], 0
    %25 = vsyncpa [#allocation13], 0
    %26 = vsyncpa [#allocation16], 0
    %27 = vsyncpa [#allocation5], 0
    // Predicated region
    $region2: #{_lenet5_padded.1} parent=1 // pred_check
      _
    $region3: #{_lenet5_padded.1} parent=1 // pred_check_branch
      %29 = sbr.rel (0) target = $region5
    $region4: #{_lenet5_padded.1} parent=1 // pred_region
      %31 = vsyncadd [#allocation4], 0
      %s32 = sshll.u32 %s0, 4
      %s33 = int_to_ptr.hbm [resolvable:$true] %s32
      %s34 = sshll.u32 [#allocation3], 4
      %s35 = int_to_ptr.vmem [resolvable:$true] %s34
      %40 = dma.hbm_to_vmem [thread:$0]  %s33, 896, %s35, [#allocation4], 128, 128, 8
    $region5: #{_lenet5_padded.1} parent=1 // pred_fallthru
      _
    // Predicated region
    $region6: #{_lenet5_padded.1} parent=1 // pred_check
      _
    $region7: #{_lenet5_padded.1} parent=1 // pred_check_branch
      %42 = sbr.rel (0) target = $region9
    $region8: #{_lenet5_padded.1} parent=1 // pred_region
      %44 = vsyncadd [#allocation7], 0
      %s45 = sshll.u32 %s1, 4
      %s46 = int_to_ptr.hbm [resolvable:$true] %s45
      %s47 = sshll.u32 [#allocation6], 4
      %s48 = int_to_ptr.vmem [resolvable:$true] %s47
      %53 = dma.hbm_to_vmem [thread:$0]  %s46, 2304, %s48, [#allocation7], 128, 128, 8
    $region9: #{_lenet5_padded.1} parent=1 // pred_fallthru
      _
    // Predicated region
    $region10: #{_lenet5_padded.1} parent=1 // pred_check
      _
    $region11: #{_lenet5_padded.1} parent=1 // pred_check_branch
      %55 = sbr.rel (0) target = $region13
    $region12: #{_lenet5_padded.1} parent=1 // pred_region
      %57 = vsyncadd [#allocation7], 0
      %s58 = sshll.u32 %s2, 4
      %s59 = int_to_ptr.hbm [resolvable:$true] %s58
      %s60 = sshll.u32 [#allocation8], 4
      %s61 = int_to_ptr.vmem [resolvable:$true] %s60
      %66 = dma.hbm_to_vmem [thread:$0]  %s59, 4608, %s61, [#allocation7], 256, 256, 16
    $region13: #{_lenet5_padded.1} parent=1 // pred_fallthru
      _
    // Predicated region
    $region14: #{_lenet5_padded.1} parent=1 // pred_check
      _
    $region15: #{_lenet5_padded.1} parent=1 // pred_check_branch
      %68 = sbr.rel (0) target = $region17
    $region16: #{_lenet5_padded.1} parent=1 // pred_region
      _
    $region17: #{_lenet5_padded.1} parent=1 // pred_fallthru
      _
    // Predicated region
    $region18: #{_lenet5_padded.1} parent=1 // pred_check
      _
    $region19: #{_lenet5_padded.1} parent=1 // pred_check_branch
      %70 = sbr.rel (0) target = $region21
    $region20: #{_lenet5_padded.1} parent=1 // pred_region
      _
    $region21: #{_lenet5_padded.1} parent=1 // pred_fallthru
      _
    // Predicated region
    $region22: #{_lenet5_padded.1} parent=1 // pred_check
      _
    $region23: #{_lenet5_padded.1} parent=1 // pred_check_branch
      %72 = sbr.rel (0) target = $region25
    $region24: #{_lenet5_padded.1} parent=1 // pred_region
      %74 = vsyncadd [#allocation10], 0
      %s75 = sshll.u32 %s5, 4
      %s76 = int_to_ptr.hbm [resolvable:$true] %s75
      %s77 = sshll.u32 [#allocation9], 4
      %s78 = int_to_ptr.vmem [resolvable:$true] %s77
      %83 = dma.hbm_to_vmem [thread:$0]  %s76, 2304, %s78, [#allocation10], 128, 128, 8
    $region25: #{_lenet5_padded.1} parent=1 // pred_fallthru
      _
    // Predicated region
    $region26: #{_lenet5_padded.1} parent=1 // pred_check
      _
    $region27: #{_lenet5_padded.1} parent=1 // pred_check_branch
      %85 = sbr.rel (0) target = $region29
    $region28: #{_lenet5_padded.1} parent=1 // pred_region
      _
    $region29: #{_lenet5_padded.1} parent=1 // pred_fallthru
      _
    // Predicated region
    $region30: #{_lenet5_padded.1} parent=1 // pred_check
      _
    $region31: #{_lenet5_padded.1} parent=1 // pred_check_branch
      %87 = sbr.rel (0) target = $region33
    $region32: #{_lenet5_padded.1} parent=1 // pred_region
      %89 = vsyncadd [#allocation10], 0
      %s90 = sshll.u32 %s7, 4
      %s91 = int_to_ptr.hbm [resolvable:$true] %s90
      %s92 = sshll.u32 [#allocation11], 4
      %s93 = int_to_ptr.vmem [resolvable:$true] %s92
      %98 = dma.hbm_to_vmem [thread:$0]  %s91, 2048, %s93, [#allocation10], 128, 128, 8
    $region33: #{_lenet5_padded.1} parent=1 // pred_fallthru
      _
    // Predicated region
    $region34: #{_lenet5_padded.1} parent=1 // pred_check
      _
    $region35: #{_lenet5_padded.1} parent=1 // pred_check_branch
      %100 = sbr.rel (0) target = $region37
    $region36: #{_lenet5_padded.1} parent=1 // pred_region
      _
    $region37: #{_lenet5_padded.1} parent=1 // pred_fallthru
      _
    // Predicated region
    $region38: #{_lenet5_padded.1} parent=1 // pred_check
      _
    $region39: #{_lenet5_padded.1} parent=1 // pred_check_branch
      %102 = sbr.rel (0) target = $region41
    $region40: #{_lenet5_padded.1} parent=1 // pred_region
      _
    $region41: #{_lenet5_padded.1} parent=1 // pred_fallthru
      _
    // Predicated region
    $region42: #{_lenet5_padded.1} parent=1 // pred_check
      _
    $region43: #{_lenet5_padded.1} parent=1 // pred_check_branch
      %104 = sbr.rel (0) target = $region45
    $region44: #{_lenet5_padded.1} parent=1 // pred_region
      _
    $region45: #{_lenet5_padded.1} parent=1 // pred_fallthru
      _
    // Predicated region
    $region46: #{_lenet5_padded.1} parent=1 // pred_check
      _
    $region47: #{_lenet5_padded.1} parent=1 // pred_check_branch
      %106 = sbr.rel (0) target = $region49
    $region48: #{_lenet5_padded.1} parent=1 // pred_region
      %108 = vsyncadd [#allocation13], 0
      %s109 = sshll.u32 %s11, 4
      %s110 = int_to_ptr.hbm [resolvable:$true] %s109
      %s111 = sshll.u32 [#allocation12], 4
      %s112 = int_to_ptr.vmem [resolvable:$true] %s111
      %117 = dma.hbm_to_vmem [thread:$0]  %s110, 1152, %s112, [#allocation13], 64, 64, 4
    $region49: #{_lenet5_padded.1} parent=1 // pred_fallthru
      _
    // Predicated region
    $region50: #{_lenet5_padded.1} parent=1 // pred_check
      _
    $region51: #{_lenet5_padded.1} parent=1 // pred_check_branch
      %119 = sbr.rel (0) target = $region53
    $region52: #{_lenet5_padded.1} parent=1 // pred_region
      _
    $region53: #{_lenet5_padded.1} parent=1 // pred_fallthru
      _
    // Predicated region
    $region54: #{_lenet5_padded.1} parent=1 // pred_check
      _
    $region55: #{_lenet5_padded.1} parent=1 // pred_check_branch
      %121 = sbr.rel (0) target = $region57
    $region56: #{_lenet5_padded.1} parent=1 // pred_region
      %123 = vsyncadd [#allocation13], 0
      %s124 = sshll.u32 %s13, 4
      %s125 = int_to_ptr.hbm [resolvable:$true] %s124
      %s126 = sshll.u32 [#allocation14], 4
      %s127 = int_to_ptr.vmem [resolvable:$true] %s126
      %132 = dma.hbm_to_vmem [thread:$0]  %s125, 1024, %s127, [#allocation13], 64, 64, 4
    $region57: #{_lenet5_padded.1} parent=1 // pred_fallthru
      _
    // Predicated region
    $region58: #{_lenet5_padded.1} parent=1 // pred_check
      _
    $region59: #{_lenet5_padded.1} parent=1 // pred_check_branch
      %134 = sbr.rel (0) target = $region61
    $region60: #{_lenet5_padded.1} parent=1 // pred_region
      _
    $region61: #{_lenet5_padded.1} parent=1 // pred_fallthru
      _
    // Predicated region
    $region62: #{_lenet5_padded.1} parent=1 // pred_check
      _
    $region63: #{_lenet5_padded.1} parent=1 // pred_check_branch
      %136 = sbr.rel (0) target = $region65
    $region64: #{_lenet5_padded.1} parent=1 // pred_region
      %138 = vsyncadd [#allocation16], 0
      %s139 = sshll.u32 %s15, 4
      %s140 = int_to_ptr.hbm [resolvable:$true] %s139
      %s141 = sshll.u32 [#allocation15], 4
      %s142 = int_to_ptr.vmem [resolvable:$true] %s141
      %147 = dma.hbm_to_vmem [thread:$0]  %s140, 1024, %s142, [#allocation16], 64, 64, 4
    $region65: #{_lenet5_padded.1} parent=1 // pred_fallthru
      _
    // Predicated region
    $region66: #{_lenet5_padded.1} parent=1 // pred_check
      _
    $region67: #{_lenet5_padded.1} parent=1 // pred_check_branch
      %149 = sbr.rel (0) target = $region69
    $region68: #{_lenet5_padded.1} parent=1 // pred_region
      _
    $region69: #{_lenet5_padded.1} parent=1 // pred_fallthru
      _
    // Predicated region
    $region70: #{_lenet5_padded.1} parent=1 // pred_check
      _
    $region71: #{_lenet5_padded.1} parent=1 // pred_check_branch
      %151 = sbr.rel (0) target = $region73
    $region72: #{_lenet5_padded.1} parent=1 // pred_region
      %153 = dma.done [#allocation4], 896
    $region73: #{_lenet5_padded.1} parent=1 // pred_fallthru
      _
    // Predicated region
    $region74: #{_lenet5_padded.1} parent=1 // pred_check
      _
    $region75: #{_lenet5_padded.1} parent=1 // pred_check_branch
      %155 = sbr.rel (0) target = $region77
    $region76: #{_lenet5_padded.1} parent=1 // pred_region
      %157 = dma.done [#allocation7], 2304
    $region77: #{_lenet5_padded.1} parent=1 // pred_fallthru
      _
    // Predicated region
    $region78: #{_lenet5_padded.1} parent=1 // pred_check
      _
    $region79: #{_lenet5_padded.1} parent=1 // pred_check_branch
      %159 = sbr.rel (0) target = $region81
    $region80: #{_lenet5_padded.1} parent=1 // pred_region
      %161 = dma.done [#allocation7], 4608
    $region81: #{_lenet5_padded.1} parent=1 // pred_fallthru
      _
    // Predicated region
    $region82: #{_lenet5_padded.1} parent=1 // pred_check
      _
    $region83: #{_lenet5_padded.1} parent=1 // pred_check_branch
      %163 = sbr.rel (0) target = $region85
    $region84: #{_lenet5_padded.1} parent=1 // pred_region
      %165 = dma.done [#allocation10], 2304
    $region85: #{_lenet5_padded.1} parent=1 // pred_fallthru
      _
    // Predicated region
    $region86: #{_lenet5_padded.1} parent=1 // pred_check
      _
    $region87: #{_lenet5_padded.1} parent=1 // pred_check_branch
      %167 = sbr.rel (0) target = $region89
    $region88: #{_lenet5_padded.1} parent=1 // pred_region
      %169 = dma.done [#allocation10], 2048
    $region89: #{_lenet5_padded.1} parent=1 // pred_fallthru
      _
    // Predicated region
    $region90: #{_lenet5_padded.1} parent=1 // pred_check
      _
    $region91: #{_lenet5_padded.1} parent=1 // pred_check_branch
      %171 = sbr.rel (0) target = $region93
    $region92: #{_lenet5_padded.1} parent=1 // pred_region
      %173 = dma.done [#allocation13], 1152
    $region93: #{_lenet5_padded.1} parent=1 // pred_fallthru
      _
    // Predicated region
    $region94: #{_lenet5_padded.1} parent=1 // pred_check
      _
    $region95: #{_lenet5_padded.1} parent=1 // pred_check_branch
      %175 = sbr.rel (0) target = $region97
    $region96: #{_lenet5_padded.1} parent=1 // pred_region
      %177 = dma.done [#allocation13], 1024
    $region97: #{_lenet5_padded.1} parent=1 // pred_fallthru
      _
    // Predicated region
    $region98: #{_lenet5_padded.1} parent=1 // pred_check
      _
    $region99: #{_lenet5_padded.1} parent=1 // pred_check_branch
      %179 = sbr.rel (0) target = $region101
    $region100: #{_lenet5_padded.1} parent=1 // pred_region
      %181 = dma.done [#allocation16], 1024
    $region101: #{_lenet5_padded.1} parent=1 // pred_fallthru
      _
    %v183 = vld [vmem:[#allocation3] sm:$0xff]
    %v184 = vld [vmem:[#allocation3 + $0x8] sm:$0xff]
    %v185 = vld [vmem:[#allocation3 + $0x10] sm:$0xff]
    %v186 = vld [vmem:[#allocation3 + $0x18] sm:$0xff]
    %v187 = vld [vmem:[#allocation3 + $0x20] sm:$0xff]
    %v188 = vld [vmem:[#allocation3 + $0x28] sm:$0xff]
    %v189 = vld [vmem:[#allocation3 + $0x30] sm:$0xff]
    %v190 = vlaneseq
    %v191 = vshrl.u32 %v190, 7
    %v192 = vadd.s32 %v191, 8
    %v193 = vadd.s32 %v191, 16
    %v194 = vadd.s32 %v191, 24
    %v195 = vadd.s32 %v191, 32
    %v196 = vadd.s32 %v191, 40
    %v197 = vadd.s32 %v191, 48
    %vm198 = vcmp.lt.s32.totalorder %v191, 0
    %v199 = vsub.s32 0, %v191
    %v200 = vsel %vm198, %v199, %v191
    %v201 = vand.u32 %v200, 65535
    %v202 = vshrl.u32 %v200, 16
    %v204 = vmul.u32 %v201, 9362
    %v205 = vmul.u32 %v201, 37449
    %v206 = vmul.u32 %v202, 9362
    %v207 = vmul.u32 %v202, 37449
    %v208 = vshll.u32 %v205, 16
    %v209 = vshrl.u32 %v205, 16
    %v210 = vshll.u32 %v206, 16
    %v211 = vshrl.u32 %v206, 16
    %vm212 = vc.u32 %v204, %v208
    %v213 = vsel %vm212, 1, 0
    %v214 = vadd.s32 %v204, %v208
    %v215 = vadd.s32 %v207, %v213
    %vm216 = vc.u32 %v214, %v210
    %v217 = vsel %vm216, 1, 0
    %v218 = vadd.s32 %v214, %v210
    %v219 = vadd.s32 %v215, %v217
    %v220 = vadd.s32 %v219, %v209
    %v221 = vadd.s32 %v220, %v211
    %vm222 = vc.u32 %v218, 2454267026
    %v223 = vsel %vm222, 1, 0
    %v224 = vadd.s32 %v221, %v223
    %v225 = vshrl.u32 %v224, 4
    %v226 = vmul.u32 %v225, 28
    %v227 = vsub.s32 %v200, %v226
    %v228 = vsub.s32 0, %v227
    %v229 = vsel %vm198, %v228, %v227
    %vm230 = vcmp.lt.s32.totalorder %v192, 0
    %v231 = vsub.s32 0, %v192
    %v232 = vsel %vm230, %v231, %v192
    %v233 = vand.u32 %v232, 65535
    %v234 = vshrl.u32 %v232, 16
    %v236 = vmul.u32 %v233, 9362
    %v237 = vmul.u32 %v233, 37449
    %v238 = vmul.u32 %v234, 9362
    %v239 = vmul.u32 %v234, 37449
    %v240 = vshll.u32 %v237, 16
    %v241 = vshrl.u32 %v237, 16
    %v242 = vshll.u32 %v238, 16
    %v243 = vshrl.u32 %v238, 16
    %vm244 = vc.u32 %v236, %v240
    %v245 = vsel %vm244, 1, 0
    %v246 = vadd.s32 %v236, %v240
    %v247 = vadd.s32 %v239, %v245
    %vm248 = vc.u32 %v246, %v242
    %v249 = vsel %vm248, 1, 0
    %v250 = vadd.s32 %v246, %v242
    %v251 = vadd.s32 %v247, %v249
    %v252 = vadd.s32 %v251, %v241
    %v253 = vadd.s32 %v252, %v243
    %vm254 = vc.u32 %v250, 2454267026
    %v255 = vsel %vm254, 1, 0
    %v256 = vadd.s32 %v253, %v255
    %v257 = vshrl.u32 %v256, 4
    %v258 = vmul.u32 %v257, 28
    %v259 = vsub.s32 %v232, %v258
    %v260 = vsub.s32 0, %v259
    %v261 = vsel %vm230, %v260, %v259
    %vm262 = vcmp.lt.s32.totalorder %v193, 0
    %v263 = vsub.s32 0, %v193
    %v264 = vsel %vm262, %v263, %v193
    %v265 = vand.u32 %v264, 65535
    %v266 = vshrl.u32 %v264, 16
    %v268 = vmul.u32 %v265, 9362
    %v269 = vmul.u32 %v265, 37449
    %v270 = vmul.u32 %v266, 9362
    %v271 = vmul.u32 %v266, 37449
    %v272 = vshll.u32 %v269, 16
    %v273 = vshrl.u32 %v269, 16
    %v274 = vshll.u32 %v270, 16
    %v275 = vshrl.u32 %v270, 16
    %vm276 = vc.u32 %v268, %v272
    %v277 = vsel %vm276, 1, 0
    %v278 = vadd.s32 %v268, %v272
    %v279 = vadd.s32 %v271, %v277
    %vm280 = vc.u32 %v278, %v274
    %v281 = vsel %vm280, 1, 0
    %v282 = vadd.s32 %v278, %v274
    %v283 = vadd.s32 %v279, %v281
    %v284 = vadd.s32 %v283, %v273
    %v285 = vadd.s32 %v284, %v275
    %vm286 = vc.u32 %v282, 2454267026
    %v287 = vsel %vm286, 1, 0
    %v288 = vadd.s32 %v285, %v287
    %v289 = vshrl.u32 %v288, 4
    %v290 = vmul.u32 %v289, 28
    %v291 = vsub.s32 %v264, %v290
    %v292 = vsub.s32 0, %v291
    %v293 = vsel %vm262, %v292, %v291
    %vm294 = vcmp.lt.s32.totalorder %v194, 0
    %v295 = vsub.s32 0, %v194
    %v296 = vsel %vm294, %v295, %v194
    %v297 = vand.u32 %v296, 65535
    %v298 = vshrl.u32 %v296, 16
    %v300 = vmul.u32 %v297, 9362
    %v301 = vmul.u32 %v297, 37449
    %v302 = vmul.u32 %v298, 9362
    %v303 = vmul.u32 %v298, 37449
    %v304 = vshll.u32 %v301, 16
    %v305 = vshrl.u32 %v301, 16
    %v306 = vshll.u32 %v302, 16
    %v307 = vshrl.u32 %v302, 16
    %vm308 = vc.u32 %v300, %v304
    %v309 = vsel %vm308, 1, 0
    %v310 = vadd.s32 %v300, %v304
    %v311 = vadd.s32 %v303, %v309
    %vm312 = vc.u32 %v310, %v306
    %v313 = vsel %vm312, 1, 0
    %v314 = vadd.s32 %v310, %v306
    %v315 = vadd.s32 %v311, %v313
    %v316 = vadd.s32 %v315, %v305
    %v317 = vadd.s32 %v316, %v307
    %vm318 = vc.u32 %v314, 2454267026
    %v319 = vsel %vm318, 1, 0
    %v320 = vadd.s32 %v317, %v319
    %v321 = vshrl.u32 %v320, 4
    %v322 = vmul.u32 %v321, 28
    %v323 = vsub.s32 %v296, %v322
    %v324 = vsub.s32 0, %v323
    %v325 = vsel %vm294, %v324, %v323
    %vm326 = vcmp.lt.s32.totalorder %v195, 0
    %v327 = vsub.s32 0, %v195
    %v328 = vsel %vm326, %v327, %v195
    %v329 = vand.u32 %v328, 65535
    %v330 = vshrl.u32 %v328, 16
    %v332 = vmul.u32 %v329, 9362
    %v333 = vmul.u32 %v329, 37449
    %v334 = vmul.u32 %v330, 9362
    %v335 = vmul.u32 %v330, 37449
    %v336 = vshll.u32 %v333, 16
    %v337 = vshrl.u32 %v333, 16
    %v338 = vshll.u32 %v334, 16
    %v339 = vshrl.u32 %v334, 16
    %vm340 = vc.u32 %v332, %v336
    %v341 = vsel %vm340, 1, 0
    %v342 = vadd.s32 %v332, %v336
    %v343 = vadd.s32 %v335, %v341
    %vm344 = vc.u32 %v342, %v338
    %v345 = vsel %vm344, 1, 0
    %v346 = vadd.s32 %v342, %v338
    %v347 = vadd.s32 %v343, %v345
    %v348 = vadd.s32 %v347, %v337
    %v349 = vadd.s32 %v348, %v339
    %vm350 = vc.u32 %v346, 2454267026
    %v351 = vsel %vm350, 1, 0
    %v352 = vadd.s32 %v349, %v351
    %v353 = vshrl.u32 %v352, 4
    %v354 = vmul.u32 %v353, 28
    %v355 = vsub.s32 %v328, %v354
    %v356 = vsub.s32 0, %v355
    %v357 = vsel %vm326, %v356, %v355
    %vm358 = vcmp.lt.s32.totalorder %v196, 0
    %v359 = vsub.s32 0, %v196
    %v360 = vsel %vm358, %v359, %v196
    %v361 = vand.u32 %v360, 65535
    %v362 = vshrl.u32 %v360, 16
    %v364 = vmul.u32 %v361, 9362
    %v365 = vmul.u32 %v361, 37449
    %v366 = vmul.u32 %v362, 9362
    %v367 = vmul.u32 %v362, 37449
    %v368 = vshll.u32 %v365, 16
    %v369 = vshrl.u32 %v365, 16
    %v370 = vshll.u32 %v366, 16
    %v371 = vshrl.u32 %v366, 16
    %vm372 = vc.u32 %v364, %v368
    %v373 = vsel %vm372, 1, 0
    %v374 = vadd.s32 %v364, %v368
    %v375 = vadd.s32 %v367, %v373
    %vm376 = vc.u32 %v374, %v370
    %v377 = vsel %vm376, 1, 0
    %v378 = vadd.s32 %v374, %v370
    %v379 = vadd.s32 %v375, %v377
    %v380 = vadd.s32 %v379, %v369
    %v381 = vadd.s32 %v380, %v371
    %vm382 = vc.u32 %v378, 2454267026
    %v383 = vsel %vm382, 1, 0
    %v384 = vadd.s32 %v381, %v383
    %v385 = vshrl.u32 %v384, 4
    %v386 = vmul.u32 %v385, 28
    %v387 = vsub.s32 %v360, %v386
    %v388 = vsub.s32 0, %v387
    %v389 = vsel %vm358, %v388, %v387
    %vm390 = vcmp.lt.s32.totalorder %v197, 0
    %v391 = vsub.s32 0, %v197
    %v392 = vsel %vm390, %v391, %v197
    %v393 = vand.u32 %v392, 65535
    %v394 = vshrl.u32 %v392, 16
    %v396 = vmul.u32 %v393, 9362
    %v397 = vmul.u32 %v393, 37449
    %v398 = vmul.u32 %v394, 9362
    %v399 = vmul.u32 %v394, 37449
    %v400 = vshll.u32 %v397, 16
    %v401 = vshrl.u32 %v397, 16
    %v402 = vshll.u32 %v398, 16
    %v403 = vshrl.u32 %v398, 16
    %vm404 = vc.u32 %v396, %v400
    %v405 = vsel %vm404, 1, 0
    %v406 = vadd.s32 %v396, %v400
    %v407 = vadd.s32 %v399, %v405
    %vm408 = vc.u32 %v406, %v402
    %v409 = vsel %vm408, 1, 0
    %v410 = vadd.s32 %v406, %v402
    %v411 = vadd.s32 %v407, %v409
    %v412 = vadd.s32 %v411, %v401
    %v413 = vadd.s32 %v412, %v403
    %vm414 = vc.u32 %v410, 2454267026
    %v415 = vsel %vm414, 1, 0
    %v416 = vadd.s32 %v413, %v415
    %v417 = vshrl.u32 %v416, 4
    %v418 = vmul.u32 %v417, 28
    %v419 = vsub.s32 %v392, %v418
    %v420 = vsub.s32 0, %v419
    %v421 = vsel %vm390, %v420, %v419
    %vm422 = vcmp.ne.s32.totalorder %v229, 0
    %vm423 = vcmp.ne.s32.totalorder %v261, 0
    %vm424 = vcmp.ne.s32.totalorder %v293, 0
    %vm425 = vcmp.ne.s32.totalorder %v325, 0
    %vm426 = vcmp.ne.s32.totalorder %v357, 0
    %vm427 = vcmp.ne.s32.totalorder %v389, 0
    %vm428 = vcmp.ne.s32.totalorder %v421, 0
    %vm429 = vcmp.lt.s32.totalorder %v229, 0
    %vm430 = vcmp.lt.s32.totalorder %v261, 0
    %vm431 = vcmp.lt.s32.totalorder %v293, 0
    %vm432 = vcmp.lt.s32.totalorder %v325, 0
    %vm433 = vcmp.lt.s32.totalorder %v357, 0
    %vm434 = vcmp.lt.s32.totalorder %v389, 0
    %vm435 = vcmp.lt.s32.totalorder %v421, 0
    %vm436 = vmand %vm429, %vm422
    %vm437 = vmand %vm430, %vm423
    %vm438 = vmand %vm431, %vm424
    %vm439 = vmand %vm432, %vm425
    %vm440 = vmand %vm433, %vm426
    %vm441 = vmand %vm434, %vm427
    %vm442 = vmand %vm435, %vm428
    %v443 = vadd.s32 %v229, 28
    %v444 = vadd.s32 %v261, 28
    %v445 = vadd.s32 %v293, 28
    %v446 = vadd.s32 %v325, 28
    %v447 = vadd.s32 %v357, 28
    %v448 = vadd.s32 %v389, 28
    %v449 = vadd.s32 %v421, 28
    %v450 = vsel %vm436, %v443, %v229
    %v451 = vsel %vm437, %v444, %v261
    %v452 = vsel %vm438, %v445, %v293
    %v453 = vsel %vm439, %v446, %v325
    %v454 = vsel %vm440, %v447, %v357
    %v455 = vsel %vm441, %v448, %v389
    %v456 = vsel %vm442, %v449, %v421
    %v457 = vrot.slane %v183, 1
    %v458 = vrot.slane %v184, 1
    %v459 = vrot.slane %v185, 1
    %v460 = vrot.slane %v186, 1
    %v461 = vrot.slane %v187, 1
    %v462 = vrot.slane %v188, 1
    %v463 = vrot.slane %v189, 1
    %vm464 = vcmp.lt.s32.totalorder %v191, 7
    %v465 = vsel %vm464, %v462, %v463
    %v466 = vsel %vm464, %v461, %v462
    %v467 = vsel %vm464, %v460, %v461
    %v468 = vsel %vm464, %v459, %v460
    %v469 = vsel %vm464, %v458, %v459
    %v470 = vsel %vm464, %v457, %v458
    %v471 = vsel %vm464, %v463, %v457
    %v472 = vrot.slane %v183, 2
    %v473 = vrot.slane %v184, 2
    %v474 = vrot.slane %v185, 2
    %v475 = vrot.slane %v186, 2
    %v476 = vrot.slane %v187, 2
    %v477 = vrot.slane %v188, 2
    %v478 = vrot.slane %v189, 2
    %vm479 = vcmp.lt.s32.totalorder %v191, 6
    %v480 = vsel %vm479, %v477, %v478
    %v481 = vsel %vm479, %v476, %v477
    %v482 = vsel %vm479, %v475, %v476
    %v483 = vsel %vm479, %v474, %v475
    %v484 = vsel %vm479, %v473, %v474
    %v485 = vsel %vm479, %v472, %v473
    %v486 = vsel %vm479, %v478, %v472
    %v487 = vrot.slane %v183, 3
    %v488 = vrot.slane %v184, 3
    %v489 = vrot.slane %v185, 3
    %v490 = vrot.slane %v186, 3
    %v491 = vrot.slane %v187, 3
    %v492 = vrot.slane %v188, 3
    %v493 = vrot.slane %v189, 3
    %vm494 = vcmp.lt.s32.totalorder %v191, 5
    %v495 = vsel %vm494, %v492, %v493
    %v496 = vsel %vm494, %v491, %v492
    %v497 = vsel %vm494, %v490, %v491
    %v498 = vsel %vm494, %v489, %v490
    %v499 = vsel %vm494, %v488, %v489
    %v500 = vsel %vm494, %v487, %v488
    %v501 = vsel %vm494, %v493, %v487
    %v502 = vrot.slane %v183, 4
    %v503 = vrot.slane %v184, 4
    %v504 = vrot.slane %v185, 4
    %v505 = vrot.slane %v186, 4
    %v506 = vrot.slane %v187, 4
    %v507 = vrot.slane %v188, 4
    %v508 = vrot.slane %v189, 4
    %vm509 = vcmp.lt.s32.totalorder %v191, 4
    %v510 = vsel %vm509, %v507, %v508
    %v511 = vsel %vm509, %v506, %v507
    %v512 = vsel %vm509, %v505, %v506
    %v513 = vsel %vm509, %v504, %v505
    %v514 = vsel %vm509, %v503, %v504
    %v515 = vsel %vm509, %v502, %v503
    %v516 = vsel %vm509, %v508, %v502
    %524 = vrot.lane.b32.xlu0 %v470, 28
    %v525 = vpop.permute.xlu0 %524
    %526 = vrot.lane.b32.xlu0 %v469, 28
    %v527 = vpop.permute.xlu0 %526
    %528 = vrot.lane.b32.xlu0 %v468, 28
    %v529 = vpop.permute.xlu0 %528
    %530 = vrot.lane.b32.xlu0 %v467, 28
    %v531 = vpop.permute.xlu0 %530
    %532 = vrot.lane.b32.xlu0 %v466, 28
    %v533 = vpop.permute.xlu0 %532
    %534 = vrot.lane.b32.xlu0 %v465, 28
    %v535 = vpop.permute.xlu0 %534
    %536 = vrot.lane.b32.xlu0 %v471, 28
    %v537 = vpop.permute.xlu0 %536
    %552 = vrot.lane.b32.xlu0 %v485, 56
    %v553 = vpop.permute.xlu0 %552
    %554 = vrot.lane.b32.xlu0 %v484, 56
    %v555 = vpop.permute.xlu0 %554
    %556 = vrot.lane.b32.xlu0 %v483, 56
    %v557 = vpop.permute.xlu0 %556
    %558 = vrot.lane.b32.xlu0 %v482, 56
    %v559 = vpop.permute.xlu0 %558
    %560 = vrot.lane.b32.xlu0 %v481, 56
    %v561 = vpop.permute.xlu0 %560
    %562 = vrot.lane.b32.xlu0 %v480, 56
    %v563 = vpop.permute.xlu0 %562
    %564 = vrot.lane.b32.xlu0 %v486, 56
    %v565 = vpop.permute.xlu0 %564
    %580 = vrot.lane.b32.xlu0 %v500, 84
    %v581 = vpop.permute.xlu0 %580
    %582 = vrot.lane.b32.xlu0 %v499, 84
    %v583 = vpop.permute.xlu0 %582
    %584 = vrot.lane.b32.xlu0 %v498, 84
    %v585 = vpop.permute.xlu0 %584
    %586 = vrot.lane.b32.xlu0 %v497, 84
    %v587 = vpop.permute.xlu0 %586
    %588 = vrot.lane.b32.xlu0 %v496, 84
    %v589 = vpop.permute.xlu0 %588
    %590 = vrot.lane.b32.xlu0 %v495, 84
    %v591 = vpop.permute.xlu0 %590
    %592 = vrot.lane.b32.xlu0 %v501, 84
    %v593 = vpop.permute.xlu0 %592
    %608 = vrot.lane.b32.xlu0 %v515, 112
    %v609 = vpop.permute.xlu0 %608
    %610 = vrot.lane.b32.xlu0 %v514, 112
    %v611 = vpop.permute.xlu0 %610
    %612 = vrot.lane.b32.xlu0 %v513, 112
    %v613 = vpop.permute.xlu0 %612
    %614 = vrot.lane.b32.xlu0 %v512, 112
    %v615 = vpop.permute.xlu0 %614
    %616 = vrot.lane.b32.xlu0 %v511, 112
    %v617 = vpop.permute.xlu0 %616
    %618 = vrot.lane.b32.xlu0 %v510, 112
    %v619 = vpop.permute.xlu0 %618
    %620 = vrot.lane.b32.xlu0 %v516, 112
    %v621 = vpop.permute.xlu0 %620
    %vm629 = vcmask 228352
    %v630 = vsel %vm629, %v183, %v525
    %v631 = vsel %vm629, %v184, %v527
    %v632 = vsel %vm629, %v185, %v529
    %v633 = vsel %vm629, %v186, %v531
    %v634 = vsel %vm629, %v187, %v533
    %v635 = vsel %vm629, %v188, %v535
    %v636 = vsel %vm629, %v189, %v537
    %vm637 = vcmask 457728
    %v638 = vsel %vm637, %v630, %v553
    %v639 = vsel %vm637, %v631, %v555
    %v640 = vsel %vm637, %v632, %v557
    %v641 = vsel %vm637, %v633, %v559
    %v642 = vsel %vm637, %v634, %v561
    %v643 = vsel %vm637, %v635, %v563
    %v644 = vsel %vm637, %v636, %v565
    %vm645 = vcmask 687104
    %v646 = vsel %vm645, %v638, %v581
    %v647 = vsel %vm645, %v639, %v583
    %v648 = vsel %vm645, %v640, %v585
    %v649 = vsel %vm645, %v641, %v587
    %v650 = vsel %vm645, %v642, %v589
    %v651 = vsel %vm645, %v643, %v591
    %v652 = vsel %vm645, %v644, %v593
    %vm653 = vcmask 916480
    %v654 = vsel %vm653, %v646, %v609
    %v655 = vsel %vm653, %v647, %v611
    %v656 = vsel %vm653, %v648, %v613
    %v657 = vsel %vm653, %v649, %v615
    %v658 = vsel %vm653, %v650, %v617
    %v659 = vsel %vm653, %v651, %v619
    %v660 = vsel %vm653, %v652, %v621
    %v661 = vpack.c.bf16 %v655, %v654
    %v662 = vpack.c.bf16 %v611, %v609
    %v663 = vpack.c.bf16 %v657, %v656
    %v664 = vpack.c.bf16 %v615, %v613
    %v665 = vpack.c.bf16 %v659, %v658
    %v666 = vpack.c.bf16 %v619, %v617
    %v667 = vpack.c.bf16 %v660, %v660
    %v668 = vpack.c.bf16 %v621, %v621
    %v669 = vld [vmem:[#allocation6] sm:$0xff]
    %v670 = vld [vmem:[#allocation6 + $0x8] sm:$0xff]
    %v671 = vld [vmem:[#allocation6 + $0x10] sm:$0xff]
    %v672 = vld [vmem:[#allocation6 + $0x18] sm:$0xff]
    %v673 = vld [vmem:[#allocation6 + $0x20] sm:$0xff]
    %v674 = vld [vmem:[#allocation6 + $0x28] sm:$0xff]
    %v675 = vld [vmem:[#allocation6 + $0x30] sm:$0xff]
    %v676 = vld [vmem:[#allocation6 + $0x38] sm:$0xff]
    %v677 = vld [vmem:[#allocation6 + $0x40] sm:$0xff]
    %v678 = vld [vmem:[#allocation6 + $0x48] sm:$0xff]
    %v679 = vld [vmem:[#allocation6 + $0x50] sm:$0xff]
    %v680 = vld [vmem:[#allocation6 + $0x58] sm:$0xff]
    %v681 = vld [vmem:[#allocation6 + $0x60] sm:$0xff]
    %v682 = vld [vmem:[#allocation6 + $0x68] sm:$0xff]
    %v683 = vld [vmem:[#allocation6 + $0x70] sm:$0xff]
    %v684 = vld [vmem:[#allocation6 + $0x78] sm:$0xff]
    %v685 = vld [vmem:[#allocation6 + $0x80] sm:$0xff]
    %v686 = vld [vmem:[#allocation6 + $0x88] sm:$0x33]
    %v705 = vunpack.c.l.b16 %v669
    %v706 = vunpack.c.h.b16 %v669
    %v707 = vunpack.c.l.b16 %v670
    %v708 = vunpack.c.h.b16 %v670
    %v709 = vunpack.c.l.b16 %v671
    %v710 = vunpack.c.h.b16 %v671
    %v711 = vunpack.c.l.b16 %v672
    %v712 = vunpack.c.h.b16 %v672
    %v713 = vunpack.c.l.b16 %v673
    %v714 = vunpack.c.h.b16 %v673
    %v715 = vunpack.c.l.b16 %v674
    %v716 = vunpack.c.h.b16 %v674
    %v717 = vunpack.c.l.b16 %v675
    %v718 = vunpack.c.h.b16 %v675
    %v719 = vunpack.c.l.b16 %v676
    %v720 = vunpack.c.h.b16 %v676
    %v721 = vunpack.c.l.b16 %v677
    %v722 = vunpack.c.h.b16 %v677
    %v723 = vunpack.c.l.b16 %v678
    %v724 = vunpack.c.h.b16 %v678
    %v725 = vunpack.c.l.b16 %v679
    %v726 = vunpack.c.h.b16 %v679
    %v727 = vunpack.c.l.b16 %v680
    %v728 = vunpack.c.h.b16 %v680
    %v729 = vunpack.c.l.b16 %v681
    %v730 = vunpack.c.h.b16 %v681
    %v731 = vunpack.c.l.b16 %v682
    %v732 = vunpack.c.h.b16 %v682
    %v733 = vunpack.c.l.b16 %v683
    %v734 = vunpack.c.h.b16 %v683
    %v735 = vunpack.c.l.b16 %v684
    %v736 = vunpack.c.h.b16 %v684
    %v737 = vunpack.c.l.b16 %v685
    %v738 = vunpack.c.h.b16 %v685
    %v739 = vunpack.c.l.b16 %v686
    %v740 = vunpack.c.h.b16 %v686
    %v741 = vpack.c.b16 %v707, %v705
    %v742 = vpack.c.b16 %v708, %v706
    %v743 = vpack.c.b16 %v711, %v709
    %v744 = vpack.c.b16 %v712, %v710
    %v745 = vpack.c.b16 %v715, %v713
    %v746 = vpack.c.b16 %v716, %v714
    %v747 = vpack.c.b16 %v719, %v717
    %v748 = vpack.c.b16 %v720, %v718
    %v749 = vpack.c.b16 %v723, %v721
    %v750 = vpack.c.b16 %v724, %v722
    %v751 = vpack.c.b16 %v727, %v725
    %v752 = vpack.c.b16 %v728, %v726
    %v753 = vpack.c.b16 %v731, %v729
    %v754 = vpack.c.b16 %v732, %v730
    %v755 = vpack.c.b16 %v735, %v733
    %v756 = vpack.c.b16 %v736, %v734
    %v757 = vpack.c.b16 %v739, %v737
    %v758 = vpack.c.b16 %v740, %v738
    %vm775 = vcmask 97280
    %v777 = vsel %vm775, %v662, 0
    %v780 = vsel %vm775, %v664, 0
    %v783 = vsel %vm775, %v666, 0
    %v786 = vsel %vm775, %v668, 0
    %vm788 = vcmask 1045504
    %v790 = vsel %vm788, %v757, 0
    %v793 = vsel %vm788, %v758, 0
    %795 = vmatpush.bf16.msra.mxu0 %v755
    %796 = vmatpush.bf16.msra.mxu0 %v753
    %797 = vmatpush.bf16.msra.mxu0 %v751
    %798 = vmatpush.bf16.msra.mxu0 %v749
    %799 = vmatpush.bf16.msra.mxu0 %v747
    %800 = vmatpush.bf16.msra.mxu0 %v745
    %801 = vmatpush.bf16.msra.mxu0 %v743
    %802 = vmatpush.bf16.msra.mxu0 %v741
    %803 = vmatmul.bf16.gmra.mxu0 %v661
    %v804 = vpop.f32.mrf.mxu0
    %v805 = vadd.f32 0.0, %v804
    %v806 = vpop.f32.mrf.mxu0
    %v807 = vadd.f32 0.0, %v806
    %808 = vmatmul.bf16.gmra.mxu0 %v663
    %v809 = vpop.f32.mrf.mxu0
    %v810 = vadd.f32 0.0, %v809
    %v811 = vpop.f32.mrf.mxu0
    %v812 = vadd.f32 0.0, %v811
    %813 = vmatmul.bf16.gmra.mxu0 %v665
    %v814 = vpop.f32.mrf.mxu0
    %v815 = vadd.f32 0.0, %v814
    %v816 = vpop.f32.mrf.mxu0
    %v817 = vadd.f32 0.0, %v816
    %818 = vmatmul.bf16.gmra.mxu0 %v667
    %v819 = vpop.f32.mrf.mxu0
    %v820 = vadd.f32 0.0, %v819
    %v821 = vpop.f32.mrf.mxu0
    %822 = vdwg.mxu0
    %823 = vmatpush.bf16.msra.mxu0 0
    %824 = vmatpush.bf16.msra.mxu0 0
    %825 = vmatpush.bf16.msra.mxu0 0
    %826 = vmatpush.bf16.msra.mxu0 0
    %827 = vmatpush.bf16.msra.mxu0 0
    %828 = vmatpush.bf16.msra.mxu0 0
    %829 = vmatpush.bf16.msra.mxu0 0
    %830 = vmatpush.bf16.msra.mxu0 %v790
    %831 = vmatmul.bf16.gmra.mxu0 %v777
    %v832 = vpop.f32.mrf.mxu0
    %v833 = vadd.f32 %v805, %v832
    %v834 = vpop.f32.mrf.mxu0
    %v835 = vadd.f32 %v807, %v834
    %836 = vmatmul.bf16.gmra.mxu0 %v780
    %v837 = vpop.f32.mrf.mxu0
    %v838 = vadd.f32 %v810, %v837
    %v839 = vpop.f32.mrf.mxu0
    %v840 = vadd.f32 %v812, %v839
    %841 = vmatmul.bf16.gmra.mxu0 %v783
    %v842 = vpop.f32.mrf.mxu0
    %v843 = vadd.f32 %v815, %v842
    %v844 = vpop.f32.mrf.mxu0
    %v845 = vadd.f32 %v817, %v844
    %846 = vmatmul.bf16.gmra.mxu0 %v786
    %v847 = vpop.f32.mrf.mxu0
    %v848 = vadd.f32 %v820, %v847
    %v849 = vpop.f32.mrf.mxu0
    %850 = vdwg.mxu0
    %851 = vmatpush.bf16.msra.mxu0 %v756
    %852 = vmatpush.bf16.msra.mxu0 %v754
    %853 = vmatpush.bf16.msra.mxu0 %v752
    %854 = vmatpush.bf16.msra.mxu0 %v750
    %855 = vmatpush.bf16.msra.mxu0 %v748
    %856 = vmatpush.bf16.msra.mxu0 %v746
    %857 = vmatpush.bf16.msra.mxu0 %v744
    %858 = vmatpush.bf16.msra.mxu0 %v742
    %859 = vmatmul.bf16.gmra.mxu0 %v661
    %v860 = vpop.f32.mrf.mxu0
    %v861 = vadd.f32 0.0, %v860
    %v862 = vpop.f32.mrf.mxu0
    %v863 = vadd.f32 0.0, %v862
    %864 = vmatmul.bf16.gmra.mxu0 %v663
    %v865 = vpop.f32.mrf.mxu0
    %v866 = vadd.f32 0.0, %v865
    %v867 = vpop.f32.mrf.mxu0
    %v868 = vadd.f32 0.0, %v867
    %869 = vmatmul.bf16.gmra.mxu0 %v665
    %v870 = vpop.f32.mrf.mxu0
    %v871 = vadd.f32 0.0, %v870
    %v872 = vpop.f32.mrf.mxu0
    %v873 = vadd.f32 0.0, %v872
    %874 = vmatmul.bf16.gmra.mxu0 %v667
    %v875 = vpop.f32.mrf.mxu0
    %v876 = vadd.f32 0.0, %v875
    %v877 = vpop.f32.mrf.mxu0
    %878 = vdwg.mxu0
    %879 = vmatpush.bf16.msra.mxu0 0
    %880 = vmatpush.bf16.msra.mxu0 0
    %881 = vmatpush.bf16.msra.mxu0 0
    %882 = vmatpush.bf16.msra.mxu0 0
    %883 = vmatpush.bf16.msra.mxu0 0
    %884 = vmatpush.bf16.msra.mxu0 0
    %885 = vmatpush.bf16.msra.mxu0 0
    %886 = vmatpush.bf16.msra.mxu0 %v793
    %887 = vmatmul.bf16.gmra.mxu0 %v777
    %v888 = vpop.f32.mrf.mxu0
    %v889 = vadd.f32 %v861, %v888
    %v890 = vpop.f32.mrf.mxu0
    %v891 = vadd.f32 %v863, %v890
    %892 = vmatmul.bf16.gmra.mxu0 %v780
    %v893 = vpop.f32.mrf.mxu0
    %v894 = vadd.f32 %v866, %v893
    %v895 = vpop.f32.mrf.mxu0
    %v896 = vadd.f32 %v868, %v895
    %897 = vmatmul.bf16.gmra.mxu0 %v783
    %v898 = vpop.f32.mrf.mxu0
    %v899 = vadd.f32 %v871, %v898
    %v900 = vpop.f32.mrf.mxu0
    %v901 = vadd.f32 %v873, %v900
    %902 = vmatmul.bf16.gmra.mxu0 %v786
    %v903 = vpop.f32.mrf.mxu0
    %v904 = vadd.f32 %v876, %v903
    %v905 = vpop.f32.mrf.mxu0
    %906 = vdwg.mxu0
    %vm907 = vcmp.lt.s32.totalorder %v450, 24
    %vm908 = vcmp.lt.s32.totalorder %v451, 24
    %vm909 = vcmp.lt.s32.totalorder %v452, 24
    %vm910 = vcmp.lt.s32.totalorder %v453, 24
    %vm911 = vcmp.lt.s32.totalorder %v454, 24
    %vm912 = vcmp.lt.s32.totalorder %v455, 24
    %vm913 = vcmp.lt.s32.totalorder %v456, 24
    %v914 = vsel %vm907, 1, 0
    %v915 = vsel %vm908, 1, 0
    %v916 = vsel %vm909, 1, 0
    %v917 = vsel %vm910, 1, 0
    %v918 = vsel %vm911, 1, 0
    %v919 = vsel %vm912, 1, 0
    %v920 = vsel %vm913, 1, 0
    %v921 = vcvt.s32.f32 %v914
    %v922 = vcvt.s32.f32 %v915
    %v923 = vcvt.s32.f32 %v916
    %v924 = vcvt.s32.f32 %v917
    %v925 = vcvt.s32.f32 %v918
    %v926 = vcvt.s32.f32 %v919
    %v927 = vcvt.s32.f32 %v920
    %v928 = vmul.f32 %v833, %v921
    %v929 = vmul.f32 %v889, %v921
    %v930 = vmul.f32 %v835, %v922
    %v931 = vmul.f32 %v891, %v922
    %v932 = vmul.f32 %v838, %v923
    %v933 = vmul.f32 %v894, %v923
    %v934 = vmul.f32 %v840, %v924
    %v935 = vmul.f32 %v896, %v924
    %v936 = vmul.f32 %v843, %v925
    %v937 = vmul.f32 %v899, %v925
    %v938 = vmul.f32 %v845, %v926
    %v939 = vmul.f32 %v901, %v926
    %v940 = vmul.f32 %v848, %v927
    %v941 = vmul.f32 %v904, %v927
    %v942 = vadd.f32 %v928, %v930
    %v943 = vadd.f32 %v942, %v932
    %v944 = vadd.f32 %v943, %v934
    %v945 = vadd.f32 %v944, %v936
    %v946 = vadd.f32 %v945, %v938
    %v947 = vadd.f32 %v946, %v940
    %v948 = vrot.slane %v947, 4
    %v949 = vadd.f32 %v947, %v948
    %v950 = vrot.slane %v949, 2
    %v951 = vadd.f32 %v949, %v950
    %v952 = vrot.slane %v951, 1
    %v953 = vadd.f32 %v951, %v952
    %vm954 = vcmask 130048
    %v955 = vsel %vm954, %v929, 0.0
    %v956 = vsel %vm954, %v931, 0.0
    %v957 = vadd.f32 %v955, %v956
    %v958 = vsel %vm954, %v933, 0.0
    %v959 = vadd.f32 %v957, %v958
    %v960 = vsel %vm954, %v935, 0.0
    %v961 = vadd.f32 %v959, %v960
    %v962 = vsel %vm954, %v937, 0.0
    %v963 = vadd.f32 %v961, %v962
    %v964 = vsel %vm954, %v939, 0.0
    %v965 = vadd.f32 %v963, %v964
    %v966 = vsel %vm954, %v941, 0.0
    %v967 = vadd.f32 %v965, %v966
    %v968 = vrot.slane %v967, 4
    %v969 = vadd.f32 %v967, %v968
    %v970 = vrot.slane %v969, 2
    %v971 = vadd.f32 %v969, %v970
    %v972 = vrot.slane %v971, 1
    %v973 = vadd.f32 %v971, %v972
    %v974 = vld [vmem:[#allocation8] sm:$0xff]
    %v975 = vld [vmem:[#allocation8 + $0x8] sm:$0xff]
    %v976 = vld [vmem:[#allocation8 + $0x10] sm:$0xff]
    %v977 = vld [vmem:[#allocation8 + $0x18] sm:$0xff]
    %v978 = vld [vmem:[#allocation8 + $0x20] sm:$0xff]
    %v979 = vld [vmem:[#allocation8 + $0x28] sm:$0xff]
    %v980 = vld [vmem:[#allocation8 + $0x30] sm:$0xff]
    %v981 = vld [vmem:[#allocation8 + $0x38] sm:$0xff]
    %v982 = vld [vmem:[#allocation8 + $0x40] sm:$0xff]
    %v983 = vld [vmem:[#allocation8 + $0x48] sm:$0xff]
    %v984 = vld [vmem:[#allocation8 + $0x50] sm:$0xff]
    %v985 = vld [vmem:[#allocation8 + $0x58] sm:$0xff]
    %v986 = vld [vmem:[#allocation8 + $0x60] sm:$0xff]
    %v987 = vld [vmem:[#allocation8 + $0x68] sm:$0xff]
    %v988 = vld [vmem:[#allocation8 + $0x70] sm:$0xff]
    %v989 = vld [vmem:[#allocation8 + $0x78] sm:$0xff]
    %v990 = vld [vmem:[#allocation8 + $0x80] sm:$0xff]
    %v991 = vld [vmem:[#allocation8 + $0x88] sm:$0xff]
    %v992 = vld [vmem:[#allocation8 + $0x90] sm:$0xff]
    %v993 = vld [vmem:[#allocation8 + $0x98] sm:$0xff]
    %v994 = vld [vmem:[#allocation8 + $0xa0] sm:$0xff]
    %v995 = vld [vmem:[#allocation8 + $0xa8] sm:$0xff]
    %v996 = vld [vmem:[#allocation8 + $0xb0] sm:$0xff]
    %v997 = vld [vmem:[#allocation8 + $0xb8] sm:$0xff]
    %v998 = vld [vmem:[#allocation8 + $0xc0] sm:$0xff]
    %v999 = vld [vmem:[#allocation8 + $0xc8] sm:$0xff]
    %v1000 = vld [vmem:[#allocation8 + $0xd0] sm:$0xff]
    %v1001 = vld [vmem:[#allocation8 + $0xd8] sm:$0xff]
    %v1002 = vld [vmem:[#allocation8 + $0xe0] sm:$0xff]
    %v1003 = vld [vmem:[#allocation8 + $0xe8] sm:$0xff]
    %v1004 = vld [vmem:[#allocation8 + $0xf0] sm:$0xff]
    %v1005 = vld [vmem:[#allocation8 + $0xf8] sm:$0xff]
    %v1006 = vld [vmem:[#allocation8 + $0x100] sm:$0xff]
    %v1007 = vld [vmem:[#allocation8 + $0x108] sm:$0xff]
    %v1008 = vld [vmem:[#allocation8 + $0x110] sm:$0xff]
    %v1009 = vld [vmem:[#allocation8 + $0x118] sm:$0xff]
    %v1011 = vsel %vm954, %v973, 0
    %1013 = vmatpush.msra.mxu0 %v1004
    %1014 = vmatpush.msra.mxu0 %v1002
    %1015 = vmatpush.msra.mxu0 %v1000
    %1016 = vmatpush.msra.mxu0 %v998
    %1017 = vmatpush.msra.mxu0 %v996
    %1018 = vmatpush.msra.mxu0 %v994
    %1019 = vmatpush.msra.mxu0 %v992
    %1020 = vmatpush.msra.mxu0 %v990
    %1021 = vmatpush.msra.mxu0 %v988
    %1022 = vmatpush.msra.mxu0 %v986
    %1023 = vmatpush.msra.mxu0 %v984
    %1024 = vmatpush.msra.mxu0 %v982
    %1025 = vmatpush.msra.mxu0 %v980
    %1026 = vmatpush.msra.mxu0 %v978
    %1027 = vmatpush.msra.mxu0 %v976
    %1028 = vmatpush.msra.mxu0 %v974
    %1029 = vmatmul.f32.gmra.mxu0 %v953
    %v1030 = vpop.f32.mrf.mxu0
    %v1031 = vadd.f32 0.0, %v1030
    %1032 = vdwg.mxu0
    %1033 = vmatpush.msra.mxu0 0.0
    %1034 = vmatpush.msra.mxu0 0.0
    %1035 = vmatpush.msra.mxu0 0.0
    %1036 = vmatpush.msra.mxu0 0.0
    %1037 = vmatpush.msra.mxu0 0.0
    %1038 = vmatpush.msra.mxu0 0.0
    %1039 = vmatpush.msra.mxu0 0.0
    %1040 = vmatpush.msra.mxu0 0.0
    %1041 = vmatpush.msra.mxu0 0.0
    %1042 = vmatpush.msra.mxu0 0.0
    %1043 = vmatpush.msra.mxu0 0.0
    %1044 = vmatpush.msra.mxu0 0.0
    %1045 = vmatpush.msra.mxu0 0.0
    %1046 = vmatpush.msra.mxu0 0.0
    %1047 = vmatpush.msra.mxu0 %v1008
    %1048 = vmatpush.msra.mxu0 %v1006
    %1049 = vmatmul.f32.gmra.mxu0 %v1011
    %v1050 = vpop.f32.mrf.mxu0
    %v1051 = vadd.f32 %v1031, %v1050
    %1052 = vdwg.mxu0
    %1053 = vmatpush.msra.mxu0 %v1005
    %1054 = vmatpush.msra.mxu0 %v1003
    %1055 = vmatpush.msra.mxu0 %v1001
    %1056 = vmatpush.msra.mxu0 %v999
    %1057 = vmatpush.msra.mxu0 %v997
    %1058 = vmatpush.msra.mxu0 %v995
    %1059 = vmatpush.msra.mxu0 %v993
    %1060 = vmatpush.msra.mxu0 %v991
    %1061 = vmatpush.msra.mxu0 %v989
    %1062 = vmatpush.msra.mxu0 %v987
    %1063 = vmatpush.msra.mxu0 %v985
    %1064 = vmatpush.msra.mxu0 %v983
    %1065 = vmatpush.msra.mxu0 %v981
    %1066 = vmatpush.msra.mxu0 %v979
    %1067 = vmatpush.msra.mxu0 %v977
    %1068 = vmatpush.msra.mxu0 %v975
    %1069 = vmatmul.f32.gmra.mxu0 %v953
    %v1070 = vpop.f32.mrf.mxu0
    %v1071 = vadd.f32 0.0, %v1070
    %1072 = vdwg.mxu0
    %1073 = vmatpush.msra.mxu0 0.0
    %1074 = vmatpush.msra.mxu0 0.0
    %1075 = vmatpush.msra.mxu0 0.0
    %1076 = vmatpush.msra.mxu0 0.0
    %1077 = vmatpush.msra.mxu0 0.0
    %1078 = vmatpush.msra.mxu0 0.0
    %1079 = vmatpush.msra.mxu0 0.0
    %1080 = vmatpush.msra.mxu0 0.0
    %1081 = vmatpush.msra.mxu0 0.0
    %1082 = vmatpush.msra.mxu0 0.0
    %1083 = vmatpush.msra.mxu0 0.0
    %1084 = vmatpush.msra.mxu0 0.0
    %1085 = vmatpush.msra.mxu0 0.0
    %1086 = vmatpush.msra.mxu0 0.0
    %1087 = vmatpush.msra.mxu0 %v1009
    %1088 = vmatpush.msra.mxu0 %v1007
    %1089 = vmatmul.f32.gmra.mxu0 %v1011
    %v1090 = vpop.f32.mrf.mxu0
    %v1091 = vadd.f32 %v1071, %v1090
    %1092 = vdwg.mxu0
    %v1093 = vmul.f32 %v1051, 0.00086805556
    %v1094 = vmul.f32 %v1091, 0.00086805556
    %v1095 = vmul.f32 %v928, %v833
    %v1096 = vmul.f32 %v929, %v889
    %v1097 = vmul.f32 %v930, %v835
    %v1098 = vmul.f32 %v931, %v891
    %v1099 = vmul.f32 %v932, %v838
    %v1100 = vmul.f32 %v933, %v894
    %v1101 = vmul.f32 %v934, %v840
    %v1102 = vmul.f32 %v935, %v896
    %v1103 = vmul.f32 %v936, %v843
    %v1104 = vmul.f32 %v937, %v899
    %v1105 = vmul.f32 %v938, %v845
    %v1106 = vmul.f32 %v939, %v901
    %v1107 = vmul.f32 %v940, %v848
    %v1108 = vmul.f32 %v941, %v904
    %v1109 = vadd.f32 %v1095, %v1097
    %v1110 = vadd.f32 %v1109, %v1099
    %v1111 = vadd.f32 %v1110, %v1101
    %v1112 = vadd.f32 %v1111, %v1103
    %v1113 = vadd.f32 %v1112, %v1105
    %v1114 = vadd.f32 %v1113, %v1107
    %v1115 = vrot.slane %v1114, 4
    %v1116 = vadd.f32 %v1114, %v1115
    %v1117 = vrot.slane %v1116, 2
    %v1118 = vadd.f32 %v1116, %v1117
    %v1119 = vrot.slane %v1118, 1
    %v1120 = vadd.f32 %v1118, %v1119
    %v1121 = vsel %vm954, %v1096, 0.0
    %v1122 = vsel %vm954, %v1098, 0.0
    %v1123 = vadd.f32 %v1121, %v1122
    %v1124 = vsel %vm954, %v1100, 0.0
    %v1125 = vadd.f32 %v1123, %v1124
    %v1126 = vsel %vm954, %v1102, 0.0
    %v1127 = vadd.f32 %v1125, %v1126
    %v1128 = vsel %vm954, %v1104, 0.0
    %v1129 = vadd.f32 %v1127, %v1128
    %v1130 = vsel %vm954, %v1106, 0.0
    %v1131 = vadd.f32 %v1129, %v1130
    %v1132 = vsel %vm954, %v1108, 0.0
    %v1133 = vadd.f32 %v1131, %v1132
    %v1134 = vrot.slane %v1133, 4
    %v1135 = vadd.f32 %v1133, %v1134
    %v1136 = vrot.slane %v1135, 2
    %v1137 = vadd.f32 %v1135, %v1136
    %v1138 = vrot.slane %v1137, 1
    %v1139 = vadd.f32 %v1137, %v1138
    %v1141 = vsel %vm954, %v1139, 0
    %1143 = vmatpush.msra.mxu0 %v1004
    %1144 = vmatpush.msra.mxu0 %v1002
    %1145 = vmatpush.msra.mxu0 %v1000
    %1146 = vmatpush.msra.mxu0 %v998
    %1147 = vmatpush.msra.mxu0 %v996
    %1148 = vmatpush.msra.mxu0 %v994
    %1149 = vmatpush.msra.mxu0 %v992
    %1150 = vmatpush.msra.mxu0 %v990
    %1151 = vmatpush.msra.mxu0 %v988
    %1152 = vmatpush.msra.mxu0 %v986
    %1153 = vmatpush.msra.mxu0 %v984
    %1154 = vmatpush.msra.mxu0 %v982
    %1155 = vmatpush.msra.mxu0 %v980
    %1156 = vmatpush.msra.mxu0 %v978
    %1157 = vmatpush.msra.mxu0 %v976
    %1158 = vmatpush.msra.mxu0 %v974
    %1159 = vmatmul.f32.gmra.mxu0 %v1120
    %v1160 = vpop.f32.mrf.mxu0
    %v1161 = vadd.f32 0.0, %v1160
    %1162 = vdwg.mxu0
    %1163 = vmatpush.msra.mxu0 0.0
    %1164 = vmatpush.msra.mxu0 0.0
    %1165 = vmatpush.msra.mxu0 0.0
    %1166 = vmatpush.msra.mxu0 0.0
    %1167 = vmatpush.msra.mxu0 0.0
    %1168 = vmatpush.msra.mxu0 0.0
    %1169 = vmatpush.msra.mxu0 0.0
    %1170 = vmatpush.msra.mxu0 0.0
    %1171 = vmatpush.msra.mxu0 0.0
    %1172 = vmatpush.msra.mxu0 0.0
    %1173 = vmatpush.msra.mxu0 0.0
    %1174 = vmatpush.msra.mxu0 0.0
    %1175 = vmatpush.msra.mxu0 0.0
    %1176 = vmatpush.msra.mxu0 0.0
    %1177 = vmatpush.msra.mxu0 %v1008
    %1178 = vmatpush.msra.mxu0 %v1006
    %1179 = vmatmul.f32.gmra.mxu0 %v1141
    %v1180 = vpop.f32.mrf.mxu0
    %v1181 = vadd.f32 %v1161, %v1180
    %1182 = vdwg.mxu0
    %1183 = vmatpush.msra.mxu0 %v1005
    %1184 = vmatpush.msra.mxu0 %v1003
    %1185 = vmatpush.msra.mxu0 %v1001
    %1186 = vmatpush.msra.mxu0 %v999
    %1187 = vmatpush.msra.mxu0 %v997
    %1188 = vmatpush.msra.mxu0 %v995
    %1189 = vmatpush.msra.mxu0 %v993
    %1190 = vmatpush.msra.mxu0 %v991
    %1191 = vmatpush.msra.mxu0 %v989
    %1192 = vmatpush.msra.mxu0 %v987
    %1193 = vmatpush.msra.mxu0 %v985
    %1194 = vmatpush.msra.mxu0 %v983
    %1195 = vmatpush.msra.mxu0 %v981
    %1196 = vmatpush.msra.mxu0 %v979
    %1197 = vmatpush.msra.mxu0 %v977
    %1198 = vmatpush.msra.mxu0 %v975
    %1199 = vmatmul.f32.gmra.mxu0 %v1120
    %v1200 = vpop.f32.mrf.mxu0
    %v1201 = vadd.f32 0.0, %v1200
    %1202 = vdwg.mxu0
    %1203 = vmatpush.msra.mxu0 0.0
    %1204 = vmatpush.msra.mxu0 0.0
    %1205 = vmatpush.msra.mxu0 0.0
    %1206 = vmatpush.msra.mxu0 0.0
    %1207 = vmatpush.msra.mxu0 0.0
    %1208 = vmatpush.msra.mxu0 0.0
    %1209 = vmatpush.msra.mxu0 0.0
    %1210 = vmatpush.msra.mxu0 0.0
    %1211 = vmatpush.msra.mxu0 0.0
    %1212 = vmatpush.msra.mxu0 0.0
    %1213 = vmatpush.msra.mxu0 0.0
    %1214 = vmatpush.msra.mxu0 0.0
    %1215 = vmatpush.msra.mxu0 0.0
    %1216 = vmatpush.msra.mxu0 0.0
    %1217 = vmatpush.msra.mxu0 %v1009
    %1218 = vmatpush.msra.mxu0 %v1007
    %1219 = vmatmul.f32.gmra.mxu0 %v1141
    %v1220 = vpop.f32.mrf.mxu0
    %v1221 = vadd.f32 %v1201, %v1220
    %1222 = vdwg.mxu0
    %v1223 = vmul.f32 %v1181, 0.00086805556
    %v1224 = vmul.f32 %v1221, 0.00086805556
    %v1225 = vmul.f32 %v1093, %v1093
    %v1226 = vmul.f32 %v1094, %v1094
    %v1227 = vsub.f32 %v1223, %v1225
    %v1228 = vsub.f32 %v1224, %v1226
    %v1229 = vmax.f32 %v1227, 0.0
    %v1230 = vmax.f32 %v1228, 0.0
    %v1231 = vadd.f32 %v1229, 1e-05
    %v1232 = vadd.f32 %v1230, 1e-05
    %v1233 = vld [vmem:[%s3] sm:$0x3]
    %v1234 = vrsqrt.pop %v1231
    %v1235 = vmul.f32 %v1234, %v1231
    %v1236 = vmul.f32 %v1235, %v1234
    %v1237 = vmul.f32 0.5, %v1236
    %v1238 = vsub.f32 1.5, %v1237
    %v1239 = vmul.f32 %v1234, %v1238
    %vm1240 = vweird.f32 %v1231
    %vm1241 = vweird.f32 %v1234
    %vm1242 = vmor %vm1240, %vm1241
    %v1243 = vsel %vm1242, %v1234, %v1239
    %v1244 = vrsqrt.pop %v1232
    %v1245 = vmul.f32 %v1244, %v1232
    %v1246 = vmul.f32 %v1245, %v1244
    %v1247 = vmul.f32 0.5, %v1246
    %v1248 = vsub.f32 1.5, %v1247
    %v1249 = vmul.f32 %v1244, %v1248
    %vm1250 = vweird.f32 %v1232
    %vm1251 = vweird.f32 %v1244
    %vm1252 = vmor %vm1250, %vm1251
    %v1253 = vsel %vm1252, %v1244, %v1249
    %v1256 = vrot.slane %v1253, 7
    %vm1257 = vcmask 1040384
    %v1258 = vsel %vm1257, %v1243, %v1256
    %v1260 = vmul.f32 %v1233, %v1258
    %v1261 = vld [vmem:[%s4] sm:$0x3]
    %v1263 = vperm.slane %v1260, 0
    %v1264 = vperm.slane %v1260, 1
    %v1267 = vmul.f32 %v1093, %v1263
    %v1268 = vmul.f32 %v1094, %v1264
    %v1271 = vrot.slane %v1268, 7
    %v1272 = vsel %vm1257, %v1267, %v1271
    %v1274 = vsub.f32 %v1261, %v1272
    %v1275 = vmul.f32 %v833, %v1263
    %v1276 = vmul.f32 %v889, %v1264
    %v1277 = vmul.f32 %v835, %v1263
    %v1278 = vmul.f32 %v891, %v1264
    %v1279 = vmul.f32 %v838, %v1263
    %v1280 = vmul.f32 %v894, %v1264
    %v1281 = vmul.f32 %v840, %v1263
    %v1282 = vmul.f32 %v896, %v1264
    %v1283 = vmul.f32 %v843, %v1263
    %v1284 = vmul.f32 %v899, %v1264
    %v1285 = vmul.f32 %v845, %v1263
    %v1286 = vmul.f32 %v901, %v1264
    %v1287 = vmul.f32 %v848, %v1263
    %v1288 = vmul.f32 %v904, %v1264
    %v1290 = vperm.slane %v1274, 0
    %v1291 = vperm.slane %v1274, 1
    %v1294 = vadd.f32 %v1275, %v1290
    %v1295 = vadd.f32 %v1276, %v1291
    %v1296 = vadd.f32 %v1277, %v1290
    %v1297 = vadd.f32 %v1278, %v1291
    %v1298 = vadd.f32 %v1279, %v1290
    %v1299 = vadd.f32 %v1280, %v1291
    %v1300 = vadd.f32 %v1281, %v1290
    %v1301 = vadd.f32 %v1282, %v1291
    %v1302 = vadd.f32 %v1283, %v1290
    %v1303 = vadd.f32 %v1284, %v1291
    %v1304 = vadd.f32 %v1285, %v1290
    %v1305 = vadd.f32 %v1286, %v1291
    %v1306 = vadd.f32 %v1287, %v1290
    %v1307 = vadd.f32 %v1288, %v1291
    %v1308 = vmax.f32 %v1294, 0.0
    %v1309 = vmax.f32 %v1295, 0.0
    %v1310 = vmax.f32 %v1296, 0.0
    %v1311 = vmax.f32 %v1297, 0.0
    %v1312 = vmax.f32 %v1298, 0.0
    %v1313 = vmax.f32 %v1299, 0.0
    %v1314 = vmax.f32 %v1300, 0.0
    %v1315 = vmax.f32 %v1301, 0.0
    %v1316 = vmax.f32 %v1302, 0.0
    %v1317 = vmax.f32 %v1303, 0.0
    %v1318 = vmax.f32 %v1304, 0.0
    %v1319 = vmax.f32 %v1305, 0.0
    %v1320 = vmax.f32 %v1306, 0.0
    %v1321 = vmax.f32 %v1307, 0.0
    %v1322 = vpack.c.bf16 %v1310, %v1308
    %v1323 = vpack.c.bf16 %v1311, %v1309
    %v1324 = vpack.c.bf16 %v1314, %v1312
    %v1325 = vpack.c.bf16 %v1315, %v1313
    %v1326 = vpack.c.bf16 %v1318, %v1316
    %v1327 = vpack.c.bf16 %v1319, %v1317
    %v1328 = vpack.c.bf16 %v1320, %v1320
    %v1329 = vpack.c.bf16 %v1321, %v1321
    %v1330 = vld [vmem:[#allocation9] sm:$0xff]
    %v1331 = vld [vmem:[#allocation9 + $0x8] sm:$0xff]
    %v1332 = vld [vmem:[#allocation9 + $0x10] sm:$0xff]
    %v1333 = vld [vmem:[#allocation9 + $0x18] sm:$0xff]
    %v1334 = vld [vmem:[#allocation9 + $0x20] sm:$0xff]
    %v1335 = vld [vmem:[#allocation9 + $0x28] sm:$0xff]
    %v1336 = vld [vmem:[#allocation9 + $0x30] sm:$0xff]
    %v1337 = vld [vmem:[#allocation9 + $0x38] sm:$0xff]
    %v1338 = vld [vmem:[#allocation9 + $0x40] sm:$0xff]
    %v1339 = vld [vmem:[#allocation9 + $0x48] sm:$0xff]
    %v1340 = vld [vmem:[#allocation9 + $0x50] sm:$0xff]
    %v1341 = vld [vmem:[#allocation9 + $0x58] sm:$0xff]
    %v1342 = vld [vmem:[#allocation9 + $0x60] sm:$0xff]
    %v1343 = vld [vmem:[#allocation9 + $0x68] sm:$0xff]
    %v1344 = vld [vmem:[#allocation9 + $0x70] sm:$0xff]
    %v1345 = vld [vmem:[#allocation9 + $0x78] sm:$0xff]
    %v1346 = vld [vmem:[#allocation9 + $0x80] sm:$0xff]
    %v1347 = vld [vmem:[#allocation9 + $0x88] sm:$0xff]
    %v1366 = vunpack.c.l.b16 %v1330
    %v1367 = vunpack.c.h.b16 %v1330
    %v1368 = vunpack.c.l.b16 %v1331
    %v1369 = vunpack.c.h.b16 %v1331
    %v1370 = vunpack.c.l.b16 %v1332
    %v1371 = vunpack.c.h.b16 %v1332
    %v1372 = vunpack.c.l.b16 %v1333
    %v1373 = vunpack.c.h.b16 %v1333
    %v1374 = vunpack.c.l.b16 %v1334
    %v1375 = vunpack.c.h.b16 %v1334
    %v1376 = vunpack.c.l.b16 %v1335
    %v1377 = vunpack.c.h.b16 %v1335
    %v1378 = vunpack.c.l.b16 %v1336
    %v1379 = vunpack.c.h.b16 %v1336
    %v1380 = vunpack.c.l.b16 %v1337
    %v1381 = vunpack.c.h.b16 %v1337
    %v1382 = vunpack.c.l.b16 %v1338
    %v1383 = vunpack.c.h.b16 %v1338
    %v1384 = vunpack.c.l.b16 %v1339
    %v1385 = vunpack.c.h.b16 %v1339
    %v1386 = vunpack.c.l.b16 %v1340
    %v1387 = vunpack.c.h.b16 %v1340
    %v1388 = vunpack.c.l.b16 %v1341
    %v1389 = vunpack.c.h.b16 %v1341
    %v1390 = vunpack.c.l.b16 %v1342
    %v1391 = vunpack.c.h.b16 %v1342
    %v1392 = vunpack.c.l.b16 %v1343
    %v1393 = vunpack.c.h.b16 %v1343
    %v1394 = vunpack.c.l.b16 %v1344
    %v1395 = vunpack.c.h.b16 %v1344
    %v1396 = vunpack.c.l.b16 %v1345
    %v1397 = vunpack.c.h.b16 %v1345
    %v1398 = vunpack.c.l.b16 %v1346
    %v1399 = vunpack.c.h.b16 %v1346
    %v1400 = vunpack.c.l.b16 %v1347
    %v1401 = vunpack.c.h.b16 %v1347
    %v1402 = vpack.c.b16 %v1368, %v1366
    %v1403 = vpack.c.b16 %v1369, %v1367
    %v1404 = vpack.c.b16 %v1372, %v1370
    %v1405 = vpack.c.b16 %v1373, %v1371
    %v1406 = vpack.c.b16 %v1376, %v1374
    %v1407 = vpack.c.b16 %v1377, %v1375
    %v1408 = vpack.c.b16 %v1380, %v1378
    %v1409 = vpack.c.b16 %v1381, %v1379
    %v1410 = vpack.c.b16 %v1384, %v1382
    %v1411 = vpack.c.b16 %v1385, %v1383
    %v1412 = vpack.c.b16 %v1388, %v1386
    %v1413 = vpack.c.b16 %v1389, %v1387
    %v1414 = vpack.c.b16 %v1392, %v1390
    %v1415 = vpack.c.b16 %v1393, %v1391
    %v1416 = vpack.c.b16 %v1396, %v1394
    %v1417 = vpack.c.b16 %v1397, %v1395
    %v1418 = vpack.c.b16 %v1400, %v1398
    %v1419 = vpack.c.b16 %v1401, %v1399
    %v1439 = vsel %vm954, %v1323, 0
    %v1442 = vsel %vm954, %v1325, 0
    %v1445 = vsel %vm954, %v1327, 0
    %v1448 = vsel %vm954, %v1329, 0
    %1450 = vmatpush.bf16.msra.mxu0 %v1416
    %1451 = vmatpush.bf16.msra.mxu0 %v1414
    %1452 = vmatpush.bf16.msra.mxu0 %v1412
    %1453 = vmatpush.bf16.msra.mxu0 %v1410
    %1454 = vmatpush.bf16.msra.mxu0 %v1408
    %1455 = vmatpush.bf16.msra.mxu0 %v1406
    %1456 = vmatpush.bf16.msra.mxu0 %v1404
    %1457 = vmatpush.bf16.msra.mxu0 %v1402
    %1458 = vmatmul.bf16.gmra.mxu0 %v1322
    %v1459 = vpop.f32.mrf.mxu0
    %v1460 = vadd.f32 0.0, %v1459
    %v1461 = vpop.f32.mrf.mxu0
    %v1462 = vadd.f32 0.0, %v1461
    %1463 = vmatmul.bf16.gmra.mxu0 %v1324
    %v1464 = vpop.f32.mrf.mxu0
    %v1465 = vadd.f32 0.0, %v1464
    %v1466 = vpop.f32.mrf.mxu0
    %v1467 = vadd.f32 0.0, %v1466
    %1468 = vmatmul.bf16.gmra.mxu0 %v1326
    %v1469 = vpop.f32.mrf.mxu0
    %v1470 = vadd.f32 0.0, %v1469
    %v1471 = vpop.f32.mrf.mxu0
    %v1472 = vadd.f32 0.0, %v1471
    %1473 = vmatmul.bf16.gmra.mxu0 %v1328
    %v1474 = vpop.f32.mrf.mxu0
    %v1475 = vadd.f32 0.0, %v1474
    %v1476 = vpop.f32.mrf.mxu0
    %1477 = vdwg.mxu0
    %1478 = vmatpush.bf16.msra.mxu0 0
    %1479 = vmatpush.bf16.msra.mxu0 0
    %1480 = vmatpush.bf16.msra.mxu0 0
    %1481 = vmatpush.bf16.msra.mxu0 0
    %1482 = vmatpush.bf16.msra.mxu0 0
    %1483 = vmatpush.bf16.msra.mxu0 0
    %1484 = vmatpush.bf16.msra.mxu0 0
    %1485 = vmatpush.bf16.msra.mxu0 %v1418
    %1486 = vmatmul.bf16.gmra.mxu0 %v1439
    %v1487 = vpop.f32.mrf.mxu0
    %v1488 = vadd.f32 %v1460, %v1487
    %v1489 = vpop.f32.mrf.mxu0
    %v1490 = vadd.f32 %v1462, %v1489
    %1491 = vmatmul.bf16.gmra.mxu0 %v1442
    %v1492 = vpop.f32.mrf.mxu0
    %v1493 = vadd.f32 %v1465, %v1492
    %v1494 = vpop.f32.mrf.mxu0
    %v1495 = vadd.f32 %v1467, %v1494
    %1496 = vmatmul.bf16.gmra.mxu0 %v1445
    %v1497 = vpop.f32.mrf.mxu0
    %v1498 = vadd.f32 %v1470, %v1497
    %v1499 = vpop.f32.mrf.mxu0
    %v1500 = vadd.f32 %v1472, %v1499
    %1501 = vmatmul.bf16.gmra.mxu0 %v1448
    %v1502 = vpop.f32.mrf.mxu0
    %v1503 = vadd.f32 %v1475, %v1502
    %v1504 = vpop.f32.mrf.mxu0
    %1505 = vdwg.mxu0
    %1506 = vmatpush.bf16.msra.mxu0 %v1417
    %1507 = vmatpush.bf16.msra.mxu0 %v1415
    %1508 = vmatpush.bf16.msra.mxu0 %v1413
    %1509 = vmatpush.bf16.msra.mxu0 %v1411
    %1510 = vmatpush.bf16.msra.mxu0 %v1409
    %1511 = vmatpush.bf16.msra.mxu0 %v1407
    %1512 = vmatpush.bf16.msra.mxu0 %v1405
    %1513 = vmatpush.bf16.msra.mxu0 %v1403
    %1514 = vmatmul.bf16.gmra.mxu0 %v1322
    %v1515 = vpop.f32.mrf.mxu0
    %v1516 = vadd.f32 0.0, %v1515
    %v1517 = vpop.f32.mrf.mxu0
    %v1518 = vadd.f32 0.0, %v1517
    %1519 = vmatmul.bf16.gmra.mxu0 %v1324
    %v1520 = vpop.f32.mrf.mxu0
    %v1521 = vadd.f32 0.0, %v1520
    %v1522 = vpop.f32.mrf.mxu0
    %v1523 = vadd.f32 0.0, %v1522
    %1524 = vmatmul.bf16.gmra.mxu0 %v1326
    %v1525 = vpop.f32.mrf.mxu0
    %v1526 = vadd.f32 0.0, %v1525
    %v1527 = vpop.f32.mrf.mxu0
    %v1528 = vadd.f32 0.0, %v1527
    %1529 = vmatmul.bf16.gmra.mxu0 %v1328
    %v1530 = vpop.f32.mrf.mxu0
    %v1531 = vadd.f32 0.0, %v1530
    %v1532 = vpop.f32.mrf.mxu0
    %1533 = vdwg.mxu0
    %1534 = vmatpush.bf16.msra.mxu0 0
    %1535 = vmatpush.bf16.msra.mxu0 0
    %1536 = vmatpush.bf16.msra.mxu0 0
    %1537 = vmatpush.bf16.msra.mxu0 0
    %1538 = vmatpush.bf16.msra.mxu0 0
    %1539 = vmatpush.bf16.msra.mxu0 0
    %1540 = vmatpush.bf16.msra.mxu0 0
    %1541 = vmatpush.bf16.msra.mxu0 %v1419
    %1542 = vmatmul.bf16.gmra.mxu0 %v1439
    %v1543 = vpop.f32.mrf.mxu0
    %v1544 = vadd.f32 %v1516, %v1543
    %v1545 = vpop.f32.mrf.mxu0
    %v1546 = vadd.f32 %v1518, %v1545
    %1547 = vmatmul.bf16.gmra.mxu0 %v1442
    %v1548 = vpop.f32.mrf.mxu0
    %v1549 = vadd.f32 %v1521, %v1548
    %v1550 = vpop.f32.mrf.mxu0
    %v1551 = vadd.f32 %v1523, %v1550
    %1552 = vmatmul.bf16.gmra.mxu0 %v1445
    %v1553 = vpop.f32.mrf.mxu0
    %v1554 = vadd.f32 %v1526, %v1553
    %v1555 = vpop.f32.mrf.mxu0
    %v1556 = vadd.f32 %v1528, %v1555
    %1557 = vmatmul.bf16.gmra.mxu0 %v1448
    %v1558 = vpop.f32.mrf.mxu0
    %v1559 = vadd.f32 %v1531, %v1558
    %v1560 = vpop.f32.mrf.mxu0
    %1561 = vdwg.mxu0
    %1576 = vrot.lane.b32.xlu0 %v1488, 56
    %v1577 = vpop.permute.xlu0 %1576
    %1578 = vrot.lane.b32.xlu0 %v1544, 56
    %v1579 = vpop.permute.xlu0 %1578
    %1580 = vrot.lane.b32.xlu0 %v1490, 56
    %v1581 = vpop.permute.xlu0 %1580
    %1582 = vrot.lane.b32.xlu0 %v1546, 56
    %v1583 = vpop.permute.xlu0 %1582
    %1584 = vrot.lane.b32.xlu0 %v1493, 56
    %v1585 = vpop.permute.xlu0 %1584
    %1586 = vrot.lane.b32.xlu0 %v1549, 56
    %v1587 = vpop.permute.xlu0 %1586
    %1588 = vrot.lane.b32.xlu0 %v1495, 56
    %v1589 = vpop.permute.xlu0 %1588
    %1590 = vrot.lane.b32.xlu0 %v1551, 56
    %v1591 = vpop.permute.xlu0 %1590
    %1592 = vrot.lane.b32.xlu0 %v1498, 56
    %v1593 = vpop.permute.xlu0 %1592
    %1594 = vrot.lane.b32.xlu0 %v1554, 56
    %v1595 = vpop.permute.xlu0 %1594
    %1596 = vrot.lane.b32.xlu0 %v1500, 56
    %v1597 = vpop.permute.xlu0 %1596
    %1598 = vrot.lane.b32.xlu0 %v1556, 56
    %v1599 = vpop.permute.xlu0 %1598
    %1600 = vrot.lane.b32.xlu0 %v1503, 56
    %v1601 = vpop.permute.xlu0 %1600
    %1602 = vrot.lane.b32.xlu0 %v1559, 56
    %v1603 = vpop.permute.xlu0 %1602
    %v1604 = vsel %vm637, %v1577, %v1579
    %v1605 = vsel %vm637, %v1581, %v1583
    %v1606 = vsel %vm637, %v1585, %v1587
    %v1607 = vsel %vm637, %v1589, %v1591
    %v1608 = vsel %vm637, %v1593, %v1595
    %v1609 = vsel %vm637, %v1597, %v1599
    %v1610 = vsel %vm637, %v1601, %v1603
    %v1618 = vmax.f32 %v1488, %v1604
    %v1619 = vmax.f32 %v1490, %v1605
    %v1620 = vmax.f32 %v1493, %v1606
    %v1621 = vmax.f32 %v1495, %v1607
    %v1622 = vmax.f32 %v1498, %v1608
    %v1623 = vmax.f32 %v1500, %v1609
    %v1624 = vmax.f32 %v1503, %v1610
    %v1625 = vrot.slane %v1618, 1
    %v1626 = vrot.slane %v1619, 1
    %v1627 = vrot.slane %v1620, 1
    %v1628 = vrot.slane %v1621, 1
    %v1629 = vrot.slane %v1622, 1
    %v1630 = vrot.slane %v1623, 1
    %v1631 = vrot.slane %v1624, 1
    %v1632 = vsel %vm464, %v1630, %v1631
    %v1633 = vsel %vm464, %v1629, %v1630
    %v1634 = vsel %vm464, %v1628, %v1629
    %v1635 = vsel %vm464, %v1627, %v1628
    %v1636 = vsel %vm464, %v1626, %v1627
    %v1637 = vsel %vm464, %v1625, %v1626
    %v1638 = vsel %vm464, %v1631, %v1625
    %v1639 = vmax.f32 %v1618, %v1637
    %v1640 = vmax.f32 %v1619, %v1636
    %v1641 = vmax.f32 %v1620, %v1635
    %v1642 = vmax.f32 %v1621, %v1634
    %v1643 = vmax.f32 %v1622, %v1633
    %v1644 = vmax.f32 %v1623, %v1632
    %v1645 = vmax.f32 %v1624, %v1638
    %v1646 = vrot.slane %v1639, 2
    %v1647 = vrot.slane %v1640, 2
    %v1648 = vrot.slane %v1641, 2
    %v1649 = vrot.slane %v1642, 2
    %v1650 = vrot.slane %v1643, 2
    %v1651 = vrot.slane %v1644, 2
    %v1652 = vrot.slane %v1645, 2
    %v1653 = vsel %vm479, %v1651, %v1652
    %v1654 = vsel %vm479, %v1650, %v1651
    %v1655 = vsel %vm479, %v1649, %v1650
    %v1656 = vsel %vm479, %v1648, %v1649
    %v1657 = vsel %vm479, %v1647, %v1648
    %v1658 = vsel %vm479, %v1646, %v1647
    %v1659 = vsel %vm479, %v1652, %v1646
    %v1660 = vrot.slane %v1639, 4
    %v1661 = vrot.slane %v1640, 4
    %v1662 = vrot.slane %v1641, 4
    %v1663 = vrot.slane %v1642, 4
    %v1664 = vrot.slane %v1643, 4
    %v1665 = vrot.slane %v1644, 4
    %v1666 = vrot.slane %v1645, 4
    %v1667 = vsel %vm509, %v1665, %v1666
    %v1668 = vsel %vm509, %v1664, %v1665
    %v1669 = vsel %vm509, %v1663, %v1664
    %v1670 = vsel %vm509, %v1662, %v1663
    %v1671 = vsel %vm509, %v1661, %v1662
    %v1672 = vsel %vm509, %v1660, %v1661
    %v1673 = vsel %vm509, %v1666, %v1660
    %v1674 = vrot.slane %v1639, 6
    %v1675 = vrot.slane %v1640, 6
    %v1676 = vrot.slane %v1641, 6
    %v1677 = vrot.slane %v1642, 6
    %v1678 = vrot.slane %v1643, 6
    %v1679 = vrot.slane %v1644, 6
    %v1680 = vrot.slane %v1645, 6
    %vm1681 = vcmp.lt.s32.totalorder %v191, 2
    %v1682 = vsel %vm1681, %v1679, %v1680
    %v1683 = vsel %vm1681, %v1678, %v1679
    %v1684 = vsel %vm1681, %v1677, %v1678
    %v1685 = vsel %vm1681, %v1676, %v1677
    %v1686 = vsel %vm1681, %v1675, %v1676
    %v1687 = vsel %vm1681, %v1674, %v1675
    %v1688 = vsel %vm1681, %v1680, %v1674
    %1696 = vrot.lane.b32.xlu0 %v1658, 72
    %v1697 = vpop.permute.xlu0 %1696
    %1698 = vrot.lane.b32.xlu0 %v1657, 72
    %v1699 = vpop.permute.xlu0 %1698
    %1700 = vrot.lane.b32.xlu0 %v1656, 72
    %v1701 = vpop.permute.xlu0 %1700
    %1702 = vrot.lane.b32.xlu0 %v1655, 72
    %v1703 = vpop.permute.xlu0 %1702
    %1704 = vrot.lane.b32.xlu0 %v1654, 72
    %v1705 = vpop.permute.xlu0 %1704
    %1706 = vrot.lane.b32.xlu0 %v1653, 72
    %v1707 = vpop.permute.xlu0 %1706
    %1708 = vrot.lane.b32.xlu0 %v1659, 72
    %v1709 = vpop.permute.xlu0 %1708
    %1724 = vrot.lane.b32.xlu0 %v1672, 16
    %v1725 = vpop.permute.xlu0 %1724
    %1726 = vrot.lane.b32.xlu0 %v1671, 16
    %v1727 = vpop.permute.xlu0 %1726
    %1728 = vrot.lane.b32.xlu0 %v1670, 16
    %v1729 = vpop.permute.xlu0 %1728
    %1730 = vrot.lane.b32.xlu0 %v1669, 16
    %v1731 = vpop.permute.xlu0 %1730
    %1732 = vrot.lane.b32.xlu0 %v1668, 16
    %v1733 = vpop.permute.xlu0 %1732
    %1734 = vrot.lane.b32.xlu0 %v1667, 16
    %v1735 = vpop.permute.xlu0 %1734
    %1736 = vrot.lane.b32.xlu0 %v1673, 16
    %v1737 = vpop.permute.xlu0 %1736
    %1752 = vrot.lane.b32.xlu0 %v1687, 88
    %v1753 = vpop.permute.xlu0 %1752
    %1754 = vrot.lane.b32.xlu0 %v1686, 88
    %v1755 = vpop.permute.xlu0 %1754
    %1756 = vrot.lane.b32.xlu0 %v1685, 88
    %v1757 = vpop.permute.xlu0 %1756
    %1758 = vrot.lane.b32.xlu0 %v1684, 88
    %v1759 = vpop.permute.xlu0 %1758
    %1760 = vrot.lane.b32.xlu0 %v1683, 88
    %v1761 = vpop.permute.xlu0 %1760
    %1762 = vrot.lane.b32.xlu0 %v1682, 88
    %v1763 = vpop.permute.xlu0 %1762
    %1764 = vrot.lane.b32.xlu0 %v1688, 88
    %v1765 = vpop.permute.xlu0 %1764
    %1780 = vrot.lane.b32.xlu0 %v1640, 32
    %v1781 = vpop.permute.xlu0 %1780
    %1782 = vrot.lane.b32.xlu0 %v1641, 32
    %v1783 = vpop.permute.xlu0 %1782
    %1784 = vrot.lane.b32.xlu0 %v1642, 32
    %v1785 = vpop.permute.xlu0 %1784
    %1786 = vrot.lane.b32.xlu0 %v1643, 32
    %v1787 = vpop.permute.xlu0 %1786
    %1788 = vrot.lane.b32.xlu0 %v1644, 32
    %v1789 = vpop.permute.xlu0 %1788
    %1790 = vrot.lane.b32.xlu0 %v1645, 32
    %v1791 = vpop.permute.xlu0 %1790
    %1792 = vrot.lane.b32.xlu0 %v1639, 32
    %v1793 = vpop.permute.xlu0 %1792
    %vm1801 = vcmask 588800
    %v1802 = vsel %vm1801, %v1639, %v1697
    %v1803 = vsel %vm1801, %v1640, %v1699
    %v1804 = vsel %vm1801, %v1641, %v1701
    %v1805 = vsel %vm1801, %v1642, %v1703
    %v1806 = vsel %vm1801, %v1643, %v1705
    %v1807 = vsel %vm1801, %v1644, %v1707
    %v1808 = vsel %vm1801, %v1645, %v1709
    %v1809 = vsel %vm954, %v1697, %v1725
    %v1810 = vsel %vm954, %v1699, %v1727
    %v1811 = vsel %vm954, %v1701, %v1729
    %v1812 = vsel %vm954, %v1703, %v1731
    %v1813 = vsel %vm954, %v1705, %v1733
    %v1814 = vsel %vm954, %v1707, %v1735
    %v1815 = vsel %vm954, %v1709, %v1737
    %vm1816 = vcmask 719872
    %v1817 = vsel %vm1816, %v1809, %v1753
    %v1818 = vsel %vm1816, %v1810, %v1755
    %v1819 = vsel %vm1816, %v1811, %v1757
    %v1820 = vsel %vm1816, %v1812, %v1759
    %v1821 = vsel %vm1816, %v1813, %v1761
    %v1822 = vsel %vm1816, %v1814, %v1763
    %v1823 = vsel %vm1816, %v1815, %v1765
    %vm1824 = vcmask 261120
    %v1825 = vsel %vm1824, %v1753, %v1781
    %v1826 = vsel %vm1824, %v1755, %v1783
    %v1827 = vsel %vm1824, %v1757, %v1785
    %v1828 = vsel %vm1824, %v1759, %v1787
    %v1829 = vsel %vm1824, %v1761, %v1789
    %v1830 = vsel %vm1824, %v1763, %v1791
    %v1831 = vsel %vm1824, %v1765, %v1793
    %v1832 = vpack.c.bf16 %v1803, %v1802
    %v1833 = vpack.c.bf16 %v1818, %v1817
    %v1834 = vpack.c.bf16 %v1826, %v1825
    %v1835 = vpack.c.bf16 %v1805, %v1804
    %v1836 = vpack.c.bf16 %v1820, %v1819
    %v1837 = vpack.c.bf16 %v1828, %v1827
    %v1838 = vpack.c.bf16 %v1807, %v1806
    %v1839 = vpack.c.bf16 %v1822, %v1821
    %v1840 = vpack.c.bf16 %v1830, %v1829
    %v1841 = vpack.c.bf16 %v1808, %v1808
    %v1842 = vpack.c.bf16 %v1823, %v1823
    %v1843 = vpack.c.bf16 %v1831, %v1831
    %v1844 = vld [vmem:[%s6] sm:$0xf]
    %v1845 = vld [vmem:[%s6 + $0x4] sm:$0xf]
    %v1846 = vld [vmem:[%s6 + $0x8] sm:$0xf]
    %v1847 = vld [vmem:[%s6 + $0xc] sm:$0xf]
    %v1848 = vld [vmem:[%s6 + $0x10] sm:$0xf]
    %v1849 = vld [vmem:[%s6 + $0x14] sm:$0xf]
    %v1850 = vld [vmem:[%s6 + $0x18] sm:$0xf]
    %v1851 = vld [vmem:[%s6 + $0x1c] sm:$0xf]
    %v1852 = vld [vmem:[%s6 + $0x20] sm:$0xf]
    %v1853 = vld [vmem:[%s6 + $0x24] sm:$0xf]
    %v1854 = vld [vmem:[%s6 + $0x28] sm:$0xf]
    %v1855 = vld [vmem:[%s6 + $0x2c] sm:$0xf]
    %v1856 = vld [vmem:[%s6 + $0x30] sm:$0xf]
    %v1857 = vld [vmem:[%s6 + $0x34] sm:$0xf]
    %v1858 = vld [vmem:[%s6 + $0x38] sm:$0xf]
    %v1859 = vld [vmem:[%s6 + $0x3c] sm:$0xf]
    %v1860 = vld [vmem:[%s6 + $0x40] sm:$0xf]
    %v1861 = vld [vmem:[%s6 + $0x44] sm:$0xf]
    %v1862 = vld [vmem:[%s6 + $0x48] sm:$0xf]
    %v1863 = vld [vmem:[%s6 + $0x4c] sm:$0xf]
    %v1864 = vld [vmem:[%s6 + $0x50] sm:$0xf]
    %v1865 = vld [vmem:[%s6 + $0x54] sm:$0xf]
    %v1866 = vld [vmem:[%s6 + $0x58] sm:$0xf]
    %v1867 = vld [vmem:[%s6 + $0x5c] sm:$0xf]
    %v1868 = vld [vmem:[%s6 + $0x60] sm:$0xf]
    %v1869 = vld [vmem:[%s6 + $0x64] sm:$0xf]
    %v1870 = vld [vmem:[%s6 + $0x68] sm:$0xf]
    %v1871 = vld [vmem:[%s6 + $0x6c] sm:$0xf]
    %v1872 = vld [vmem:[%s6 + $0x70] sm:$0xf]
    %v1873 = vld [vmem:[%s6 + $0x74] sm:$0xf]
    %v1874 = vld [vmem:[%s6 + $0x78] sm:$0xf]
    %v1875 = vld [vmem:[%s6 + $0x7c] sm:$0xf]
    %v1876 = vld [vmem:[%s6 + $0x80] sm:$0xf]
    %v1877 = vld [vmem:[%s6 + $0x84] sm:$0xf]
    %v1878 = vld [vmem:[%s6 + $0x88] sm:$0xf]
    %v1879 = vld [vmem:[%s6 + $0x8c] sm:$0xf]
    %v1880 = vld [vmem:[%s6 + $0x90] sm:$0xf]
    %v1881 = vld [vmem:[%s6 + $0x94] sm:$0xf]
    %v1882 = vld [vmem:[%s6 + $0x98] sm:$0xf]
    %v1883 = vld [vmem:[%s6 + $0x9c] sm:$0xf]
    %v1884 = vld [vmem:[%s6 + $0xa0] sm:$0xf]
    %v1885 = vld [vmem:[%s6 + $0xa4] sm:$0xf]
    %v1886 = vld [vmem:[%s6 + $0xa8] sm:$0xf]
    %v1887 = vld [vmem:[%s6 + $0xac] sm:$0xf]
    %v1888 = vld [vmem:[%s6 + $0xb0] sm:$0xf]
    %v1934 = vunpack.c.l.b16 %v1844
    %v1935 = vunpack.c.l.b16 %v1845
    %v1936 = vunpack.c.l.b16 %v1846
    %v1937 = vunpack.c.l.b16 %v1847
    %v1938 = vunpack.c.l.b16 %v1848
    %v1939 = vunpack.c.l.b16 %v1849
    %v1940 = vunpack.c.l.b16 %v1850
    %v1941 = vunpack.c.l.b16 %v1851
    %v1942 = vunpack.c.l.b16 %v1852
    %v1943 = vunpack.c.l.b16 %v1853
    %v1944 = vunpack.c.l.b16 %v1854
    %v1945 = vunpack.c.l.b16 %v1855
    %v1946 = vunpack.c.l.b16 %v1856
    %v1947 = vunpack.c.l.b16 %v1857
    %v1948 = vunpack.c.l.b16 %v1858
    %v1949 = vunpack.c.l.b16 %v1859
    %v1950 = vunpack.c.l.b16 %v1860
    %v1951 = vunpack.c.l.b16 %v1861
    %v1952 = vunpack.c.l.b16 %v1862
    %v1953 = vunpack.c.l.b16 %v1863
    %v1954 = vunpack.c.l.b16 %v1864
    %v1955 = vunpack.c.l.b16 %v1865
    %v1956 = vunpack.c.l.b16 %v1866
    %v1957 = vunpack.c.l.b16 %v1867
    %v1958 = vunpack.c.l.b16 %v1868
    %v1959 = vunpack.c.l.b16 %v1869
    %v1960 = vunpack.c.l.b16 %v1870
    %v1961 = vunpack.c.l.b16 %v1871
    %v1962 = vunpack.c.l.b16 %v1872
    %v1963 = vunpack.c.l.b16 %v1873
    %v1964 = vunpack.c.l.b16 %v1874
    %v1965 = vunpack.c.l.b16 %v1875
    %v1966 = vunpack.c.l.b16 %v1876
    %v1967 = vunpack.c.l.b16 %v1877
    %v1968 = vunpack.c.l.b16 %v1878
    %v1969 = vunpack.c.l.b16 %v1879
    %v1970 = vunpack.c.l.b16 %v1880
    %v1971 = vunpack.c.l.b16 %v1881
    %v1972 = vunpack.c.l.b16 %v1882
    %v1973 = vunpack.c.l.b16 %v1883
    %v1974 = vunpack.c.l.b16 %v1884
    %v1975 = vunpack.c.l.b16 %v1885
    %v1976 = vunpack.c.l.b16 %v1886
    %v1977 = vunpack.c.l.b16 %v1887
    %v1978 = vunpack.c.l.b16 %v1888
    %v1979 = vpack.c.b16 %v1935, %v1934
    %v1980 = vpack.c.b16 %v1937, %v1936
    %v1981 = vpack.c.b16 %v1939, %v1938
    %v1982 = vpack.c.b16 %v1941, %v1940
    %v1983 = vpack.c.b16 %v1943, %v1942
    %v1984 = vpack.c.b16 %v1945, %v1944
    %v1985 = vpack.c.b16 %v1947, %v1946
    %v1986 = vpack.c.b16 %v1949, %v1948
    %v1987 = vpack.c.b16 %v1951, %v1950
    %v1988 = vpack.c.b16 %v1953, %v1952
    %v1989 = vpack.c.b16 %v1955, %v1954
    %v1990 = vpack.c.b16 %v1957, %v1956
    %v1991 = vpack.c.b16 %v1959, %v1958
    %v1992 = vpack.c.b16 %v1961, %v1960
    %v1993 = vpack.c.b16 %v1963, %v1962
    %v1994 = vpack.c.b16 %v1965, %v1964
    %v1995 = vpack.c.b16 %v1967, %v1966
    %v1996 = vpack.c.b16 %v1969, %v1968
    %v1997 = vpack.c.b16 %v1971, %v1970
    %v1998 = vpack.c.b16 %v1973, %v1972
    %v1999 = vpack.c.b16 %v1975, %v1974
    %v2000 = vpack.c.b16 %v1977, %v1976
    %v2001 = vpack.c.b16 %v1978, %v1978
    %vm2024 = vcmask 850944
    %v2026 = vsel %vm2024, %v1834, 0
    %v2029 = vsel %vm2024, %v1837, 0
    %v2032 = vsel %vm2024, %v1840, 0
    %v2035 = vsel %vm2024, %v1843, 0
    %vm2037 = vcmask 1043456
    %v2039 = vsel %vm2037, %v2001, 0
    %2041 = vmatpush.bf16.msra.mxu0 %v1986
    %2042 = vmatpush.bf16.msra.mxu0 %v1985
    %2043 = vmatpush.bf16.msra.mxu0 %v1984
    %2044 = vmatpush.bf16.msra.mxu0 %v1983
    %2045 = vmatpush.bf16.msra.mxu0 %v1982
    %2046 = vmatpush.bf16.msra.mxu0 %v1981
    %2047 = vmatpush.bf16.msra.mxu0 %v1980
    %2048 = vmatpush.bf16.msra.mxu0 %v1979
    %2049 = vmatmul.bf16.gmra.mxu0 %v1832
    %v2050 = vpop.f32.mrf.mxu0
    %v2051 = vadd.f32 0.0, %v2050
    %v2052 = vpop.f32.mrf.mxu0
    %v2053 = vadd.f32 0.0, %v2052
    %2054 = vmatmul.bf16.gmra.mxu0 %v1835
    %v2055 = vpop.f32.mrf.mxu0
    %v2056 = vadd.f32 0.0, %v2055
    %v2057 = vpop.f32.mrf.mxu0
    %v2058 = vadd.f32 0.0, %v2057
    %2059 = vmatmul.bf16.gmra.mxu0 %v1838
    %v2060 = vpop.f32.mrf.mxu0
    %v2061 = vadd.f32 0.0, %v2060
    %v2062 = vpop.f32.mrf.mxu0
    %v2063 = vadd.f32 0.0, %v2062
    %2064 = vmatmul.bf16.gmra.mxu0 %v1841
    %v2065 = vpop.f32.mrf.mxu0
    %v2066 = vadd.f32 0.0, %v2065
    %v2067 = vpop.f32.mrf.mxu0
    %2068 = vdwg.mxu0
    %2069 = vmatpush.bf16.msra.mxu0 %v1994
    %2070 = vmatpush.bf16.msra.mxu0 %v1993
    %2071 = vmatpush.bf16.msra.mxu0 %v1992
    %2072 = vmatpush.bf16.msra.mxu0 %v1991
    %2073 = vmatpush.bf16.msra.mxu0 %v1990
    %2074 = vmatpush.bf16.msra.mxu0 %v1989
    %2075 = vmatpush.bf16.msra.mxu0 %v1988
    %2076 = vmatpush.bf16.msra.mxu0 %v1987
    %2077 = vmatmul.bf16.gmra.mxu0 %v1833
    %v2078 = vpop.f32.mrf.mxu0
    %v2079 = vadd.f32 %v2051, %v2078
    %v2080 = vpop.f32.mrf.mxu0
    %v2081 = vadd.f32 %v2053, %v2080
    %2082 = vmatmul.bf16.gmra.mxu0 %v1836
    %v2083 = vpop.f32.mrf.mxu0
    %v2084 = vadd.f32 %v2056, %v2083
    %v2085 = vpop.f32.mrf.mxu0
    %v2086 = vadd.f32 %v2058, %v2085
    %2087 = vmatmul.bf16.gmra.mxu0 %v1839
    %v2088 = vpop.f32.mrf.mxu0
    %v2089 = vadd.f32 %v2061, %v2088
    %v2090 = vpop.f32.mrf.mxu0
    %v2091 = vadd.f32 %v2063, %v2090
    %2092 = vmatmul.bf16.gmra.mxu0 %v1842
    %v2093 = vpop.f32.mrf.mxu0
    %v2094 = vadd.f32 %v2066, %v2093
    %v2095 = vpop.f32.mrf.mxu0
    %2096 = vdwg.mxu0
    %2097 = vmatpush.bf16.msra.mxu0 0
    %2098 = vmatpush.bf16.msra.mxu0 %v2039
    %2099 = vmatpush.bf16.msra.mxu0 %v2000
    %2100 = vmatpush.bf16.msra.mxu0 %v1999
    %2101 = vmatpush.bf16.msra.mxu0 %v1998
    %2102 = vmatpush.bf16.msra.mxu0 %v1997
    %2103 = vmatpush.bf16.msra.mxu0 %v1996
    %2104 = vmatpush.bf16.msra.mxu0 %v1995
    %2105 = vmatmul.bf16.gmra.mxu0 %v2026
    %v2106 = vpop.f32.mrf.mxu0
    %v2107 = vadd.f32 %v2079, %v2106
    %v2108 = vpop.f32.mrf.mxu0
    %v2109 = vadd.f32 %v2081, %v2108
    %2110 = vmatmul.bf16.gmra.mxu0 %v2029
    %v2111 = vpop.f32.mrf.mxu0
    %v2112 = vadd.f32 %v2084, %v2111
    %v2113 = vpop.f32.mrf.mxu0
    %v2114 = vadd.f32 %v2086, %v2113
    %2115 = vmatmul.bf16.gmra.mxu0 %v2032
    %v2116 = vpop.f32.mrf.mxu0
    %v2117 = vadd.f32 %v2089, %v2116
    %v2118 = vpop.f32.mrf.mxu0
    %v2119 = vadd.f32 %v2091, %v2118
    %2120 = vmatmul.bf16.gmra.mxu0 %v2035
    %v2121 = vpop.f32.mrf.mxu0
    %v2122 = vadd.f32 %v2094, %v2121
    %v2123 = vpop.f32.mrf.mxu0
    %2124 = vdwg.mxu0
    %vm2125 = vcmp.lt.s32.totalorder %v450, 16
    %vm2126 = vcmp.lt.s32.totalorder %v451, 16
    %vm2127 = vcmp.lt.s32.totalorder %v452, 16
    %vm2128 = vcmp.lt.s32.totalorder %v453, 16
    %vm2129 = vcmp.lt.s32.totalorder %v454, 16
    %vm2130 = vcmp.lt.s32.totalorder %v455, 16
    %vm2131 = vcmp.lt.s32.totalorder %v456, 16
    %vm2132 = vcmp.lt.s32.totalorder %v450, 0
    %v2133 = vsub.s32 0, %v450
    %v2134 = vsel %vm2132, %v2133, %v450
    %v2135 = vshrl.u32 %v2134, 1
    %v2136 = vand.u32 %v2134, 1
    %v2137 = vsub.s32 0, %v2136
    %v2138 = vsel %vm2132, %v2137, %v2136
    %vm2139 = vcmp.lt.s32.totalorder %v451, 0
    %v2140 = vsub.s32 0, %v451
    %v2141 = vsel %vm2139, %v2140, %v451
    %v2142 = vshrl.u32 %v2141, 1
    %v2143 = vand.u32 %v2141, 1
    %v2144 = vsub.s32 0, %v2143
    %v2145 = vsel %vm2139, %v2144, %v2143
    %vm2146 = vcmp.lt.s32.totalorder %v452, 0
    %v2147 = vsub.s32 0, %v452
    %v2148 = vsel %vm2146, %v2147, %v452
    %v2149 = vshrl.u32 %v2148, 1
    %v2150 = vand.u32 %v2148, 1
    %v2151 = vsub.s32 0, %v2150
    %v2152 = vsel %vm2146, %v2151, %v2150
    %vm2153 = vcmp.lt.s32.totalorder %v453, 0
    %v2154 = vsub.s32 0, %v453
    %v2155 = vsel %vm2153, %v2154, %v453
    %v2156 = vshrl.u32 %v2155, 1
    %v2157 = vand.u32 %v2155, 1
    %v2158 = vsub.s32 0, %v2157
    %v2159 = vsel %vm2153, %v2158, %v2157
    %vm2160 = vcmp.lt.s32.totalorder %v454, 0
    %v2161 = vsub.s32 0, %v454
    %v2162 = vsel %vm2160, %v2161, %v454
    %v2163 = vshrl.u32 %v2162, 1
    %v2164 = vand.u32 %v2162, 1
    %v2165 = vsub.s32 0, %v2164
    %v2166 = vsel %vm2160, %v2165, %v2164
    %vm2167 = vcmp.lt.s32.totalorder %v455, 0
    %v2168 = vsub.s32 0, %v455
    %v2169 = vsel %vm2167, %v2168, %v455
    %v2170 = vshrl.u32 %v2169, 1
    %v2171 = vand.u32 %v2169, 1
    %v2172 = vsub.s32 0, %v2171
    %v2173 = vsel %vm2167, %v2172, %v2171
    %vm2174 = vcmp.lt.s32.totalorder %v456, 0
    %v2175 = vsub.s32 0, %v456
    %v2176 = vsel %vm2174, %v2175, %v456
    %v2177 = vshrl.u32 %v2176, 1
    %v2178 = vand.u32 %v2176, 1
    %v2179 = vsub.s32 0, %v2178
    %v2180 = vsel %vm2174, %v2179, %v2178
    %vm2181 = vcmp.ne.s32.totalorder %v2138, 0
    %vm2182 = vcmp.ne.s32.totalorder %v2145, 0
    %vm2183 = vcmp.ne.s32.totalorder %v2152, 0
    %vm2184 = vcmp.ne.s32.totalorder %v2159, 0
    %vm2185 = vcmp.ne.s32.totalorder %v2166, 0
    %vm2186 = vcmp.ne.s32.totalorder %v2173, 0
    %vm2187 = vcmp.ne.s32.totalorder %v2180, 0
    %vm2188 = vcmp.lt.s32.totalorder %v2138, 0
    %vm2189 = vcmp.lt.s32.totalorder %v2145, 0
    %vm2190 = vcmp.lt.s32.totalorder %v2152, 0
    %vm2191 = vcmp.lt.s32.totalorder %v2159, 0
    %vm2192 = vcmp.lt.s32.totalorder %v2166, 0
    %vm2193 = vcmp.lt.s32.totalorder %v2173, 0
    %vm2194 = vcmp.lt.s32.totalorder %v2180, 0
    %vm2195 = vmand %vm2188, %vm2181
    %vm2196 = vmand %vm2189, %vm2182
    %vm2197 = vmand %vm2190, %vm2183
    %vm2198 = vmand %vm2191, %vm2184
    %vm2199 = vmand %vm2192, %vm2185
    %vm2200 = vmand %vm2193, %vm2186
    %vm2201 = vmand %vm2194, %vm2187
    %v2202 = vadd.s32 %v2138, 2
    %v2203 = vadd.s32 %v2145, 2
    %v2204 = vadd.s32 %v2152, 2
    %v2205 = vadd.s32 %v2159, 2
    %v2206 = vadd.s32 %v2166, 2
    %v2207 = vadd.s32 %v2173, 2
    %v2208 = vadd.s32 %v2180, 2
    %v2209 = vsel %vm2195, %v2202, %v2138
    %v2210 = vsel %vm2196, %v2203, %v2145
    %v2211 = vsel %vm2197, %v2204, %v2152
    %v2212 = vsel %vm2198, %v2205, %v2159
    %v2213 = vsel %vm2199, %v2206, %v2166
    %v2214 = vsel %vm2200, %v2207, %v2173
    %v2215 = vsel %vm2201, %v2208, %v2180
    %vm2216 = vcmp.eq.s32.totalorder %v2209, 0
    %vm2217 = vcmp.eq.s32.totalorder %v2210, 0
    %vm2218 = vcmp.eq.s32.totalorder %v2211, 0
    %vm2219 = vcmp.eq.s32.totalorder %v2212, 0
    %vm2220 = vcmp.eq.s32.totalorder %v2213, 0
    %vm2221 = vcmp.eq.s32.totalorder %v2214, 0
    %vm2222 = vcmp.eq.s32.totalorder %v2215, 0
    %vm2223 = vmand %vm2125, %vm2216
    %vm2224 = vmand %vm2126, %vm2217
    %vm2225 = vmand %vm2127, %vm2218
    %vm2226 = vmand %vm2128, %vm2219
    %vm2227 = vmand %vm2129, %vm2220
    %vm2228 = vmand %vm2130, %vm2221
    %vm2229 = vmand %vm2131, %vm2222
    %v2230 = vsel %vm2223, 1, 0
    %v2231 = vsel %vm2224, 1, 0
    %v2232 = vsel %vm2225, 1, 0
    %v2233 = vsel %vm2226, 1, 0
    %v2234 = vsel %vm2227, 1, 0
    %v2235 = vsel %vm2228, 1, 0
    %v2236 = vsel %vm2229, 1, 0
    %v2237 = vcvt.s32.f32 %v2230
    %v2238 = vcvt.s32.f32 %v2231
    %v2239 = vcvt.s32.f32 %v2232
    %v2240 = vcvt.s32.f32 %v2233
    %v2241 = vcvt.s32.f32 %v2234
    %v2242 = vcvt.s32.f32 %v2235
    %v2243 = vcvt.s32.f32 %v2236
    %v2244 = vmul.f32 %v2107, %v2237
    %v2245 = vmul.f32 %v2109, %v2238
    %v2246 = vmul.f32 %v2112, %v2239
    %v2247 = vmul.f32 %v2114, %v2240
    %v2248 = vmul.f32 %v2117, %v2241
    %v2249 = vmul.f32 %v2119, %v2242
    %v2250 = vmul.f32 %v2122, %v2243
    %v2251 = vadd.f32 %v2244, %v2245
    %v2252 = vadd.f32 %v2251, %v2246
    %v2253 = vadd.f32 %v2252, %v2247
    %v2254 = vadd.f32 %v2253, %v2248
    %v2255 = vadd.f32 %v2254, %v2249
    %v2256 = vadd.f32 %v2255, %v2250
    %v2257 = vrot.slane %v2256, 4
    %v2258 = vadd.f32 %v2256, %v2257
    %v2259 = vrot.slane %v2258, 2
    %v2260 = vadd.f32 %v2258, %v2259
    %v2261 = vrot.slane %v2260, 1
    %v2262 = vadd.f32 %v2260, %v2261
    %v2263 = vld [vmem:[#allocation11] sm:$0xff]
    %v2264 = vld [vmem:[#allocation11 + $0x8] sm:$0xff]
    %v2265 = vld [vmem:[#allocation11 + $0x10] sm:$0xff]
    %v2266 = vld [vmem:[#allocation11 + $0x18] sm:$0xff]
    %v2267 = vld [vmem:[#allocation11 + $0x20] sm:$0xff]
    %v2268 = vld [vmem:[#allocation11 + $0x28] sm:$0xff]
    %v2269 = vld [vmem:[#allocation11 + $0x30] sm:$0xff]
    %v2270 = vld [vmem:[#allocation11 + $0x38] sm:$0xff]
    %v2271 = vld [vmem:[#allocation11 + $0x40] sm:$0xff]
    %v2272 = vld [vmem:[#allocation11 + $0x48] sm:$0xff]
    %v2273 = vld [vmem:[#allocation11 + $0x50] sm:$0xff]
    %v2274 = vld [vmem:[#allocation11 + $0x58] sm:$0xff]
    %v2275 = vld [vmem:[#allocation11 + $0x60] sm:$0xff]
    %v2276 = vld [vmem:[#allocation11 + $0x68] sm:$0xff]
    %v2277 = vld [vmem:[#allocation11 + $0x70] sm:$0xff]
    %v2278 = vld [vmem:[#allocation11 + $0x78] sm:$0xff]
    %2279 = vmatpush.msra.mxu0 %v2278
    %2280 = vmatpush.msra.mxu0 %v2277
    %2281 = vmatpush.msra.mxu0 %v2276
    %2282 = vmatpush.msra.mxu0 %v2275
    %2283 = vmatpush.msra.mxu0 %v2274
    %2284 = vmatpush.msra.mxu0 %v2273
    %2285 = vmatpush.msra.mxu0 %v2272
    %2286 = vmatpush.msra.mxu0 %v2271
    %2287 = vmatpush.msra.mxu0 %v2270
    %2288 = vmatpush.msra.mxu0 %v2269
    %2289 = vmatpush.msra.mxu0 %v2268
    %2290 = vmatpush.msra.mxu0 %v2267
    %2291 = vmatpush.msra.mxu0 %v2266
    %2292 = vmatpush.msra.mxu0 %v2265
    %2293 = vmatpush.msra.mxu0 %v2264
    %2294 = vmatpush.msra.mxu0 %v2263
    %2295 = vmatmul.f32.gmra.mxu0 %v2262
    %v2296 = vpop.f32.mrf.mxu0
    %v2297 = vadd.f32 0.0, %v2296
    %2298 = vdwg.mxu0
    %v2299 = vmul.f32 %v2297, 0.0078125
    %v2300 = vmul.f32 %v2244, %v2107
    %v2301 = vmul.f32 %v2245, %v2109
    %v2302 = vmul.f32 %v2246, %v2112
    %v2303 = vmul.f32 %v2247, %v2114
    %v2304 = vmul.f32 %v2248, %v2117
    %v2305 = vmul.f32 %v2249, %v2119
    %v2306 = vmul.f32 %v2250, %v2122
    %v2307 = vadd.f32 %v2300, %v2301
    %v2308 = vadd.f32 %v2307, %v2302
    %v2309 = vadd.f32 %v2308, %v2303
    %v2310 = vadd.f32 %v2309, %v2304
    %v2311 = vadd.f32 %v2310, %v2305
    %v2312 = vadd.f32 %v2311, %v2306
    %v2313 = vrot.slane %v2312, 4
    %v2314 = vadd.f32 %v2312, %v2313
    %v2315 = vrot.slane %v2314, 2
    %v2316 = vadd.f32 %v2314, %v2315
    %v2317 = vrot.slane %v2316, 1
    %v2318 = vadd.f32 %v2316, %v2317
    %2319 = vmatpush.msra.mxu0 %v2278
    %2320 = vmatpush.msra.mxu0 %v2277
    %2321 = vmatpush.msra.mxu0 %v2276
    %2322 = vmatpush.msra.mxu0 %v2275
    %2323 = vmatpush.msra.mxu0 %v2274
    %2324 = vmatpush.msra.mxu0 %v2273
    %2325 = vmatpush.msra.mxu0 %v2272
    %2326 = vmatpush.msra.mxu0 %v2271
    %2327 = vmatpush.msra.mxu0 %v2270
    %2328 = vmatpush.msra.mxu0 %v2269
    %2329 = vmatpush.msra.mxu0 %v2268
    %2330 = vmatpush.msra.mxu0 %v2267
    %2331 = vmatpush.msra.mxu0 %v2266
    %2332 = vmatpush.msra.mxu0 %v2265
    %2333 = vmatpush.msra.mxu0 %v2264
    %2334 = vmatpush.msra.mxu0 %v2263
    %2335 = vmatmul.f32.gmra.mxu0 %v2318
    %v2336 = vpop.f32.mrf.mxu0
    %v2337 = vadd.f32 0.0, %v2336
    %2338 = vdwg.mxu0
    %v2339 = vmul.f32 %v2337, 0.0078125
    %v2340 = vmul.f32 %v2299, %v2299
    %v2341 = vsub.f32 %v2339, %v2340
    %v2342 = vmax.f32 %v2341, 0.0
    %v2343 = vadd.f32 %v2342, 1e-05
    %v2344 = vld [vmem:[%s8] sm:$0x1]
    %v2345 = vrsqrt.pop %v2343
    %v2346 = vmul.f32 %v2345, %v2343
    %v2347 = vmul.f32 %v2346, %v2345
    %v2348 = vmul.f32 0.5, %v2347
    %v2349 = vsub.f32 1.5, %v2348
    %v2350 = vmul.f32 %v2345, %v2349
    %vm2351 = vweird.f32 %v2343
    %vm2352 = vweird.f32 %v2345
    %vm2353 = vmor %vm2351, %vm2352
    %v2354 = vsel %vm2353, %v2345, %v2350
    %v2355 = vmul.f32 %v2344, %v2354
    %v2356 = vld [vmem:[%s9] sm:$0x1]
    %v2357 = vmul.f32 %v2299, %v2355
    %v2358 = vsub.f32 %v2356, %v2357
    %v2360 = vperm.slane %v2355, 0
    %v2362 = vmul.f32 %v2107, %v2360
    %v2363 = vmul.f32 %v2109, %v2360
    %v2364 = vmul.f32 %v2112, %v2360
    %v2365 = vmul.f32 %v2114, %v2360
    %v2366 = vmul.f32 %v2117, %v2360
    %v2367 = vmul.f32 %v2119, %v2360
    %v2368 = vmul.f32 %v2122, %v2360
    %v2370 = vperm.slane %v2358, 0
    %v2372 = vadd.f32 %v2362, %v2370
    %v2373 = vadd.f32 %v2363, %v2370
    %v2374 = vadd.f32 %v2364, %v2370
    %v2375 = vadd.f32 %v2365, %v2370
    %v2376 = vadd.f32 %v2366, %v2370
    %v2377 = vadd.f32 %v2367, %v2370
    %v2378 = vadd.f32 %v2368, %v2370
    %v2379 = vmax.f32 %v2372, 0.0
    %v2380 = vmax.f32 %v2373, 0.0
    %v2381 = vmax.f32 %v2374, 0.0
    %v2382 = vmax.f32 %v2375, 0.0
    %v2383 = vmax.f32 %v2376, 0.0
    %v2384 = vmax.f32 %v2377, 0.0
    %v2385 = vmax.f32 %v2378, 0.0
    %v2386 = vpack.c.bf16 %v2380, %v2379
    %v2387 = vpack.c.bf16 %v2382, %v2381
    %v2388 = vpack.c.bf16 %v2384, %v2383
    %v2389 = vpack.c.bf16 %v2385, %v2385
    %v2390 = vld [vmem:[%s10] sm:$0xff]
    %v2391 = vld [vmem:[%s10 + $0x8] sm:$0xff]
    %v2392 = vld [vmem:[%s10 + $0x10] sm:$0xff]
    %v2393 = vld [vmem:[%s10 + $0x18] sm:$0xff]
    %v2394 = vld [vmem:[%s10 + $0x20] sm:$0xff]
    %v2395 = vld [vmem:[%s10 + $0x28] sm:$0xff]
    %v2396 = vld [vmem:[%s10 + $0x30] sm:$0xff]
    %v2397 = vld [vmem:[%s10 + $0x38] sm:$0xff]
    %v2398 = vld [vmem:[%s10 + $0x40] sm:$0xff]
    %v2399 = vld [vmem:[%s10 + $0x48] sm:$0xff]
    %v2400 = vld [vmem:[%s10 + $0x50] sm:$0xff]
    %v2401 = vld [vmem:[%s10 + $0x58] sm:$0xff]
    %v2402 = vld [vmem:[%s10 + $0x60] sm:$0xff]
    %v2403 = vld [vmem:[%s10 + $0x68] sm:$0xff]
    %v2404 = vld [vmem:[%s10 + $0x70] sm:$0xff]
    %v2405 = vld [vmem:[%s10 + $0x78] sm:$0xff]
    %v2422 = vunpack.c.l.b16 %v2390
    %v2423 = vunpack.c.h.b16 %v2390
    %v2424 = vunpack.c.l.b16 %v2391
    %v2425 = vunpack.c.h.b16 %v2391
    %v2426 = vunpack.c.l.b16 %v2392
    %v2427 = vunpack.c.h.b16 %v2392
    %v2428 = vunpack.c.l.b16 %v2393
    %v2429 = vunpack.c.h.b16 %v2393
    %v2430 = vunpack.c.l.b16 %v2394
    %v2431 = vunpack.c.h.b16 %v2394
    %v2432 = vunpack.c.l.b16 %v2395
    %v2433 = vunpack.c.h.b16 %v2395
    %v2434 = vunpack.c.l.b16 %v2396
    %v2435 = vunpack.c.h.b16 %v2396
    %v2436 = vunpack.c.l.b16 %v2397
    %v2437 = vunpack.c.h.b16 %v2397
    %v2438 = vunpack.c.l.b16 %v2398
    %v2439 = vunpack.c.h.b16 %v2398
    %v2440 = vunpack.c.l.b16 %v2399
    %v2441 = vunpack.c.h.b16 %v2399
    %v2442 = vunpack.c.l.b16 %v2400
    %v2443 = vunpack.c.h.b16 %v2400
    %v2444 = vunpack.c.l.b16 %v2401
    %v2445 = vunpack.c.h.b16 %v2401
    %v2446 = vunpack.c.l.b16 %v2402
    %v2447 = vunpack.c.h.b16 %v2402
    %v2448 = vunpack.c.l.b16 %v2403
    %v2449 = vunpack.c.h.b16 %v2403
    %v2450 = vunpack.c.l.b16 %v2404
    %v2451 = vunpack.c.h.b16 %v2404
    %v2452 = vunpack.c.l.b16 %v2405
    %v2453 = vunpack.c.h.b16 %v2405
    %v2454 = vpack.c.b16 %v2424, %v2422
    %v2455 = vpack.c.b16 %v2425, %v2423
    %v2456 = vpack.c.b16 %v2428, %v2426
    %v2457 = vpack.c.b16 %v2429, %v2427
    %v2458 = vpack.c.b16 %v2432, %v2430
    %v2459 = vpack.c.b16 %v2433, %v2431
    %v2460 = vpack.c.b16 %v2436, %v2434
    %v2461 = vpack.c.b16 %v2437, %v2435
    %v2462 = vpack.c.b16 %v2440, %v2438
    %v2463 = vpack.c.b16 %v2441, %v2439
    %v2464 = vpack.c.b16 %v2444, %v2442
    %v2465 = vpack.c.b16 %v2445, %v2443
    %v2466 = vpack.c.b16 %v2448, %v2446
    %v2467 = vpack.c.b16 %v2449, %v2447
    %v2468 = vpack.c.b16 %v2452, %v2450
    %v2469 = vpack.c.b16 %v2453, %v2451
    %2486 = vmatpush.bf16.msra.mxu0 %v2468
    %2487 = vmatpush.bf16.msra.mxu0 %v2466
    %2488 = vmatpush.bf16.msra.mxu0 %v2464
    %2489 = vmatpush.bf16.msra.mxu0 %v2462
    %2490 = vmatpush.bf16.msra.mxu0 %v2460
    %2491 = vmatpush.bf16.msra.mxu0 %v2458
    %2492 = vmatpush.bf16.msra.mxu0 %v2456
    %2493 = vmatpush.bf16.msra.mxu0 %v2454
    %2494 = vmatmul.bf16.gmra.mxu0 %v2386
    %v2495 = vpop.f32.mrf.mxu0
    %v2496 = vadd.f32 0.0, %v2495
    %v2497 = vpop.f32.mrf.mxu0
    %v2498 = vadd.f32 0.0, %v2497
    %2499 = vmatmul.bf16.gmra.mxu0 %v2387
    %v2500 = vpop.f32.mrf.mxu0
    %v2501 = vadd.f32 0.0, %v2500
    %v2502 = vpop.f32.mrf.mxu0
    %v2503 = vadd.f32 0.0, %v2502
    %2504 = vmatmul.bf16.gmra.mxu0 %v2388
    %v2505 = vpop.f32.mrf.mxu0
    %v2506 = vadd.f32 0.0, %v2505
    %v2507 = vpop.f32.mrf.mxu0
    %v2508 = vadd.f32 0.0, %v2507
    %2509 = vmatmul.bf16.gmra.mxu0 %v2389
    %v2510 = vpop.f32.mrf.mxu0
    %v2511 = vadd.f32 0.0, %v2510
    %v2512 = vpop.f32.mrf.mxu0
    %2513 = vdwg.mxu0
    %2514 = vmatpush.bf16.msra.mxu0 %v2469
    %2515 = vmatpush.bf16.msra.mxu0 %v2467
    %2516 = vmatpush.bf16.msra.mxu0 %v2465
    %2517 = vmatpush.bf16.msra.mxu0 %v2463
    %2518 = vmatpush.bf16.msra.mxu0 %v2461
    %2519 = vmatpush.bf16.msra.mxu0 %v2459
    %2520 = vmatpush.bf16.msra.mxu0 %v2457
    %2521 = vmatpush.bf16.msra.mxu0 %v2455
    %2522 = vmatmul.bf16.gmra.mxu0 %v2386
    %v2523 = vpop.f32.mrf.mxu0
    %v2524 = vadd.f32 0.0, %v2523
    %v2525 = vpop.f32.mrf.mxu0
    %v2526 = vadd.f32 0.0, %v2525
    %2527 = vmatmul.bf16.gmra.mxu0 %v2387
    %v2528 = vpop.f32.mrf.mxu0
    %v2529 = vadd.f32 0.0, %v2528
    %v2530 = vpop.f32.mrf.mxu0
    %v2531 = vadd.f32 0.0, %v2530
    %2532 = vmatmul.bf16.gmra.mxu0 %v2388
    %v2533 = vpop.f32.mrf.mxu0
    %v2534 = vadd.f32 0.0, %v2533
    %v2535 = vpop.f32.mrf.mxu0
    %v2536 = vadd.f32 0.0, %v2535
    %2537 = vmatmul.bf16.gmra.mxu0 %v2389
    %v2538 = vpop.f32.mrf.mxu0
    %v2539 = vadd.f32 0.0, %v2538
    %v2540 = vpop.f32.mrf.mxu0
    %2541 = vdwg.mxu0
    %2549 = vrot.lane.b32.xlu0 %v2496, 80
    %v2550 = vpop.permute.xlu0 %2549
    %2551 = vrot.lane.b32.xlu0 %v2498, 80
    %v2552 = vpop.permute.xlu0 %2551
    %2553 = vrot.lane.b32.xlu0 %v2501, 80
    %v2554 = vpop.permute.xlu0 %2553
    %2555 = vrot.lane.b32.xlu0 %v2503, 80
    %v2556 = vpop.permute.xlu0 %2555
    %2557 = vrot.lane.b32.xlu0 %v2506, 80
    %v2558 = vpop.permute.xlu0 %2557
    %2559 = vrot.lane.b32.xlu0 %v2508, 80
    %v2560 = vpop.permute.xlu0 %2559
    %2561 = vrot.lane.b32.xlu0 %v2511, 80
    %v2562 = vpop.permute.xlu0 %2561
    %v2570 = vmax.f32 %v2496, %v2550
    %v2571 = vmax.f32 %v2498, %v2552
    %v2572 = vmax.f32 %v2501, %v2554
    %v2573 = vmax.f32 %v2503, %v2556
    %v2574 = vmax.f32 %v2506, %v2558
    %v2575 = vmax.f32 %v2508, %v2560
    %v2576 = vmax.f32 %v2511, %v2562
    %2584 = vrot.lane.b32.xlu0 %v2524, 80
    %v2585 = vpop.permute.xlu0 %2584
    %2586 = vrot.lane.b32.xlu0 %v2526, 80
    %v2587 = vpop.permute.xlu0 %2586
    %2588 = vrot.lane.b32.xlu0 %v2529, 80
    %v2589 = vpop.permute.xlu0 %2588
    %2590 = vrot.lane.b32.xlu0 %v2531, 80
    %v2591 = vpop.permute.xlu0 %2590
    %2592 = vrot.lane.b32.xlu0 %v2534, 80
    %v2593 = vpop.permute.xlu0 %2592
    %2594 = vrot.lane.b32.xlu0 %v2536, 80
    %v2595 = vpop.permute.xlu0 %2594
    %2596 = vrot.lane.b32.xlu0 %v2539, 80
    %v2597 = vpop.permute.xlu0 %2596
    %v2605 = vmax.f32 %v2496, %v2585
    %v2606 = vmax.f32 %v2524, %v2585
    %v2607 = vmax.f32 %v2498, %v2587
    %v2608 = vmax.f32 %v2526, %v2587
    %v2609 = vmax.f32 %v2501, %v2589
    %v2610 = vmax.f32 %v2529, %v2589
    %v2611 = vmax.f32 %v2503, %v2591
    %v2612 = vmax.f32 %v2531, %v2591
    %v2613 = vmax.f32 %v2506, %v2593
    %v2614 = vmax.f32 %v2534, %v2593
    %v2615 = vmax.f32 %v2508, %v2595
    %v2616 = vmax.f32 %v2536, %v2595
    %v2617 = vmax.f32 %v2511, %v2597
    %v2618 = vmax.f32 %v2539, %v2597
    %2633 = vrot.lane.b32.xlu0 %v2605, 32
    %v2634 = vpop.permute.xlu0 %2633
    %2635 = vrot.lane.b32.xlu0 %v2606, 32
    %v2636 = vpop.permute.xlu0 %2635
    %2637 = vrot.lane.b32.xlu0 %v2607, 32
    %v2638 = vpop.permute.xlu0 %2637
    %2639 = vrot.lane.b32.xlu0 %v2608, 32
    %v2640 = vpop.permute.xlu0 %2639
    %2641 = vrot.lane.b32.xlu0 %v2609, 32
    %v2642 = vpop.permute.xlu0 %2641
    %2643 = vrot.lane.b32.xlu0 %v2610, 32
    %v2644 = vpop.permute.xlu0 %2643
    %2645 = vrot.lane.b32.xlu0 %v2611, 32
    %v2646 = vpop.permute.xlu0 %2645
    %2647 = vrot.lane.b32.xlu0 %v2612, 32
    %v2648 = vpop.permute.xlu0 %2647
    %2649 = vrot.lane.b32.xlu0 %v2613, 32
    %v2650 = vpop.permute.xlu0 %2649
    %2651 = vrot.lane.b32.xlu0 %v2614, 32
    %v2652 = vpop.permute.xlu0 %2651
    %2653 = vrot.lane.b32.xlu0 %v2615, 32
    %v2654 = vpop.permute.xlu0 %2653
    %2655 = vrot.lane.b32.xlu0 %v2616, 32
    %v2656 = vpop.permute.xlu0 %2655
    %2657 = vrot.lane.b32.xlu0 %v2617, 32
    %v2658 = vpop.permute.xlu0 %2657
    %2659 = vrot.lane.b32.xlu0 %v2618, 32
    %v2660 = vpop.permute.xlu0 %2659
    %v2661 = vsel %vm1824, %v2634, %v2636
    %v2662 = vsel %vm1824, %v2638, %v2640
    %v2663 = vsel %vm1824, %v2642, %v2644
    %v2664 = vsel %vm1824, %v2646, %v2648
    %v2665 = vsel %vm1824, %v2650, %v2652
    %v2666 = vsel %vm1824, %v2654, %v2656
    %v2667 = vsel %vm1824, %v2658, %v2660
    %v2675 = vmax.f32 %v2570, %v2661
    %v2676 = vmax.f32 %v2571, %v2662
    %v2677 = vmax.f32 %v2572, %v2663
    %v2678 = vmax.f32 %v2573, %v2664
    %v2679 = vmax.f32 %v2574, %v2665
    %v2680 = vmax.f32 %v2575, %v2666
    %v2681 = vmax.f32 %v2576, %v2667
    %v2682 = vrot.slane %v2675, 2
    %v2683 = vrot.slane %v2676, 2
    %v2684 = vrot.slane %v2677, 2
    %v2685 = vrot.slane %v2678, 2
    %v2686 = vrot.slane %v2679, 2
    %v2687 = vrot.slane %v2680, 2
    %v2688 = vrot.slane %v2681, 2
    %v2689 = vsel %vm479, %v2687, %v2688
    %v2690 = vsel %vm479, %v2686, %v2687
    %v2691 = vsel %vm479, %v2685, %v2686
    %v2692 = vsel %vm479, %v2684, %v2685
    %v2693 = vsel %vm479, %v2683, %v2684
    %v2694 = vsel %vm479, %v2682, %v2683
    %v2695 = vsel %vm479, %v2688, %v2682
    %v2696 = vmax.f32 %v2675, %v2694
    %v2697 = vmax.f32 %v2676, %v2693
    %v2698 = vmax.f32 %v2677, %v2692
    %v2699 = vmax.f32 %v2678, %v2691
    %v2700 = vmax.f32 %v2679, %v2690
    %v2701 = vmax.f32 %v2680, %v2689
    %v2702 = vmax.f32 %v2681, %v2695
    %v2703 = vrot.slane %v2675, 4
    %v2704 = vrot.slane %v2676, 4
    %v2705 = vrot.slane %v2677, 4
    %v2706 = vrot.slane %v2678, 4
    %v2707 = vrot.slane %v2679, 4
    %v2708 = vrot.slane %v2680, 4
    %v2709 = vrot.slane %v2681, 4
    %v2710 = vsel %vm509, %v2708, %v2709
    %v2711 = vsel %vm509, %v2707, %v2708
    %v2712 = vsel %vm509, %v2706, %v2707
    %v2713 = vsel %vm509, %v2705, %v2706
    %v2714 = vsel %vm509, %v2704, %v2705
    %v2715 = vsel %vm509, %v2703, %v2704
    %v2716 = vsel %vm509, %v2709, %v2703
    %v2717 = vmax.f32 %v2696, %v2715
    %v2718 = vmax.f32 %v2697, %v2714
    %v2719 = vmax.f32 %v2698, %v2713
    %v2720 = vmax.f32 %v2699, %v2712
    %v2721 = vmax.f32 %v2700, %v2711
    %v2722 = vmax.f32 %v2701, %v2710
    %v2723 = vmax.f32 %v2702, %v2716
    %v2724 = vrot.slane %v2675, 6
    %v2725 = vrot.slane %v2676, 6
    %v2726 = vrot.slane %v2677, 6
    %v2727 = vrot.slane %v2678, 6
    %v2728 = vrot.slane %v2679, 6
    %v2729 = vrot.slane %v2680, 6
    %v2730 = vrot.slane %v2681, 6
    %v2731 = vsel %vm1681, %v2729, %v2730
    %v2732 = vsel %vm1681, %v2728, %v2729
    %v2733 = vsel %vm1681, %v2727, %v2728
    %v2734 = vsel %vm1681, %v2726, %v2727
    %v2735 = vsel %vm1681, %v2725, %v2726
    %v2736 = vsel %vm1681, %v2724, %v2725
    %v2737 = vsel %vm1681, %v2730, %v2724
    %v2738 = vmax.f32 %v2717, %v2736
    %v2739 = vmax.f32 %v2718, %v2735
    %v2740 = vmax.f32 %v2719, %v2734
    %v2741 = vmax.f32 %v2720, %v2733
    %v2742 = vmax.f32 %v2721, %v2732
    %v2743 = vmax.f32 %v2722, %v2731
    %v2744 = vmax.f32 %v2723, %v2737
    %vm2745 = vcmask 392192
    %2746 = vst.msk [vmem:[#allocation2] sm:$0xff] %vm2745, %v2738
    %2747 = vst.msk [vmem:[#allocation2 + $0x8] sm:$0xff] %vm2745, %v2739
    %2748 = vst.msk [vmem:[#allocation2 + $0x10] sm:$0xff] %vm2745, %v2740
    %2749 = vst.msk [vmem:[#allocation2 + $0x18] sm:$0xff] %vm2745, %v2741
    %2750 = vst.msk [vmem:[#allocation2 + $0x20] sm:$0xff] %vm2745, %v2742
    %2751 = vst.msk [vmem:[#allocation2 + $0x28] sm:$0xff] %vm2745, %v2743
    %2752 = vst.msk [vmem:[#allocation2 + $0x30] sm:$0xff] %vm2745, %v2744
    %v2753 = vld [vmem:[#allocation2] ss:$28 sm:$0x3]
    %s2754 = scalar_lea.vmem [#allocation2], 4
    %v2755 = vld [vmem:[%s2754] ss:$28 sm:$0x3]
    %s2756 = scalar_lea.vmem [#allocation2], 8
    %v2757 = vld [vmem:[%s2756] ss:$28 sm:$0x3]
    %2759 = vrot.lane.b32.xlu0 %v2755, 48
    %v2760 = vpop.permute.xlu0 %2759
    %2763 = vrot.lane.b32.xlu0 %v2757, 96
    %v2764 = vpop.permute.xlu0 %2763
    %v2766 = vsel %vm2745, %v2753, %v2760
    %vm2767 = vcmask 785408
    %v2768 = vsel %vm2767, %v2766, %v2764
    %v2769 = vpack.c.bf16 %v2768, %v2768
    %v2770 = vpack.c.bf16 %v2764, %v2764
    %v2771 = vld [vmem:[#allocation12] sm:$0xf]
    %v2772 = vld [vmem:[#allocation12 + $0x4] sm:$0xf]
    %v2773 = vld [vmem:[#allocation12 + $0x8] sm:$0xf]
    %v2774 = vld [vmem:[#allocation12 + $0xc] sm:$0xf]
    %v2775 = vld [vmem:[#allocation12 + $0x10] sm:$0xf]
    %v2776 = vld [vmem:[#allocation12 + $0x14] sm:$0xf]
    %v2777 = vld [vmem:[#allocation12 + $0x18] sm:$0xf]
    %v2778 = vld [vmem:[#allocation12 + $0x1c] sm:$0xf]
    %v2779 = vld [vmem:[#allocation12 + $0x20] sm:$0xf]
    %v2780 = vld [vmem:[#allocation12 + $0x24] sm:$0xf]
    %v2781 = vld [vmem:[#allocation12 + $0x28] sm:$0xf]
    %v2782 = vld [vmem:[#allocation12 + $0x2c] sm:$0xf]
    %v2783 = vld [vmem:[#allocation12 + $0x30] sm:$0xf]
    %v2784 = vld [vmem:[#allocation12 + $0x34] sm:$0xf]
    %v2785 = vld [vmem:[#allocation12 + $0x38] sm:$0xf]
    %v2786 = vld [vmem:[#allocation12 + $0x3c] sm:$0xf]
    %v2787 = vld [vmem:[#allocation12 + $0x40] sm:$0xf]
    %v2788 = vld [vmem:[#allocation12 + $0x44] sm:$0xf]
    %v2789 = vld [vmem:[%s12] sm:$0x1]
    %v2791 = vperm.slane %v2789, 0
    %v2811 = vunpack.c.l.b16 %v2771
    %v2812 = vunpack.c.l.b16 %v2772
    %v2813 = vunpack.c.l.b16 %v2773
    %v2814 = vunpack.c.l.b16 %v2774
    %v2815 = vunpack.c.l.b16 %v2775
    %v2816 = vunpack.c.l.b16 %v2776
    %v2817 = vunpack.c.l.b16 %v2777
    %v2818 = vunpack.c.l.b16 %v2778
    %v2819 = vunpack.c.l.b16 %v2779
    %v2820 = vunpack.c.l.b16 %v2780
    %v2821 = vunpack.c.l.b16 %v2781
    %v2822 = vunpack.c.l.b16 %v2782
    %v2823 = vunpack.c.l.b16 %v2783
    %v2824 = vunpack.c.l.b16 %v2784
    %v2825 = vunpack.c.l.b16 %v2785
    %v2826 = vunpack.c.l.b16 %v2786
    %v2827 = vunpack.c.l.b16 %v2787
    %v2828 = vunpack.c.l.b16 %v2788
    %v2829 = vpack.c.b16 %v2812, %v2811
    %v2830 = vpack.c.b16 %v2814, %v2813
    %v2831 = vpack.c.b16 %v2816, %v2815
    %v2832 = vpack.c.b16 %v2818, %v2817
    %v2833 = vpack.c.b16 %v2820, %v2819
    %v2834 = vpack.c.b16 %v2822, %v2821
    %v2835 = vpack.c.b16 %v2824, %v2823
    %v2836 = vpack.c.b16 %v2826, %v2825
    %v2837 = vpack.c.b16 %v2828, %v2827
    %v2848 = vsel %vm954, %v2770, 0
    %2850 = vmatpush.bf16.msra.mxu0 %v2836
    %2851 = vmatpush.bf16.msra.mxu0 %v2835
    %2852 = vmatpush.bf16.msra.mxu0 %v2834
    %2853 = vmatpush.bf16.msra.mxu0 %v2833
    %2854 = vmatpush.bf16.msra.mxu0 %v2832
    %2855 = vmatpush.bf16.msra.mxu0 %v2831
    %2856 = vmatpush.bf16.msra.mxu0 %v2830
    %2857 = vmatpush.bf16.msra.mxu0 %v2829
    %2858 = vmatmul.bf16.gmra.mxu0 %v2769
    %v2859 = vpop.f32.mrf.mxu0
    %v2860 = vadd.f32 %v2791, %v2859
    %v2861 = vpop.f32.mrf.mxu0
    %2862 = vdwg.mxu0
    %2863 = vmatpush.bf16.msra.mxu0 0
    %2864 = vmatpush.bf16.msra.mxu0 0
    %2865 = vmatpush.bf16.msra.mxu0 0
    %2866 = vmatpush.bf16.msra.mxu0 0
    %2867 = vmatpush.bf16.msra.mxu0 0
    %2868 = vmatpush.bf16.msra.mxu0 0
    %2869 = vmatpush.bf16.msra.mxu0 0
    %2870 = vmatpush.bf16.msra.mxu0 %v2837
    %2871 = vmatmul.bf16.gmra.mxu0 %v2848
    %v2872 = vpop.f32.mrf.mxu0
    %v2873 = vadd.f32 %v2860, %v2872
    %v2874 = vpop.f32.mrf.mxu0
    %2875 = vdwg.mxu0
    %v2876 = vmax.f32 %v2873, 0.0
    %v2877 = vpack.c.bf16 %v2876, %v2876
    %v2878 = vld [vmem:[#allocation14] sm:$0xf]
    %v2879 = vld [vmem:[#allocation14 + $0x4] sm:$0xf]
    %v2880 = vld [vmem:[#allocation14 + $0x8] sm:$0xf]
    %v2881 = vld [vmem:[#allocation14 + $0xc] sm:$0xf]
    %v2882 = vld [vmem:[#allocation14 + $0x10] sm:$0xf]
    %v2883 = vld [vmem:[#allocation14 + $0x14] sm:$0xf]
    %v2884 = vld [vmem:[#allocation14 + $0x18] sm:$0xf]
    %v2885 = vld [vmem:[#allocation14 + $0x1c] sm:$0xf]
    %v2886 = vld [vmem:[#allocation14 + $0x20] sm:$0xf]
    %v2887 = vld [vmem:[#allocation14 + $0x24] sm:$0xf]
    %v2888 = vld [vmem:[#allocation14 + $0x28] sm:$0xf]
    %v2889 = vld [vmem:[#allocation14 + $0x2c] sm:$0xf]
    %v2890 = vld [vmem:[#allocation14 + $0x30] sm:$0xf]
    %v2891 = vld [vmem:[#allocation14 + $0x34] sm:$0xf]
    %v2892 = vld [vmem:[#allocation14 + $0x38] sm:$0xf]
    %v2893 = vld [vmem:[#allocation14 + $0x3c] sm:$0xf]
    %v2894 = vld [vmem:[%s14] sm:$0x1]
    %v2896 = vperm.slane %v2894, 0
    %v2914 = vunpack.c.l.b16 %v2878
    %v2915 = vunpack.c.l.b16 %v2879
    %v2916 = vunpack.c.l.b16 %v2880
    %v2917 = vunpack.c.l.b16 %v2881
    %v2918 = vunpack.c.l.b16 %v2882
    %v2919 = vunpack.c.l.b16 %v2883
    %v2920 = vunpack.c.l.b16 %v2884
    %v2921 = vunpack.c.l.b16 %v2885
    %v2922 = vunpack.c.l.b16 %v2886
    %v2923 = vunpack.c.l.b16 %v2887
    %v2924 = vunpack.c.l.b16 %v2888
    %v2925 = vunpack.c.l.b16 %v2889
    %v2926 = vunpack.c.l.b16 %v2890
    %v2927 = vunpack.c.l.b16 %v2891
    %v2928 = vunpack.c.l.b16 %v2892
    %v2929 = vunpack.c.l.b16 %v2893
    %v2930 = vpack.c.b16 %v2915, %v2914
    %v2931 = vpack.c.b16 %v2917, %v2916
    %v2932 = vpack.c.b16 %v2919, %v2918
    %v2933 = vpack.c.b16 %v2921, %v2920
    %v2934 = vpack.c.b16 %v2923, %v2922
    %v2935 = vpack.c.b16 %v2925, %v2924
    %v2936 = vpack.c.b16 %v2927, %v2926
    %v2937 = vpack.c.b16 %v2929, %v2928
    %2946 = vmatpush.bf16.msra.mxu0 %v2937
    %2947 = vmatpush.bf16.msra.mxu0 %v2936
    %2948 = vmatpush.bf16.msra.mxu0 %v2935
    %2949 = vmatpush.bf16.msra.mxu0 %v2934
    %2950 = vmatpush.bf16.msra.mxu0 %v2933
    %2951 = vmatpush.bf16.msra.mxu0 %v2932
    %2952 = vmatpush.bf16.msra.mxu0 %v2931
    %2953 = vmatpush.bf16.msra.mxu0 %v2930
    %2954 = vmatmul.bf16.gmra.mxu0 %v2877
    %v2955 = vpop.f32.mrf.mxu0
    %v2956 = vadd.f32 %v2896, %v2955
    %v2957 = vpop.f32.mrf.mxu0
    %2958 = vdwg.mxu0
    %v2959 = vmax.f32 %v2956, 0.0
    %v2960 = vpack.c.bf16 %v2959, %v2959
    %v2961 = vld [vmem:[#allocation15] sm:$0xf]
    %v2962 = vld [vmem:[#allocation15 + $0x4] sm:$0xf]
    %v2963 = vld [vmem:[#allocation15 + $0x8] sm:$0xf]
    %v2964 = vld [vmem:[#allocation15 + $0xc] sm:$0xf]
    %v2965 = vld [vmem:[#allocation15 + $0x10] sm:$0xf]
    %v2966 = vld [vmem:[#allocation15 + $0x14] sm:$0xf]
    %v2967 = vld [vmem:[#allocation15 + $0x18] sm:$0xf]
    %v2968 = vld [vmem:[#allocation15 + $0x1c] sm:$0xf]
    %v2969 = vld [vmem:[#allocation15 + $0x20] sm:$0xf]
    %v2970 = vld [vmem:[#allocation15 + $0x24] sm:$0xf]
    %v2971 = vld [vmem:[#allocation15 + $0x28] sm:$0xf]
    %v2972 = vld [vmem:[#allocation15 + $0x2c] sm:$0xf]
    %v2973 = vld [vmem:[#allocation15 + $0x30] sm:$0xf]
    %v2974 = vld [vmem:[#allocation15 + $0x34] sm:$0xf]
    %v2975 = vld [vmem:[#allocation15 + $0x38] sm:$0xf]
    %v2976 = vld [vmem:[#allocation15 + $0x3c] sm:$0xf]
    %v2977 = vld [vmem:[%s16] sm:$0x1]
    %v2979 = vperm.slane %v2977, 0
    %v2997 = vunpack.c.l.b16 %v2961
    %v2998 = vunpack.c.l.b16 %v2962
    %v2999 = vunpack.c.l.b16 %v2963
    %v3000 = vunpack.c.l.b16 %v2964
    %v3001 = vunpack.c.l.b16 %v2965
    %v3002 = vunpack.c.l.b16 %v2966
    %v3003 = vunpack.c.l.b16 %v2967
    %v3004 = vunpack.c.l.b16 %v2968
    %v3005 = vunpack.c.l.b16 %v2969
    %v3006 = vunpack.c.l.b16 %v2970
    %v3007 = vunpack.c.l.b16 %v2971
    %v3008 = vunpack.c.l.b16 %v2972
    %v3009 = vunpack.c.l.b16 %v2973
    %v3010 = vunpack.c.l.b16 %v2974
    %v3011 = vunpack.c.l.b16 %v2975
    %v3012 = vunpack.c.l.b16 %v2976
    %v3013 = vpack.c.b16 %v2998, %v2997
    %v3014 = vpack.c.b16 %v3000, %v2999
    %v3015 = vpack.c.b16 %v3002, %v3001
    %v3016 = vpack.c.b16 %v3004, %v3003
    %v3017 = vpack.c.b16 %v3006, %v3005
    %v3018 = vpack.c.b16 %v3008, %v3007
    %v3019 = vpack.c.b16 %v3010, %v3009
    %v3020 = vpack.c.b16 %v3012, %v3011
    %3029 = vmatpush.bf16.msra.mxu0 %v3020
    %3030 = vmatpush.bf16.msra.mxu0 %v3019
    %3031 = vmatpush.bf16.msra.mxu0 %v3018
    %3032 = vmatpush.bf16.msra.mxu0 %v3017
    %3033 = vmatpush.bf16.msra.mxu0 %v3016
    %3034 = vmatpush.bf16.msra.mxu0 %v3015
    %3035 = vmatpush.bf16.msra.mxu0 %v3014
    %3036 = vmatpush.bf16.msra.mxu0 %v3013
    %3037 = vmatmul.bf16.gmra.mxu0 %v2960
    %v3038 = vpop.f32.mrf.mxu0
    %v3039 = vadd.f32 %v2979, %v3038
    %v3040 = vpop.f32.mrf.mxu0
    %3041 = vdwg.mxu0
    %3042 = vst [vmem:[#allocation17] sm:$0x3] %v3039
    // Predicated region
    $region102: #{_lenet5_padded.1} parent=1 // pred_check
      _
    $region103: #{_lenet5_padded.1} parent=1 // pred_check_branch
      %3044 = sbr.rel (0) target = $region105
    $region104: #{_lenet5_padded.1} parent=1 // pred_region
      %3046 = vsyncadd [#allocation5], 0
      %s3048 = sshll.u32 [#allocation17], 4
      %s3049 = int_to_ptr.vmem [resolvable:$true] %s3048
      %s3050 = sshll.u32 %s17, 4
      %s3051 = int_to_ptr.hbm [resolvable:$true] %s3050
      %3053 = dma.vmem_to_hbm [thread:$0]  %s3049, 32, %s3051, [#allocation5]
    $region105: #{_lenet5_padded.1} parent=1 // pred_fallthru
      _
    // Predicated region
    $region106: #{_lenet5_padded.1} parent=1 // pred_check
      _
    $region107: #{_lenet5_padded.1} parent=1 // pred_check_branch
      %3055 = sbr.rel (0) target = $region109
    $region108: #{_lenet5_padded.1} parent=1 // pred_region
      %3057 = dma.done [#allocation5], 32
    $region109: #{_lenet5_padded.1} parent=1 // pred_fallthru
      _
    %3058 = vsyncpa [#allocation4], 1
    %3059 = vsyncpa [#allocation7], 1
    %3060 = vsyncpa [#allocation10], 1
    %3061 = vsyncpa [#allocation13], 1
    %3062 = vsyncpa [#allocation16], 1
    %3063 = vsyncpa [#allocation5], 1

</llo_original>
